<compile_context>
chip_gen: v7x
topology: tpu7x:2x2x1
jax: 0.10.0
libtpu: 0.0.40
codegen_flags: <defaults>
</compile_context>

<pallas_src>
import math
import functools

import jax
import jax.numpy as jnp
from jax import lax
from jax.experimental import pallas as pl
from jax.experimental.pallas import tpu as pltpu


# ----------------------------- helpers ---------------------------------------

def _layernorm(x, w, b, eps=1e-5):
    # torch.nn.LayerNorm semantics: biased variance over the last axis.
    mu = jnp.mean(x, axis=-1, keepdims=True)
    var = jnp.mean((x - mu) ** 2, axis=-1, keepdims=True)
    return (x - mu) * lax.rsqrt(var + eps) * w + b


def _pick_batch_block(batch):
    """v7x has 2 TensorCores/chip -> keep batch as a 'parallel' grid axis.
    v5e/v6e are single-TC -> fold all batch rows into one block (fewer grid
    steps, better sublane/M fill). Fallback (unknown device) folds B, which is
    correct everywhere."""
    try:
        kind = jax.devices()[0].device_kind.lower()
    except Exception:
        kind = ""
    if "v7" in kind or "7x" in kind:
        return 1
    return batch


# ------------------------- fused transformer-stack kernel ---------------------

def fused_stack_kernel(x_ref, pad_ref, elnw_ref, elnb_ref,
                       ln1w_ref, ln1b_ref, wqkv_ref, bqkv_ref, wp_ref, bp_ref,
                       ln2w_ref, ln2b_ref, w1_ref, b1_ref, w2_ref, b2_ref,
                       o_ref, *, n_head, dh):
    """embed_ln + all n_layer GPT Blocks for a block of BB batch rows.

    All weights are resident (constant index_map) and the layer loop is a
    statically-unrolled Python loop, so the residual stream never leaves the
    kernel between layers.
    """
    BB, L, H = x_ref.shape
    n_layer = ln1w_ref.shape[0]
    M = BB * L
    scale = 1.0 / math.sqrt(dh)

    # embedding LayerNorm fused into the kernel (batch rows stacked into M).
    x = _layernorm(x_ref[...].reshape(M, H), elnw_ref[...], elnb_ref[...])

    # masks built ONCE (outside the layer loop): additive pad bias comes from the
    # wrapper; causal keep-mask from two iotas.
    pad = pad_ref[...]                                   # (BB, 1, L) additive
    row = lax.broadcasted_iota(jnp.int32, (L, L), 0)
    col = lax.broadcasted_iota(jnp.int32, (L, L), 1)
    causal = col <= row                                  # tril buffer semantics

    for l in range(n_layer):                             # n_layer is small/static
        # ---- causal self-attention ----
        xn = _layernorm(x, ln1w_ref[l], ln1b_ref[l])
        qkv = jnp.dot(xn.astype(jnp.bfloat16), wqkv_ref[l],
                      preferred_element_type=jnp.float32) + bqkv_ref[l]   # (M, 3H) f32
        qkv = qkv.reshape(BB, L, 3 * H)

        y_rows = []
        for bb in range(BB):
            qkv_b = qkv[bb].astype(jnp.bfloat16)         # (L, 3H), one cast per row-block
            heads = []
            for h in range(n_head):
                q = qkv_b[:, h * dh:(h + 1) * dh]
                k = qkv_b[:, H + h * dh:H + (h + 1) * dh]
                v = qkv_b[:, 2 * H + h * dh:2 * H + (h + 1) * dh]
                att = lax.dot_general(q, k, (((1,), (1,)), ((), ())),
                                      preferred_element_type=jnp.float32) * scale
                att = jnp.where(causal, att, -10000.0) + pad[bb]
                att = att - jnp.max(att, axis=-1, keepdims=True)
                e = jnp.exp(att)
                p = e * pl.reciprocal(jnp.sum(e, axis=-1, keepdims=True), approx=True)
                heads.append(jnp.dot(p.astype(jnp.bfloat16), v,
                                     preferred_element_type=jnp.float32))  # (L, dh)
            # lane concat = torch's head-merge view(B, T, C) ordering
            y_rows.append(jnp.concatenate(heads, axis=-1))                 # (L, H)
        y = jnp.concatenate(y_rows, axis=0) if BB > 1 else y_rows[0]       # (M, H)

        # single full-width output projection with the original unsplit Wp
        y = jnp.dot(y.astype(jnp.bfloat16), wp_ref[l],
                    preferred_element_type=jnp.float32) + bp_ref[l]
        x = x + y                     # residual (attn_drop/resid_drop = identity)

        # ---- MLP ----
        xn2 = _layernorm(x, ln2w_ref[l], ln2b_ref[l])
        h1 = jnp.dot(xn2.astype(jnp.bfloat16), w1_ref[l],
                     preferred_element_type=jnp.float32) + b1_ref[l]
        # TODO(synk): torch nn.GELU() default is exact erf; tanh approximation
        # (EUP path) is used here, outputs differ at ~1e-3 level.
        h1 = jax.nn.gelu(h1, approximate=True)
        h2 = jnp.dot(h1.astype(jnp.bfloat16), w2_ref[l],
                     preferred_element_type=jnp.float32) + b2_ref[l]
        x = x + h2

    o_ref[...] = x.reshape(BB, L, H)


_BLOCK_KEYS = ('ln1_w', 'ln1_b', 'wqkv', 'bqkv', 'wp', 'bp',
               'ln2_w', 'ln2_b', 'w1', 'b1', 'w2', 'b2')


def transformer_stack(x, pad_bias, eln_w, eln_b, blocks, n_head):
    """x: (B, L, H) f32 pre-LN embeddings; pad_bias: (B, 1, L) additive f32 mask."""
    B, L, H = x.shape
    dh = H // n_head
    BB = _pick_batch_block(B)

    def resident(arr):        # full array resident in VMEM, constant index map
        nd = arr.ndim
        return pl.BlockSpec(arr.shape, lambda i, _nd=nd: (0,) * _nd)

    in_specs = ([pl.BlockSpec((BB, L, H), lambda i: (i, 0, 0)),   # embeddings
                 pl.BlockSpec((BB, 1, L), lambda i: (i, 0, 0)),   # pad bias
                 resident(eln_w), resident(eln_b)]
                + [resident(blocks[k]) for k in _BLOCK_KEYS])

    # NOTE(v7x sizing): resident weights here are ~50 KB total; activations are a
    # few KB.  Trivially fits the 32 MiB default scoped VMEM on every generation
    # (v7x physical VMEM is 64 MiB).  If H / n_layer are scaled to GPT sizes
    # (H>=768, n_layer>=12), resident weights reach tens of MiB: set
    # pltpu.CompilerParams(vmem_limit_bytes=...) and/or stream per-layer blocks.
    return pl.pallas_call(
        functools.partial(fused_stack_kernel, n_head=n_head, dh=dh),
        grid=(B // BB,),
        in_specs=in_specs,
        out_specs=pl.BlockSpec((BB, L, H), lambda i: (i, 0, 0)),
        out_shape=jax.ShapeDtypeStruct((B, L, H), jnp.float32),
        input_output_aliases={0: 0},          # embedding buffer reused as output
        compiler_params=pltpu.CompilerParams(
            dimension_semantics=("parallel",)),
    )(x, pad_bias, eln_w, eln_b, *[blocks[k] for k in _BLOCK_KEYS])


# ----------------------------- model -----------------------------------------

def init_params(cfg, state_dim, act_dim, key):
    H, I, NL = cfg['hidden_size'], cfg['n_inner'], cfg['n_layer']
    keys = iter(jax.random.split(key, 32))

    def lin(in_d, out_d, prefix=()):
        w = 0.02 * jax.random.normal(next(keys), prefix + (in_d, out_d), jnp.float32)
        b = jnp.zeros(prefix + (1, out_d), jnp.float32)
        return w, b

    p = {}
    p['embed_state_w'], p['embed_state_b'] = lin(state_dim, H)
    p['embed_action_w'], p['embed_action_b'] = lin(act_dim, H)
    p['embed_return_w'], p['embed_return_b'] = lin(1, H)
    p['embed_reward_w'], p['embed_reward_b'] = lin(1, H)   # parity; unused for 'dt'
    p['embed_timestep'] = 0.02 * jax.random.normal(
        next(keys), (cfg['max_ep_len'], H), jnp.float32)
    p['embed_ln_w'] = jnp.ones((1, H), jnp.float32)
    p['embed_ln_b'] = jnp.zeros((1, H), jnp.float32)

    # One-time packing into the kernel layout (fused QKV, bf16 weight storage).
    # A converted torch checkpoint would be packed exactly the same way, once.
    wq, bq = lin(H, H, (NL,))
    wk, bk = lin(H, H, (NL,))
    wv, bv = lin(H, H, (NL,))
    wp, bp = lin(H, H, (NL,))
    w1, b1 = lin(H, I, (NL,))
    w2, b2 = lin(I, H, (NL,))
    p['blocks'] = {
        'ln1_w': jnp.ones((NL, 1, H), jnp.float32),
        'ln1_b': jnp.zeros((NL, 1, H), jnp.float32),
        'wqkv': jnp.concatenate([wq, wk, wv], axis=-1).astype(jnp.bfloat16),  # (NL,H,3H)
        'bqkv': jnp.concatenate([bq, bk, bv], axis=-1),                       # (NL,1,3H)
        'wp': wp.astype(jnp.bfloat16), 'bp': bp,
        'ln2_w': jnp.ones((NL, 1, H), jnp.float32),
        'ln2_b': jnp.zeros((NL, 1, H), jnp.float32),
        'w1': w1.astype(jnp.bfloat16), 'b1': b1,
        'w2': w2.astype(jnp.bfloat16), 'b2': b2,
    }

    # fused return+state prediction head (both consume the action-position tokens)
    prw, prb = lin(H, 1)
    psw, psb = lin(H, state_dim)
    p['predict_rs_w'] = jnp.concatenate([prw, psw], axis=1)
    p['predict_rs_b'] = jnp.concatenate([prb, psb], axis=1)
    p['predict_action_w'], p['predict_action_b'] = lin(H, act_dim)
    p['predict_reward_w'], p['predict_reward_b'] = lin(H, 1)   # parity; unused for 'dt'
    return p


def decision_transformer_forward(params, cfg, states, actions, rewards,
                                 returns_to_go, timesteps, attention_mask=None):
    assert cfg['model_type'] == 'dt'
    B, T = states.shape[0], states.shape[1]
    H = cfg['hidden_size']
    LT = cfg['length_times']          # 3 token streams for model_type 'dt'
    L = LT * T

    if attention_mask is None:
        attention_mask = jnp.ones((B, T), dtype=jnp.int32)

    # --- embeddings: tiny projections done in plain jnp so XLA fuses them ---
    time_e = params['embed_timestep'][timesteps]                                    # (B,T,H)
    state_e = jnp.dot(states, params['embed_state_w']) + params['embed_state_b'] + time_e
    action_e = jnp.dot(actions, params['embed_action_w']) + params['embed_action_b'] + time_e
    return_e = jnp.dot(returns_to_go, params['embed_return_w']) + params['embed_return_b'] + time_e
    # TODO(synk): embed_reward path exists in the module but is never consumed for 'dt'.

    # interleave (R_t, s_t, a_t); embed_ln is applied inside the kernel
    stacked = jnp.stack((return_e, state_e, action_e), axis=2).reshape(B, L, H)

    # additive padding bias, precomputed once (kernel adds it to every layer's scores)
    maskf = jnp.repeat(attention_mask.astype(jnp.float32), LT, axis=1)              # (B,L)
    pad_bias = ((1.0 - maskf) * (-10000.0))[:, None, :]                             # (B,1,L)

    # --- embed_ln + all transformer layers in a single Pallas kernel ---
    x = transformer_stack(stacked, pad_bias, params['embed_ln_w'],
                          params['embed_ln_b'], params['blocks'], cfg['n_head'])    # (B,L,H)

    # de-interleave with strided slices (no reshape/transpose round trip)
    x_act = x[:, LT - 1::LT, :]       # tokens at action positions (B,T,H)
    x_state = x[:, 1::LT, :]          # tokens at state positions   (B,T,H)

    rs = jnp.dot(x_act, params['predict_rs_w']) + params['predict_rs_b']
    return_preds = rs[..., :1]
    state_preds = rs[..., 1:]

    action_preds = jnp.dot(x_state, params['predict_action_w']) + params['predict_action_b']
    if cfg['action_tanh']:
        action_preds = jnp.tanh(action_preds)

    return state_preds, action_preds, return_preds, None


# ----------------------------- main -------------------------------------------

if __name__ == "__main__":
    cfg = dict(model_type='dt', length_times=3, hidden_size=32, n_embd=32,
               n_head=2, n_layer=2, n_inner=128, K=8, max_ep_len=64,
               n_ctx=64, attn_pdrop=0.0, resid_pdrop=0.0, action_tanh=True)
    # TODO(synk): gym.make() is only used to read obs/action dims in __init__;
    # we pick small synthetic dims instead of constructing an environment.
    state_dim, act_dim = 4, 3
    B, T = 2, cfg['K']

    key = jax.random.PRNGKey(0)
    kp, ks, ka, kr, kg, kt = jax.random.split(key, 6)
    params = init_params(cfg, state_dim, act_dim, kp)

    states = jax.random.normal(ks, (B, T, state_dim), jnp.float32)
    actions = jax.random.normal(ka, (B, T, act_dim), jnp.float32)
    rewards = jax.random.normal(kr, (B, T, 1), jnp.float32)
    returns_to_go = jax.random.normal(kg, (B, T, 1), jnp.float32)
    timesteps = jax.random.randint(kt, (B, T), 0, cfg['max_ep_len'])
    # left-padding mask like get_action() would produce (first 2 steps of batch 1 padded)
    attention_mask = jnp.ones((B, T), jnp.int32).at[1, :2].set(0)

    fwd = jax.jit(lambda p, s, a, r, g, t, m:
                  decision_transformer_forward(p, cfg, s, a, r, g, t, m))
    state_preds, action_preds, return_preds, _ = fwd(
        params, states, actions, rewards, returns_to_go, timesteps, attention_mask)
    jax.block_until_ready((state_preds, action_preds, return_preds))

    assert state_preds.shape == (B, T, state_dim)
    assert action_preds.shape == (B, T, act_dim)
    assert return_preds.shape == (B, T, 1)
    assert bool(jnp.all(jnp.isfinite(state_preds)))
    assert bool(jnp.all(jnp.isfinite(action_preds)))
    assert bool(jnp.all(jnp.isfinite(return_preds)))
    print("KERNEL_OK")
</pallas_src>

<mosaic_0001>
module attributes {stable_mosaic.version = 11 : i64} {
  func.func @fused_stack_kernel(%arg0: i32, %arg1: memref<2x24x32xf32, #tpu.memory_space<vmem>>, %arg2: memref<2x1x24xf32, #tpu.memory_space<vmem>>, %arg3: memref<1x32xf32, #tpu.memory_space<vmem>>, %arg4: memref<1x32xf32, #tpu.memory_space<vmem>>, %arg5: memref<2x1x32xf32, #tpu.memory_space<vmem>>, %arg6: memref<2x1x32xf32, #tpu.memory_space<vmem>>, %arg7: memref<2x32x96xbf16, #tpu.memory_space<vmem>>, %arg8: memref<2x1x96xf32, #tpu.memory_space<vmem>>, %arg9: memref<2x32x32xbf16, #tpu.memory_space<vmem>>, %arg10: memref<2x1x32xf32, #tpu.memory_space<vmem>>, %arg11: memref<2x1x32xf32, #tpu.memory_space<vmem>>, %arg12: memref<2x1x32xf32, #tpu.memory_space<vmem>>, %arg13: memref<2x32x128xbf16, #tpu.memory_space<vmem>>, %arg14: memref<2x1x128xf32, #tpu.memory_space<vmem>>, %arg15: memref<2x128x32xbf16, #tpu.memory_space<vmem>>, %arg16: memref<2x1x32xf32, #tpu.memory_space<vmem>>, %arg17: memref<2x24x32xf32, #tpu.memory_space<vmem>>) attributes {dimension_semantics = [#tpu.dimension_semantics<parallel>], iteration_bounds = array<i64: 1>, scalar_prefetch = 0 : i64, scratch_operands = 0 : i64, tpu.core_type = #tpu.core_type<tc>, window_params = [{transform_indices = @transform_0, window_bounds = array<i64: 2, 24, 32>}, {transform_indices = @transform_1, window_bounds = array<i64: 2, 1, 24>}, {pipeline_mode = #tpu.pipeline_mode<synchronous>, transform_indices = @transform_2, window_bounds = array<i64: 1, 32>}, {pipeline_mode = #tpu.pipeline_mode<synchronous>, transform_indices = @transform_3, window_bounds = array<i64: 1, 32>}, {pipeline_mode = #tpu.pipeline_mode<synchronous>, transform_indices = @transform_4, window_bounds = array<i64: 2, 1, 32>}, {pipeline_mode = #tpu.pipeline_mode<synchronous>, transform_indices = @transform_5, window_bounds = array<i64: 2, 1, 32>}, {pipeline_mode = #tpu.pipeline_mode<synchronous>, transform_indices = @transform_6, window_bounds = array<i64: 2, 32, 96>}, {pipeline_mode = #tpu.pipeline_mode<synchronous>, transform_indices = @transform_7, window_bounds = array<i64: 2, 1, 96>}, {pipeline_mode = #tpu.pipeline_mode<synchronous>, transform_indices = @transform_8, window_bounds = array<i64: 2, 32, 32>}, {pipeline_mode = #tpu.pipeline_mode<synchronous>, transform_indices = @transform_9, window_bounds = array<i64: 2, 1, 32>}, {pipeline_mode = #tpu.pipeline_mode<synchronous>, transform_indices = @transform_10, window_bounds = array<i64: 2, 1, 32>}, {pipeline_mode = #tpu.pipeline_mode<synchronous>, transform_indices = @transform_11, window_bounds = array<i64: 2, 1, 32>}, {pipeline_mode = #tpu.pipeline_mode<synchronous>, transform_indices = @transform_12, window_bounds = array<i64: 2, 32, 128>}, {pipeline_mode = #tpu.pipeline_mode<synchronous>, transform_indices = @transform_13, window_bounds = array<i64: 2, 1, 128>}, {pipeline_mode = #tpu.pipeline_mode<synchronous>, transform_indices = @transform_14, window_bounds = array<i64: 2, 128, 32>}, {pipeline_mode = #tpu.pipeline_mode<synchronous>, transform_indices = @transform_15, window_bounds = array<i64: 2, 1, 32>}, {transform_indices = @transform_16, window_bounds = array<i64: 2, 24, 32>}]} {
    %c0 = arith.constant 0 : index
    %c0_0 = arith.constant 0 : index
    %c0_1 = arith.constant 0 : index
    %0 = vector.load %arg1[%c0, %c0_0, %c0_1] : memref<2x24x32xf32, #tpu.memory_space<vmem>>, vector<2x24x32xf32>
    %1 = vector.shape_cast %0 : vector<2x24x32xf32> to vector<48x32xf32>
    %c0_2 = arith.constant 0 : index
    %c0_3 = arith.constant 0 : index
    %2 = vector.load %arg3[%c0_2, %c0_3] : memref<1x32xf32, #tpu.memory_space<vmem>>, vector<1x32xf32>
    %c0_4 = arith.constant 0 : index
    %c0_5 = arith.constant 0 : index
    %3 = vector.load %arg4[%c0_4, %c0_5] : memref<1x32xf32, #tpu.memory_space<vmem>>, vector<1x32xf32>
    %cst = arith.constant dense<0.000000e+00> : vector<48xf32>
    %4 = vector.multi_reduction <add>, %1, %cst [1] : vector<48x32xf32> to vector<48xf32>
    %5 = vector.shape_cast %4 : vector<48xf32> to vector<48x1xf32>
    %cst_6 = arith.constant 3.200000e+01 : f32
    %6 = vector.broadcast %cst_6 : f32 to vector<48x1xf32>
    %7 = arith.divf %5, %6 : vector<48x1xf32>
    %8 = vector.broadcast %7 : vector<48x1xf32> to vector<48x32xf32>
    %9 = arith.subf %1, %8 : vector<48x32xf32>
    %10 = arith.mulf %9, %9 : vector<48x32xf32>
    %cst_7 = arith.constant dense<0.000000e+00> : vector<48xf32>
    %11 = vector.multi_reduction <add>, %10, %cst_7 [1] : vector<48x32xf32> to vector<48xf32>
    %12 = vector.shape_cast %11 : vector<48xf32> to vector<48x1xf32>
    %cst_8 = arith.constant 3.200000e+01 : f32
    %13 = vector.broadcast %cst_8 : f32 to vector<48x1xf32>
    %14 = arith.divf %12, %13 : vector<48x1xf32>
    %15 = vector.broadcast %7 : vector<48x1xf32> to vector<48x32xf32>
    %16 = arith.subf %1, %15 : vector<48x32xf32>
    %cst_9 = arith.constant 9.99999974E-6 : f32
    %17 = vector.broadcast %cst_9 : f32 to vector<48x1xf32>
    %18 = arith.addf %14, %17 : vector<48x1xf32>
    %19 = math.rsqrt %18 : vector<48x1xf32>
    %20 = vector.broadcast %19 : vector<48x1xf32> to vector<48x32xf32>
    %21 = arith.mulf %16, %20 : vector<48x32xf32>
    %22 = vector.broadcast %2 : vector<1x32xf32> to vector<48x32xf32>
    %23 = arith.mulf %21, %22 : vector<48x32xf32>
    %24 = vector.broadcast %3 : vector<1x32xf32> to vector<48x32xf32>
    %25 = arith.addf %23, %24 : vector<48x32xf32>
    %c0_10 = arith.constant 0 : index
    %c0_11 = arith.constant 0 : index
    %c0_12 = arith.constant 0 : index
    %26 = vector.load %arg2[%c0_10, %c0_11, %c0_12] : memref<2x1x24xf32, #tpu.memory_space<vmem>>, vector<2x1x24xf32>
    %27 = tpu.iota {dimensions = array<i32: 0>} : vector<24x24xi32>
    %28 = tpu.iota {dimensions = array<i32: 1>} : vector<24x24xi32>
    %29 = arith.cmpi sle, %28, %27 : vector<24x24xi32>
    %c0_13 = arith.constant 0 : index
    %c0_14 = arith.constant 0 : index
    %c0_15 = arith.constant 0 : index
    %30 = vector.load %arg5[%c0_13, %c0_14, %c0_15] : memref<2x1x32xf32, #tpu.memory_space<vmem>>, vector<1x1x32xf32>
    %31 = vector.shape_cast %30 : vector<1x1x32xf32> to vector<1x32xf32>
    %c0_16 = arith.constant 0 : index
    %c0_17 = arith.constant 0 : index
    %c0_18 = arith.constant 0 : index
    %32 = vector.load %arg6[%c0_16, %c0_17, %c0_18] : memref<2x1x32xf32, #tpu.memory_space<vmem>>, vector<1x1x32xf32>
    %33 = vector.shape_cast %32 : vector<1x1x32xf32> to vector<1x32xf32>
    %cst_19 = arith.constant dense<0.000000e+00> : vector<48xf32>
    %34 = vector.multi_reduction <add>, %25, %cst_19 [1] : vector<48x32xf32> to vector<48xf32>
    %35 = vector.shape_cast %34 : vector<48xf32> to vector<48x1xf32>
    %cst_20 = arith.constant 3.200000e+01 : f32
    %36 = vector.broadcast %cst_20 : f32 to vector<48x1xf32>
    %37 = arith.divf %35, %36 : vector<48x1xf32>
    %38 = vector.broadcast %37 : vector<48x1xf32> to vector<48x32xf32>
    %39 = arith.subf %25, %38 : vector<48x32xf32>
    %40 = arith.mulf %39, %39 : vector<48x32xf32>
    %cst_21 = arith.constant dense<0.000000e+00> : vector<48xf32>
    %41 = vector.multi_reduction <add>, %40, %cst_21 [1] : vector<48x32xf32> to vector<48xf32>
    %42 = vector.shape_cast %41 : vector<48xf32> to vector<48x1xf32>
    %cst_22 = arith.constant 3.200000e+01 : f32
    %43 = vector.broadcast %cst_22 : f32 to vector<48x1xf32>
    %44 = arith.divf %42, %43 : vector<48x1xf32>
    %45 = vector.broadcast %37 : vector<48x1xf32> to vector<48x32xf32>
    %46 = arith.subf %25, %45 : vector<48x32xf32>
    %cst_23 = arith.constant 9.99999974E-6 : f32
    %47 = vector.broadcast %cst_23 : f32 to vector<48x1xf32>
    %48 = arith.addf %44, %47 : vector<48x1xf32>
    %49 = math.rsqrt %48 : vector<48x1xf32>
    %50 = vector.broadcast %49 : vector<48x1xf32> to vector<48x32xf32>
    %51 = arith.mulf %46, %50 : vector<48x32xf32>
    %52 = vector.broadcast %31 : vector<1x32xf32> to vector<48x32xf32>
    %53 = arith.mulf %51, %52 : vector<48x32xf32>
    %54 = vector.broadcast %33 : vector<1x32xf32> to vector<48x32xf32>
    %55 = arith.addf %53, %54 : vector<48x32xf32>
    %56 = arith.truncf %55 : vector<48x32xf32> to vector<48x32xbf16>
    %c0_24 = arith.constant 0 : index
    %c0_25 = arith.constant 0 : index
    %c0_26 = arith.constant 0 : index
    %57 = vector.load %arg7[%c0_24, %c0_25, %c0_26] : memref<2x32x96xbf16, #tpu.memory_space<vmem>>, vector<1x32x96xbf16>
    %58 = vector.shape_cast %57 : vector<1x32x96xbf16> to vector<32x96xbf16>
    %cst_27 = arith.constant dense<0.000000e+00> : vector<48x96xf32>
    %59 = tpu.matmul %56, %58, %cst_27 {dimension_numbers = #tpu.dot_dimension_numbers<[1], [0], [0], [1], [0, 0, 1, 1], [], []>} : vector<48x32xbf16>, vector<32x96xbf16>, vector<48x96xf32> -> vector<48x96xf32>
    %c0_28 = arith.constant 0 : index
    %c0_29 = arith.constant 0 : index
    %c0_30 = arith.constant 0 : index
    %60 = vector.load %arg8[%c0_28, %c0_29, %c0_30] : memref<2x1x96xf32, #tpu.memory_space<vmem>>, vector<1x1x96xf32>
    %61 = vector.shape_cast %60 : vector<1x1x96xf32> to vector<1x96xf32>
    %62 = vector.broadcast %61 : vector<1x96xf32> to vector<48x96xf32>
    %63 = arith.addf %59, %62 : vector<48x96xf32>
    %64 = vector.shape_cast %63 : vector<48x96xf32> to vector<2x24x96xf32>
    %65 = vector.extract_strided_slice %64 {offsets = [0, 0, 0], sizes = [1, 24, 96], strides = [1, 1, 1]} : vector<2x24x96xf32> to vector<1x24x96xf32>
    %66 = vector.shape_cast %65 : vector<1x24x96xf32> to vector<24x96xf32>
    %67 = arith.truncf %66 : vector<24x96xf32> to vector<24x96xbf16>
    %68 = vector.extract_strided_slice %67 {offsets = [0, 0], sizes = [24, 16], strides = [1, 1]} : vector<24x96xbf16> to vector<24x16xbf16>
    %69 = vector.extract_strided_slice %67 {offsets = [0, 32], sizes = [24, 16], strides = [1, 1]} : vector<24x96xbf16> to vector<24x16xbf16>
    %70 = vector.extract_strided_slice %67 {offsets = [0, 64], sizes = [24, 16], strides = [1, 1]} : vector<24x96xbf16> to vector<24x16xbf16>
    %cst_31 = arith.constant dense<0.000000e+00> : vector<24x24xf32>
    %71 = tpu.matmul %68, %69, %cst_31 {dimension_numbers = #tpu.dot_dimension_numbers<[1], [1], [0], [0], [0, 0, 1, 0], [], []>} : vector<24x16xbf16>, vector<24x16xbf16>, vector<24x24xf32> -> vector<24x24xf32>
    %cst_32 = arith.constant 2.500000e-01 : f32
    %72 = vector.broadcast %cst_32 : f32 to vector<24x24xf32>
    %73 = arith.mulf %71, %72 : vector<24x24xf32>
    %cst_33 = arith.constant -1.000000e+04 : f32
    %74 = vector.broadcast %cst_33 : f32 to vector<24x24xf32>
    %75 = arith.select %29, %73, %74 : vector<24x24xi1>, vector<24x24xf32>
    %76 = vector.extract_strided_slice %26 {offsets = [0, 0, 0], sizes = [1, 1, 24], strides = [1, 1, 1]} : vector<2x1x24xf32> to vector<1x1x24xf32>
    %77 = vector.shape_cast %76 : vector<1x1x24xf32> to vector<1x24xf32>
    %78 = vector.broadcast %77 : vector<1x24xf32> to vector<24x24xf32>
    %79 = arith.addf %75, %78 : vector<24x24xf32>
    %cst_34 = arith.constant dense<0xFF800000> : vector<24xf32>
    %80 = vector.multi_reduction <maximumf>, %79, %cst_34 [1] : vector<24x24xf32> to vector<24xf32>
    %81 = vector.shape_cast %80 : vector<24xf32> to vector<24x1xf32>
    %82 = vector.broadcast %81 : vector<24x1xf32> to vector<24x24xf32>
    %83 = arith.subf %79, %82 : vector<24x24xf32>
    %84 = math.exp %83 : vector<24x24xf32>
    %cst_35 = arith.constant dense<0.000000e+00> : vector<24xf32>
    %85 = vector.multi_reduction <add>, %84, %cst_35 [1] : vector<24x24xf32> to vector<24xf32>
    %86 = vector.shape_cast %85 : vector<24xf32> to vector<24x1xf32>
    %87 = tpu.reciprocal %86 {approx = true} : vector<24x1xf32> -> vector<24x1xf32>
    %88 = vector.broadcast %87 : vector<24x1xf32> to vector<24x24xf32>
    %89 = arith.mulf %84, %88 : vector<24x24xf32>
    %90 = arith.truncf %89 : vector<24x24xf32> to vector<24x24xbf16>
    %cst_36 = arith.constant dense<0.000000e+00> : vector<24x16xf32>
    %91 = tpu.matmul %90, %70, %cst_36 {dimension_numbers = #tpu.dot_dimension_numbers<[1], [0], [0], [1], [0, 0, 1, 1], [], []>} : vector<24x24xbf16>, vector<24x16xbf16>, vector<24x16xf32> -> vector<24x16xf32>
    %92 = vector.extract_strided_slice %67 {offsets = [0, 16], sizes = [24, 16], strides = [1, 1]} : vector<24x96xbf16> to vector<24x16xbf16>
    %93 = vector.extract_strided_slice %67 {offsets = [0, 48], sizes = [24, 16], strides = [1, 1]} : vector<24x96xbf16> to vector<24x16xbf16>
    %94 = vector.extract_strided_slice %67 {offsets = [0, 80], sizes = [24, 16], strides = [1, 1]} : vector<24x96xbf16> to vector<24x16xbf16>
    %cst_37 = arith.constant dense<0.000000e+00> : vector<24x24xf32>
    %95 = tpu.matmul %92, %93, %cst_37 {dimension_numbers = #tpu.dot_dimension_numbers<[1], [1], [0], [0], [0, 0, 1, 0], [], []>} : vector<24x16xbf16>, vector<24x16xbf16>, vector<24x24xf32> -> vector<24x24xf32>
    %cst_38 = arith.constant 2.500000e-01 : f32
    %96 = vector.broadcast %cst_38 : f32 to vector<24x24xf32>
    %97 = arith.mulf %95, %96 : vector<24x24xf32>
    %cst_39 = arith.constant -1.000000e+04 : f32
    %98 = vector.broadcast %cst_39 : f32 to vector<24x24xf32>
    %99 = arith.select %29, %97, %98 : vector<24x24xi1>, vector<24x24xf32>
    %100 = vector.extract_strided_slice %26 {offsets = [0, 0, 0], sizes = [1, 1, 24], strides = [1, 1, 1]} : vector<2x1x24xf32> to vector<1x1x24xf32>
    %101 = vector.shape_cast %100 : vector<1x1x24xf32> to vector<1x24xf32>
    %102 = vector.broadcast %101 : vector<1x24xf32> to vector<24x24xf32>
    %103 = arith.addf %99, %102 : vector<24x24xf32>
    %cst_40 = arith.constant dense<0xFF800000> : vector<24xf32>
    %104 = vector.multi_reduction <maximumf>, %103, %cst_40 [1] : vector<24x24xf32> to vector<24xf32>
    %105 = vector.shape_cast %104 : vector<24xf32> to vector<24x1xf32>
    %106 = vector.broadcast %105 : vector<24x1xf32> to vector<24x24xf32>
    %107 = arith.subf %103, %106 : vector<24x24xf32>
    %108 = math.exp %107 : vector<24x24xf32>
    %cst_41 = arith.constant dense<0.000000e+00> : vector<24xf32>
    %109 = vector.multi_reduction <add>, %108, %cst_41 [1] : vector<24x24xf32> to vector<24xf32>
    %110 = vector.shape_cast %109 : vector<24xf32> to vector<24x1xf32>
    %111 = tpu.reciprocal %110 {approx = true} : vector<24x1xf32> -> vector<24x1xf32>
    %112 = vector.broadcast %111 : vector<24x1xf32> to vector<24x24xf32>
    %113 = arith.mulf %108, %112 : vector<24x24xf32>
    %114 = arith.truncf %113 : vector<24x24xf32> to vector<24x24xbf16>
    %cst_42 = arith.constant dense<0.000000e+00> : vector<24x16xf32>
    %115 = tpu.matmul %114, %94, %cst_42 {dimension_numbers = #tpu.dot_dimension_numbers<[1], [0], [0], [1], [0, 0, 1, 1], [], []>} : vector<24x24xbf16>, vector<24x16xbf16>, vector<24x16xf32> -> vector<24x16xf32>
    %116 = tpu.concatenate %91, %115 in 1 : vector<24x16xf32>, vector<24x16xf32> -> vector<24x32xf32>
    %117 = vector.extract_strided_slice %64 {offsets = [1, 0, 0], sizes = [1, 24, 96], strides = [1, 1, 1]} : vector<2x24x96xf32> to vector<1x24x96xf32>
    %118 = vector.shape_cast %117 : vector<1x24x96xf32> to vector<24x96xf32>
    %119 = arith.truncf %118 : vector<24x96xf32> to vector<24x96xbf16>
    %120 = vector.extract_strided_slice %119 {offsets = [0, 0], sizes = [24, 16], strides = [1, 1]} : vector<24x96xbf16> to vector<24x16xbf16>
    %121 = vector.extract_strided_slice %119 {offsets = [0, 32], sizes = [24, 16], strides = [1, 1]} : vector<24x96xbf16> to vector<24x16xbf16>
    %122 = vector.extract_strided_slice %119 {offsets = [0, 64], sizes = [24, 16], strides = [1, 1]} : vector<24x96xbf16> to vector<24x16xbf16>
    %cst_43 = arith.constant dense<0.000000e+00> : vector<24x24xf32>
    %123 = tpu.matmul %120, %121, %cst_43 {dimension_numbers = #tpu.dot_dimension_numbers<[1], [1], [0], [0], [0, 0, 1, 0], [], []>} : vector<24x16xbf16>, vector<24x16xbf16>, vector<24x24xf32> -> vector<24x24xf32>
    %cst_44 = arith.constant 2.500000e-01 : f32
    %124 = vector.broadcast %cst_44 : f32 to vector<24x24xf32>
    %125 = arith.mulf %123, %124 : vector<24x24xf32>
    %cst_45 = arith.constant -1.000000e+04 : f32
    %126 = vector.broadcast %cst_45 : f32 to vector<24x24xf32>
    %127 = arith.select %29, %125, %126 : vector<24x24xi1>, vector<24x24xf32>
    %128 = vector.extract_strided_slice %26 {offsets = [1, 0, 0], sizes = [1, 1, 24], strides = [1, 1, 1]} : vector<2x1x24xf32> to vector<1x1x24xf32>
    %129 = vector.shape_cast %128 : vector<1x1x24xf32> to vector<1x24xf32>
    %130 = vector.broadcast %129 : vector<1x24xf32> to vector<24x24xf32>
    %131 = arith.addf %127, %130 : vector<24x24xf32>
    %cst_46 = arith.constant dense<0xFF800000> : vector<24xf32>
    %132 = vector.multi_reduction <maximumf>, %131, %cst_46 [1] : vector<24x24xf32> to vector<24xf32>
    %133 = vector.shape_cast %132 : vector<24xf32> to vector<24x1xf32>
    %134 = vector.broadcast %133 : vector<24x1xf32> to vector<24x24xf32>
    %135 = arith.subf %131, %134 : vector<24x24xf32>
    %136 = math.exp %135 : vector<24x24xf32>
    %cst_47 = arith.constant dense<0.000000e+00> : vector<24xf32>
    %137 = vector.multi_reduction <add>, %136, %cst_47 [1] : vector<24x24xf32> to vector<24xf32>
    %138 = vector.shape_cast %137 : vector<24xf32> to vector<24x1xf32>
    %139 = tpu.reciprocal %138 {approx = true} : vector<24x1xf32> -> vector<24x1xf32>
    %140 = vector.broadcast %139 : vector<24x1xf32> to vector<24x24xf32>
    %141 = arith.mulf %136, %140 : vector<24x24xf32>
    %142 = arith.truncf %141 : vector<24x24xf32> to vector<24x24xbf16>
    %cst_48 = arith.constant dense<0.000000e+00> : vector<24x16xf32>
    %143 = tpu.matmul %142, %122, %cst_48 {dimension_numbers = #tpu.dot_dimension_numbers<[1], [0], [0], [1], [0, 0, 1, 1], [], []>} : vector<24x24xbf16>, vector<24x16xbf16>, vector<24x16xf32> -> vector<24x16xf32>
    %144 = vector.extract_strided_slice %119 {offsets = [0, 16], sizes = [24, 16], strides = [1, 1]} : vector<24x96xbf16> to vector<24x16xbf16>
    %145 = vector.extract_strided_slice %119 {offsets = [0, 48], sizes = [24, 16], strides = [1, 1]} : vector<24x96xbf16> to vector<24x16xbf16>
    %146 = vector.extract_strided_slice %119 {offsets = [0, 80], sizes = [24, 16], strides = [1, 1]} : vector<24x96xbf16> to vector<24x16xbf16>
    %cst_49 = arith.constant dense<0.000000e+00> : vector<24x24xf32>
    %147 = tpu.matmul %144, %145, %cst_49 {dimension_numbers = #tpu.dot_dimension_numbers<[1], [1], [0], [0], [0, 0, 1, 0], [], []>} : vector<24x16xbf16>, vector<24x16xbf16>, vector<24x24xf32> -> vector<24x24xf32>
    %cst_50 = arith.constant 2.500000e-01 : f32
    %148 = vector.broadcast %cst_50 : f32 to vector<24x24xf32>
    %149 = arith.mulf %147, %148 : vector<24x24xf32>
    %cst_51 = arith.constant -1.000000e+04 : f32
    %150 = vector.broadcast %cst_51 : f32 to vector<24x24xf32>
    %151 = arith.select %29, %149, %150 : vector<24x24xi1>, vector<24x24xf32>
    %152 = vector.extract_strided_slice %26 {offsets = [1, 0, 0], sizes = [1, 1, 24], strides = [1, 1, 1]} : vector<2x1x24xf32> to vector<1x1x24xf32>
    %153 = vector.shape_cast %152 : vector<1x1x24xf32> to vector<1x24xf32>
    %154 = vector.broadcast %153 : vector<1x24xf32> to vector<24x24xf32>
    %155 = arith.addf %151, %154 : vector<24x24xf32>
    %cst_52 = arith.constant dense<0xFF800000> : vector<24xf32>
    %156 = vector.multi_reduction <maximumf>, %155, %cst_52 [1] : vector<24x24xf32> to vector<24xf32>
    %157 = vector.shape_cast %156 : vector<24xf32> to vector<24x1xf32>
    %158 = vector.broadcast %157 : vector<24x1xf32> to vector<24x24xf32>
    %159 = arith.subf %155, %158 : vector<24x24xf32>
    %160 = math.exp %159 : vector<24x24xf32>
    %cst_53 = arith.constant dense<0.000000e+00> : vector<24xf32>
    %161 = vector.multi_reduction <add>, %160, %cst_53 [1] : vector<24x24xf32> to vector<24xf32>
    %162 = vector.shape_cast %161 : vector<24xf32> to vector<24x1xf32>
    %163 = tpu.reciprocal %162 {approx = true} : vector<24x1xf32> -> vector<24x1xf32>
    %164 = vector.broadcast %163 : vector<24x1xf32> to vector<24x24xf32>
    %165 = arith.mulf %160, %164 : vector<24x24xf32>
    %166 = arith.truncf %165 : vector<24x24xf32> to vector<24x24xbf16>
    %cst_54 = arith.constant dense<0.000000e+00> : vector<24x16xf32>
    %167 = tpu.matmul %166, %146, %cst_54 {dimension_numbers = #tpu.dot_dimension_numbers<[1], [0], [0], [1], [0, 0, 1, 1], [], []>} : vector<24x24xbf16>, vector<24x16xbf16>, vector<24x16xf32> -> vector<24x16xf32>
    %168 = tpu.concatenate %143, %167 in 1 : vector<24x16xf32>, vector<24x16xf32> -> vector<24x32xf32>
    %169 = tpu.concatenate %116, %168 in 0 : vector<24x32xf32>, vector<24x32xf32> -> vector<48x32xf32>
    %170 = arith.truncf %169 : vector<48x32xf32> to vector<48x32xbf16>
    %c0_55 = arith.constant 0 : index
    %c0_56 = arith.constant 0 : index
    %c0_57 = arith.constant 0 : index
    %171 = vector.load %arg9[%c0_55, %c0_56, %c0_57] : memref<2x32x32xbf16, #tpu.memory_space<vmem>>, vector<1x32x32xbf16>
    %172 = vector.shape_cast %171 : vector<1x32x32xbf16> to vector<32x32xbf16>
    %cst_58 = arith.constant dense<0.000000e+00> : vector<48x32xf32>
    %173 = tpu.matmul %170, %172, %cst_58 {dimension_numbers = #tpu.dot_dimension_numbers<[1], [0], [0], [1], [0, 0, 1, 1], [], []>} : vector<48x32xbf16>, vector<32x32xbf16>, vector<48x32xf32> -> vector<48x32xf32>
    %c0_59 = arith.constant 0 : index
    %c0_60 = arith.constant 0 : index
    %c0_61 = arith.constant 0 : index
    %174 = vector.load %arg10[%c0_59, %c0_60, %c0_61] : memref<2x1x32xf32, #tpu.memory_space<vmem>>, vector<1x1x32xf32>
    %175 = vector.shape_cast %174 : vector<1x1x32xf32> to vector<1x32xf32>
    %176 = vector.broadcast %175 : vector<1x32xf32> to vector<48x32xf32>
    %177 = arith.addf %173, %176 : vector<48x32xf32>
    %178 = arith.addf %25, %177 : vector<48x32xf32>
    %c0_62 = arith.constant 0 : index
    %c0_63 = arith.constant 0 : index
    %c0_64 = arith.constant 0 : index
    %179 = vector.load %arg11[%c0_62, %c0_63, %c0_64] : memref<2x1x32xf32, #tpu.memory_space<vmem>>, vector<1x1x32xf32>
    %180 = vector.shape_cast %179 : vector<1x1x32xf32> to vector<1x32xf32>
    %c0_65 = arith.constant 0 : index
    %c0_66 = arith.constant 0 : index
    %c0_67 = arith.constant 0 : index
    %181 = vector.load %arg12[%c0_65, %c0_66, %c0_67] : memref<2x1x32xf32, #tpu.memory_space<vmem>>, vector<1x1x32xf32>
    %182 = vector.shape_cast %181 : vector<1x1x32xf32> to vector<1x32xf32>
    %cst_68 = arith.constant dense<0.000000e+00> : vector<48xf32>
    %183 = vector.multi_reduction <add>, %178, %cst_68 [1] : vector<48x32xf32> to vector<48xf32>
    %184 = vector.shape_cast %183 : vector<48xf32> to vector<48x1xf32>
    %cst_69 = arith.constant 3.200000e+01 : f32
    %185 = vector.broadcast %cst_69 : f32 to vector<48x1xf32>
    %186 = arith.divf %184, %185 : vector<48x1xf32>
    %187 = vector.broadcast %186 : vector<48x1xf32> to vector<48x32xf32>
    %188 = arith.subf %178, %187 : vector<48x32xf32>
    %189 = arith.mulf %188, %188 : vector<48x32xf32>
    %cst_70 = arith.constant dense<0.000000e+00> : vector<48xf32>
    %190 = vector.multi_reduction <add>, %189, %cst_70 [1] : vector<48x32xf32> to vector<48xf32>
    %191 = vector.shape_cast %190 : vector<48xf32> to vector<48x1xf32>
    %cst_71 = arith.constant 3.200000e+01 : f32
    %192 = vector.broadcast %cst_71 : f32 to vector<48x1xf32>
    %193 = arith.divf %191, %192 : vector<48x1xf32>
    %194 = vector.broadcast %186 : vector<48x1xf32> to vector<48x32xf32>
    %195 = arith.subf %178, %194 : vector<48x32xf32>
    %cst_72 = arith.constant 9.99999974E-6 : f32
    %196 = vector.broadcast %cst_72 : f32 to vector<48x1xf32>
    %197 = arith.addf %193, %196 : vector<48x1xf32>
    %198 = math.rsqrt %197 : vector<48x1xf32>
    %199 = vector.broadcast %198 : vector<48x1xf32> to vector<48x32xf32>
    %200 = arith.mulf %195, %199 : vector<48x32xf32>
    %201 = vector.broadcast %180 : vector<1x32xf32> to vector<48x32xf32>
    %202 = arith.mulf %200, %201 : vector<48x32xf32>
    %203 = vector.broadcast %182 : vector<1x32xf32> to vector<48x32xf32>
    %204 = arith.addf %202, %203 : vector<48x32xf32>
    %205 = arith.truncf %204 : vector<48x32xf32> to vector<48x32xbf16>
    %c0_73 = arith.constant 0 : index
    %c0_74 = arith.constant 0 : index
    %c0_75 = arith.constant 0 : index
    %206 = vector.load %arg13[%c0_73, %c0_74, %c0_75] : memref<2x32x128xbf16, #tpu.memory_space<vmem>>, vector<1x32x128xbf16>
    %207 = vector.shape_cast %206 : vector<1x32x128xbf16> to vector<32x128xbf16>
    %cst_76 = arith.constant dense<0.000000e+00> : vector<48x128xf32>
    %208 = tpu.matmul %205, %207, %cst_76 {dimension_numbers = #tpu.dot_dimension_numbers<[1], [0], [0], [1], [0, 0, 1, 1], [], []>} : vector<48x32xbf16>, vector<32x128xbf16>, vector<48x128xf32> -> vector<48x128xf32>
    %c0_77 = arith.constant 0 : index
    %c0_78 = arith.constant 0 : index
    %c0_79 = arith.constant 0 : index
    %209 = vector.load %arg14[%c0_77, %c0_78, %c0_79] : memref<2x1x128xf32, #tpu.memory_space<vmem>>, vector<1x1x128xf32>
    %210 = vector.shape_cast %209 : vector<1x1x128xf32> to vector<1x128xf32>
    %211 = vector.broadcast %210 : vector<1x128xf32> to vector<48x128xf32>
    %212 = arith.addf %208, %211 : vector<48x128xf32>
    %213 = arith.mulf %212, %212 : vector<48x128xf32>
    %214 = arith.mulf %212, %213 : vector<48x128xf32>
    %cst_80 = arith.constant 4.471500e-02 : f32
    %215 = vector.broadcast %cst_80 : f32 to vector<48x128xf32>
    %216 = arith.mulf %215, %214 : vector<48x128xf32>
    %217 = arith.addf %212, %216 : vector<48x128xf32>
    %cst_81 = arith.constant 0.797884583 : f32
    %218 = vector.broadcast %cst_81 : f32 to vector<48x128xf32>
    %219 = arith.mulf %218, %217 : vector<48x128xf32>
    %220 = math.tanh %219 : vector<48x128xf32>
    %cst_82 = arith.constant 1.000000e+00 : f32
    %221 = vector.broadcast %cst_82 : f32 to vector<48x128xf32>
    %222 = arith.addf %221, %220 : vector<48x128xf32>
    %cst_83 = arith.constant 5.000000e-01 : f32
    %223 = vector.broadcast %cst_83 : f32 to vector<48x128xf32>
    %224 = arith.mulf %223, %222 : vector<48x128xf32>
    %225 = arith.mulf %212, %224 : vector<48x128xf32>
    %226 = arith.truncf %225 : vector<48x128xf32> to vector<48x128xbf16>
    %c0_84 = arith.constant 0 : index
    %c0_85 = arith.constant 0 : index
    %c0_86 = arith.constant 0 : index
    %227 = vector.load %arg15[%c0_84, %c0_85, %c0_86] : memref<2x128x32xbf16, #tpu.memory_space<vmem>>, vector<1x128x32xbf16>
    %228 = vector.shape_cast %227 : vector<1x128x32xbf16> to vector<128x32xbf16>
    %cst_87 = arith.constant dense<0.000000e+00> : vector<48x32xf32>
    %229 = tpu.matmul %226, %228, %cst_87 {dimension_numbers = #tpu.dot_dimension_numbers<[1], [0], [0], [1], [0, 0, 1, 1], [], []>} : vector<48x128xbf16>, vector<128x32xbf16>, vector<48x32xf32> -> vector<48x32xf32>
    %c0_88 = arith.constant 0 : index
    %c0_89 = arith.constant 0 : index
    %c0_90 = arith.constant 0 : index
    %230 = vector.load %arg16[%c0_88, %c0_89, %c0_90] : memref<2x1x32xf32, #tpu.memory_space<vmem>>, vector<1x1x32xf32>
    %231 = vector.shape_cast %230 : vector<1x1x32xf32> to vector<1x32xf32>
    %232 = vector.broadcast %231 : vector<1x32xf32> to vector<48x32xf32>
    %233 = arith.addf %229, %232 : vector<48x32xf32>
    %234 = arith.addf %178, %233 : vector<48x32xf32>
    %c1 = arith.constant 1 : index
    %c0_91 = arith.constant 0 : index
    %c0_92 = arith.constant 0 : index
    %235 = vector.load %arg5[%c1, %c0_91, %c0_92] : memref<2x1x32xf32, #tpu.memory_space<vmem>>, vector<1x1x32xf32>
    %236 = vector.shape_cast %235 : vector<1x1x32xf32> to vector<1x32xf32>
    %c1_93 = arith.constant 1 : index
    %c0_94 = arith.constant 0 : index
    %c0_95 = arith.constant 0 : index
    %237 = vector.load %arg6[%c1_93, %c0_94, %c0_95] : memref<2x1x32xf32, #tpu.memory_space<vmem>>, vector<1x1x32xf32>
    %238 = vector.shape_cast %237 : vector<1x1x32xf32> to vector<1x32xf32>
    %cst_96 = arith.constant dense<0.000000e+00> : vector<48xf32>
    %239 = vector.multi_reduction <add>, %234, %cst_96 [1] : vector<48x32xf32> to vector<48xf32>
    %240 = vector.shape_cast %239 : vector<48xf32> to vector<48x1xf32>
    %cst_97 = arith.constant 3.200000e+01 : f32
    %241 = vector.broadcast %cst_97 : f32 to vector<48x1xf32>
    %242 = arith.divf %240, %241 : vector<48x1xf32>
    %243 = vector.broadcast %242 : vector<48x1xf32> to vector<48x32xf32>
    %244 = arith.subf %234, %243 : vector<48x32xf32>
    %245 = arith.mulf %244, %244 : vector<48x32xf32>
    %cst_98 = arith.constant dense<0.000000e+00> : vector<48xf32>
    %246 = vector.multi_reduction <add>, %245, %cst_98 [1] : vector<48x32xf32> to vector<48xf32>
    %247 = vector.shape_cast %246 : vector<48xf32> to vector<48x1xf32>
    %cst_99 = arith.constant 3.200000e+01 : f32
    %248 = vector.broadcast %cst_99 : f32 to vector<48x1xf32>
    %249 = arith.divf %247, %248 : vector<48x1xf32>
    %250 = vector.broadcast %242 : vector<48x1xf32> to vector<48x32xf32>
    %251 = arith.subf %234, %250 : vector<48x32xf32>
    %cst_100 = arith.constant 9.99999974E-6 : f32
    %252 = vector.broadcast %cst_100 : f32 to vector<48x1xf32>
    %253 = arith.addf %249, %252 : vector<48x1xf32>
    %254 = math.rsqrt %253 : vector<48x1xf32>
    %255 = vector.broadcast %254 : vector<48x1xf32> to vector<48x32xf32>
    %256 = arith.mulf %251, %255 : vector<48x32xf32>
    %257 = vector.broadcast %236 : vector<1x32xf32> to vector<48x32xf32>
    %258 = arith.mulf %256, %257 : vector<48x32xf32>
    %259 = vector.broadcast %238 : vector<1x32xf32> to vector<48x32xf32>
    %260 = arith.addf %258, %259 : vector<48x32xf32>
    %261 = arith.truncf %260 : vector<48x32xf32> to vector<48x32xbf16>
    %c1_101 = arith.constant 1 : index
    %c0_102 = arith.constant 0 : index
    %c0_103 = arith.constant 0 : index
    %262 = vector.load %arg7[%c1_101, %c0_102, %c0_103] : memref<2x32x96xbf16, #tpu.memory_space<vmem>>, vector<1x32x96xbf16>
    %263 = vector.shape_cast %262 : vector<1x32x96xbf16> to vector<32x96xbf16>
    %cst_104 = arith.constant dense<0.000000e+00> : vector<48x96xf32>
    %264 = tpu.matmul %261, %263, %cst_104 {dimension_numbers = #tpu.dot_dimension_numbers<[1], [0], [0], [1], [0, 0, 1, 1], [], []>} : vector<48x32xbf16>, vector<32x96xbf16>, vector<48x96xf32> -> vector<48x96xf32>
    %c1_105 = arith.constant 1 : index
    %c0_106 = arith.constant 0 : index
    %c0_107 = arith.constant 0 : index
    %265 = vector.load %arg8[%c1_105, %c0_106, %c0_107] : memref<2x1x96xf32, #tpu.memory_space<vmem>>, vector<1x1x96xf32>
    %266 = vector.shape_cast %265 : vector<1x1x96xf32> to vector<1x96xf32>
    %267 = vector.broadcast %266 : vector<1x96xf32> to vector<48x96xf32>
    %268 = arith.addf %264, %267 : vector<48x96xf32>
    %269 = vector.shape_cast %268 : vector<48x96xf32> to vector<2x24x96xf32>
    %270 = vector.extract_strided_slice %269 {offsets = [0, 0, 0], sizes = [1, 24, 96], strides = [1, 1, 1]} : vector<2x24x96xf32> to vector<1x24x96xf32>
    %271 = vector.shape_cast %270 : vector<1x24x96xf32> to vector<24x96xf32>
    %272 = arith.truncf %271 : vector<24x96xf32> to vector<24x96xbf16>
    %273 = vector.extract_strided_slice %272 {offsets = [0, 0], sizes = [24, 16], strides = [1, 1]} : vector<24x96xbf16> to vector<24x16xbf16>
    %274 = vector.extract_strided_slice %272 {offsets = [0, 32], sizes = [24, 16], strides = [1, 1]} : vector<24x96xbf16> to vector<24x16xbf16>
    %275 = vector.extract_strided_slice %272 {offsets = [0, 64], sizes = [24, 16], strides = [1, 1]} : vector<24x96xbf16> to vector<24x16xbf16>
    %cst_108 = arith.constant dense<0.000000e+00> : vector<24x24xf32>
    %276 = tpu.matmul %273, %274, %cst_108 {dimension_numbers = #tpu.dot_dimension_numbers<[1], [1], [0], [0], [0, 0, 1, 0], [], []>} : vector<24x16xbf16>, vector<24x16xbf16>, vector<24x24xf32> -> vector<24x24xf32>
    %cst_109 = arith.constant 2.500000e-01 : f32
    %277 = vector.broadcast %cst_109 : f32 to vector<24x24xf32>
    %278 = arith.mulf %276, %277 : vector<24x24xf32>
    %cst_110 = arith.constant -1.000000e+04 : f32
    %279 = vector.broadcast %cst_110 : f32 to vector<24x24xf32>
    %280 = arith.select %29, %278, %279 : vector<24x24xi1>, vector<24x24xf32>
    %281 = vector.extract_strided_slice %26 {offsets = [0, 0, 0], sizes = [1, 1, 24], strides = [1, 1, 1]} : vector<2x1x24xf32> to vector<1x1x24xf32>
    %282 = vector.shape_cast %281 : vector<1x1x24xf32> to vector<1x24xf32>
    %283 = vector.broadcast %282 : vector<1x24xf32> to vector<24x24xf32>
    %284 = arith.addf %280, %283 : vector<24x24xf32>
    %cst_111 = arith.constant dense<0xFF800000> : vector<24xf32>
    %285 = vector.multi_reduction <maximumf>, %284, %cst_111 [1] : vector<24x24xf32> to vector<24xf32>
    %286 = vector.shape_cast %285 : vector<24xf32> to vector<24x1xf32>
    %287 = vector.broadcast %286 : vector<24x1xf32> to vector<24x24xf32>
    %288 = arith.subf %284, %287 : vector<24x24xf32>
    %289 = math.exp %288 : vector<24x24xf32>
    %cst_112 = arith.constant dense<0.000000e+00> : vector<24xf32>
    %290 = vector.multi_reduction <add>, %289, %cst_112 [1] : vector<24x24xf32> to vector<24xf32>
    %291 = vector.shape_cast %290 : vector<24xf32> to vector<24x1xf32>
    %292 = tpu.reciprocal %291 {approx = true} : vector<24x1xf32> -> vector<24x1xf32>
    %293 = vector.broadcast %292 : vector<24x1xf32> to vector<24x24xf32>
    %294 = arith.mulf %289, %293 : vector<24x24xf32>
    %295 = arith.truncf %294 : vector<24x24xf32> to vector<24x24xbf16>
    %cst_113 = arith.constant dense<0.000000e+00> : vector<24x16xf32>
    %296 = tpu.matmul %295, %275, %cst_113 {dimension_numbers = #tpu.dot_dimension_numbers<[1], [0], [0], [1], [0, 0, 1, 1], [], []>} : vector<24x24xbf16>, vector<24x16xbf16>, vector<24x16xf32> -> vector<24x16xf32>
    %297 = vector.extract_strided_slice %272 {offsets = [0, 16], sizes = [24, 16], strides = [1, 1]} : vector<24x96xbf16> to vector<24x16xbf16>
    %298 = vector.extract_strided_slice %272 {offsets = [0, 48], sizes = [24, 16], strides = [1, 1]} : vector<24x96xbf16> to vector<24x16xbf16>
    %299 = vector.extract_strided_slice %272 {offsets = [0, 80], sizes = [24, 16], strides = [1, 1]} : vector<24x96xbf16> to vector<24x16xbf16>
    %cst_114 = arith.constant dense<0.000000e+00> : vector<24x24xf32>
    %300 = tpu.matmul %297, %298, %cst_114 {dimension_numbers = #tpu.dot_dimension_numbers<[1], [1], [0], [0], [0, 0, 1, 0], [], []>} : vector<24x16xbf16>, vector<24x16xbf16>, vector<24x24xf32> -> vector<24x24xf32>
    %cst_115 = arith.constant 2.500000e-01 : f32
    %301 = vector.broadcast %cst_115 : f32 to vector<24x24xf32>
    %302 = arith.mulf %300, %301 : vector<24x24xf32>
    %cst_116 = arith.constant -1.000000e+04 : f32
    %303 = vector.broadcast %cst_116 : f32 to vector<24x24xf32>
    %304 = arith.select %29, %302, %303 : vector<24x24xi1>, vector<24x24xf32>
    %305 = vector.extract_strided_slice %26 {offsets = [0, 0, 0], sizes = [1, 1, 24], strides = [1, 1, 1]} : vector<2x1x24xf32> to vector<1x1x24xf32>
    %306 = vector.shape_cast %305 : vector<1x1x24xf32> to vector<1x24xf32>
    %307 = vector.broadcast %306 : vector<1x24xf32> to vector<24x24xf32>
    %308 = arith.addf %304, %307 : vector<24x24xf32>
    %cst_117 = arith.constant dense<0xFF800000> : vector<24xf32>
    %309 = vector.multi_reduction <maximumf>, %308, %cst_117 [1] : vector<24x24xf32> to vector<24xf32>
    %310 = vector.shape_cast %309 : vector<24xf32> to vector<24x1xf32>
    %311 = vector.broadcast %310 : vector<24x1xf32> to vector<24x24xf32>
    %312 = arith.subf %308, %311 : vector<24x24xf32>
    %313 = math.exp %312 : vector<24x24xf32>
    %cst_118 = arith.constant dense<0.000000e+00> : vector<24xf32>
    %314 = vector.multi_reduction <add>, %313, %cst_118 [1] : vector<24x24xf32> to vector<24xf32>
    %315 = vector.shape_cast %314 : vector<24xf32> to vector<24x1xf32>
    %316 = tpu.reciprocal %315 {approx = true} : vector<24x1xf32> -> vector<24x1xf32>
    %317 = vector.broadcast %316 : vector<24x1xf32> to vector<24x24xf32>
    %318 = arith.mulf %313, %317 : vector<24x24xf32>
    %319 = arith.truncf %318 : vector<24x24xf32> to vector<24x24xbf16>
    %cst_119 = arith.constant dense<0.000000e+00> : vector<24x16xf32>
    %320 = tpu.matmul %319, %299, %cst_119 {dimension_numbers = #tpu.dot_dimension_numbers<[1], [0], [0], [1], [0, 0, 1, 1], [], []>} : vector<24x24xbf16>, vector<24x16xbf16>, vector<24x16xf32> -> vector<24x16xf32>
    %321 = tpu.concatenate %296, %320 in 1 : vector<24x16xf32>, vector<24x16xf32> -> vector<24x32xf32>
    %322 = vector.extract_strided_slice %269 {offsets = [1, 0, 0], sizes = [1, 24, 96], strides = [1, 1, 1]} : vector<2x24x96xf32> to vector<1x24x96xf32>
    %323 = vector.shape_cast %322 : vector<1x24x96xf32> to vector<24x96xf32>
    %324 = arith.truncf %323 : vector<24x96xf32> to vector<24x96xbf16>
    %325 = vector.extract_strided_slice %324 {offsets = [0, 0], sizes = [24, 16], strides = [1, 1]} : vector<24x96xbf16> to vector<24x16xbf16>
    %326 = vector.extract_strided_slice %324 {offsets = [0, 32], sizes = [24, 16], strides = [1, 1]} : vector<24x96xbf16> to vector<24x16xbf16>
    %327 = vector.extract_strided_slice %324 {offsets = [0, 64], sizes = [24, 16], strides = [1, 1]} : vector<24x96xbf16> to vector<24x16xbf16>
    %cst_120 = arith.constant dense<0.000000e+00> : vector<24x24xf32>
    %328 = tpu.matmul %325, %326, %cst_120 {dimension_numbers = #tpu.dot_dimension_numbers<[1], [1], [0], [0], [0, 0, 1, 0], [], []>} : vector<24x16xbf16>, vector<24x16xbf16>, vector<24x24xf32> -> vector<24x24xf32>
    %cst_121 = arith.constant 2.500000e-01 : f32
    %329 = vector.broadcast %cst_121 : f32 to vector<24x24xf32>
    %330 = arith.mulf %328, %329 : vector<24x24xf32>
    %cst_122 = arith.constant -1.000000e+04 : f32
    %331 = vector.broadcast %cst_122 : f32 to vector<24x24xf32>
    %332 = arith.select %29, %330, %331 : vector<24x24xi1>, vector<24x24xf32>
    %333 = vector.extract_strided_slice %26 {offsets = [1, 0, 0], sizes = [1, 1, 24], strides = [1, 1, 1]} : vector<2x1x24xf32> to vector<1x1x24xf32>
    %334 = vector.shape_cast %333 : vector<1x1x24xf32> to vector<1x24xf32>
    %335 = vector.broadcast %334 : vector<1x24xf32> to vector<24x24xf32>
    %336 = arith.addf %332, %335 : vector<24x24xf32>
    %cst_123 = arith.constant dense<0xFF800000> : vector<24xf32>
    %337 = vector.multi_reduction <maximumf>, %336, %cst_123 [1] : vector<24x24xf32> to vector<24xf32>
    %338 = vector.shape_cast %337 : vector<24xf32> to vector<24x1xf32>
    %339 = vector.broadcast %338 : vector<24x1xf32> to vector<24x24xf32>
    %340 = arith.subf %336, %339 : vector<24x24xf32>
    %341 = math.exp %340 : vector<24x24xf32>
    %cst_124 = arith.constant dense<0.000000e+00> : vector<24xf32>
    %342 = vector.multi_reduction <add>, %341, %cst_124 [1] : vector<24x24xf32> to vector<24xf32>
    %343 = vector.shape_cast %342 : vector<24xf32> to vector<24x1xf32>
    %344 = tpu.reciprocal %343 {approx = true} : vector<24x1xf32> -> vector<24x1xf32>
    %345 = vector.broadcast %344 : vector<24x1xf32> to vector<24x24xf32>
    %346 = arith.mulf %341, %345 : vector<24x24xf32>
    %347 = arith.truncf %346 : vector<24x24xf32> to vector<24x24xbf16>
    %cst_125 = arith.constant dense<0.000000e+00> : vector<24x16xf32>
    %348 = tpu.matmul %347, %327, %cst_125 {dimension_numbers = #tpu.dot_dimension_numbers<[1], [0], [0], [1], [0, 0, 1, 1], [], []>} : vector<24x24xbf16>, vector<24x16xbf16>, vector<24x16xf32> -> vector<24x16xf32>
    %349 = vector.extract_strided_slice %324 {offsets = [0, 16], sizes = [24, 16], strides = [1, 1]} : vector<24x96xbf16> to vector<24x16xbf16>
    %350 = vector.extract_strided_slice %324 {offsets = [0, 48], sizes = [24, 16], strides = [1, 1]} : vector<24x96xbf16> to vector<24x16xbf16>
    %351 = vector.extract_strided_slice %324 {offsets = [0, 80], sizes = [24, 16], strides = [1, 1]} : vector<24x96xbf16> to vector<24x16xbf16>
    %cst_126 = arith.constant dense<0.000000e+00> : vector<24x24xf32>
    %352 = tpu.matmul %349, %350, %cst_126 {dimension_numbers = #tpu.dot_dimension_numbers<[1], [1], [0], [0], [0, 0, 1, 0], [], []>} : vector<24x16xbf16>, vector<24x16xbf16>, vector<24x24xf32> -> vector<24x24xf32>
    %cst_127 = arith.constant 2.500000e-01 : f32
    %353 = vector.broadcast %cst_127 : f32 to vector<24x24xf32>
    %354 = arith.mulf %352, %353 : vector<24x24xf32>
    %cst_128 = arith.constant -1.000000e+04 : f32
    %355 = vector.broadcast %cst_128 : f32 to vector<24x24xf32>
    %356 = arith.select %29, %354, %355 : vector<24x24xi1>, vector<24x24xf32>
    %357 = vector.extract_strided_slice %26 {offsets = [1, 0, 0], sizes = [1, 1, 24], strides = [1, 1, 1]} : vector<2x1x24xf32> to vector<1x1x24xf32>
    %358 = vector.shape_cast %357 : vector<1x1x24xf32> to vector<1x24xf32>
    %359 = vector.broadcast %358 : vector<1x24xf32> to vector<24x24xf32>
    %360 = arith.addf %356, %359 : vector<24x24xf32>
    %cst_129 = arith.constant dense<0xFF800000> : vector<24xf32>
    %361 = vector.multi_reduction <maximumf>, %360, %cst_129 [1] : vector<24x24xf32> to vector<24xf32>
    %362 = vector.shape_cast %361 : vector<24xf32> to vector<24x1xf32>
    %363 = vector.broadcast %362 : vector<24x1xf32> to vector<24x24xf32>
    %364 = arith.subf %360, %363 : vector<24x24xf32>
    %365 = math.exp %364 : vector<24x24xf32>
    %cst_130 = arith.constant dense<0.000000e+00> : vector<24xf32>
    %366 = vector.multi_reduction <add>, %365, %cst_130 [1] : vector<24x24xf32> to vector<24xf32>
    %367 = vector.shape_cast %366 : vector<24xf32> to vector<24x1xf32>
    %368 = tpu.reciprocal %367 {approx = true} : vector<24x1xf32> -> vector<24x1xf32>
    %369 = vector.broadcast %368 : vector<24x1xf32> to vector<24x24xf32>
    %370 = arith.mulf %365, %369 : vector<24x24xf32>
    %371 = arith.truncf %370 : vector<24x24xf32> to vector<24x24xbf16>
    %cst_131 = arith.constant dense<0.000000e+00> : vector<24x16xf32>
    %372 = tpu.matmul %371, %351, %cst_131 {dimension_numbers = #tpu.dot_dimension_numbers<[1], [0], [0], [1], [0, 0, 1, 1], [], []>} : vector<24x24xbf16>, vector<24x16xbf16>, vector<24x16xf32> -> vector<24x16xf32>
    %373 = tpu.concatenate %348, %372 in 1 : vector<24x16xf32>, vector<24x16xf32> -> vector<24x32xf32>
    %374 = tpu.concatenate %321, %373 in 0 : vector<24x32xf32>, vector<24x32xf32> -> vector<48x32xf32>
    %375 = arith.truncf %374 : vector<48x32xf32> to vector<48x32xbf16>
    %c1_132 = arith.constant 1 : index
    %c0_133 = arith.constant 0 : index
    %c0_134 = arith.constant 0 : index
    %376 = vector.load %arg9[%c1_132, %c0_133, %c0_134] : memref<2x32x32xbf16, #tpu.memory_space<vmem>>, vector<1x32x32xbf16>
    %377 = vector.shape_cast %376 : vector<1x32x32xbf16> to vector<32x32xbf16>
    %cst_135 = arith.constant dense<0.000000e+00> : vector<48x32xf32>
    %378 = tpu.matmul %375, %377, %cst_135 {dimension_numbers = #tpu.dot_dimension_numbers<[1], [0], [0], [1], [0, 0, 1, 1], [], []>} : vector<48x32xbf16>, vector<32x32xbf16>, vector<48x32xf32> -> vector<48x32xf32>
    %c1_136 = arith.constant 1 : index
    %c0_137 = arith.constant 0 : index
    %c0_138 = arith.constant 0 : index
    %379 = vector.load %arg10[%c1_136, %c0_137, %c0_138] : memref<2x1x32xf32, #tpu.memory_space<vmem>>, vector<1x1x32xf32>
    %380 = vector.shape_cast %379 : vector<1x1x32xf32> to vector<1x32xf32>
    %381 = vector.broadcast %380 : vector<1x32xf32> to vector<48x32xf32>
    %382 = arith.addf %378, %381 : vector<48x32xf32>
    %383 = arith.addf %234, %382 : vector<48x32xf32>
    %c1_139 = arith.constant 1 : index
    %c0_140 = arith.constant 0 : index
    %c0_141 = arith.constant 0 : index
    %384 = vector.load %arg11[%c1_139, %c0_140, %c0_141] : memref<2x1x32xf32, #tpu.memory_space<vmem>>, vector<1x1x32xf32>
    %385 = vector.shape_cast %384 : vector<1x1x32xf32> to vector<1x32xf32>
    %c1_142 = arith.constant 1 : index
    %c0_143 = arith.constant 0 : index
    %c0_144 = arith.constant 0 : index
    %386 = vector.load %arg12[%c1_142, %c0_143, %c0_144] : memref<2x1x32xf32, #tpu.memory_space<vmem>>, vector<1x1x32xf32>
    %387 = vector.shape_cast %386 : vector<1x1x32xf32> to vector<1x32xf32>
    %cst_145 = arith.constant dense<0.000000e+00> : vector<48xf32>
    %388 = vector.multi_reduction <add>, %383, %cst_145 [1] : vector<48x32xf32> to vector<48xf32>
    %389 = vector.shape_cast %388 : vector<48xf32> to vector<48x1xf32>
    %cst_146 = arith.constant 3.200000e+01 : f32
    %390 = vector.broadcast %cst_146 : f32 to vector<48x1xf32>
    %391 = arith.divf %389, %390 : vector<48x1xf32>
    %392 = vector.broadcast %391 : vector<48x1xf32> to vector<48x32xf32>
    %393 = arith.subf %383, %392 : vector<48x32xf32>
    %394 = arith.mulf %393, %393 : vector<48x32xf32>
    %cst_147 = arith.constant dense<0.000000e+00> : vector<48xf32>
    %395 = vector.multi_reduction <add>, %394, %cst_147 [1] : vector<48x32xf32> to vector<48xf32>
    %396 = vector.shape_cast %395 : vector<48xf32> to vector<48x1xf32>
    %cst_148 = arith.constant 3.200000e+01 : f32
    %397 = vector.broadcast %cst_148 : f32 to vector<48x1xf32>
    %398 = arith.divf %396, %397 : vector<48x1xf32>
    %399 = vector.broadcast %391 : vector<48x1xf32> to vector<48x32xf32>
    %400 = arith.subf %383, %399 : vector<48x32xf32>
    %cst_149 = arith.constant 9.99999974E-6 : f32
    %401 = vector.broadcast %cst_149 : f32 to vector<48x1xf32>
    %402 = arith.addf %398, %401 : vector<48x1xf32>
    %403 = math.rsqrt %402 : vector<48x1xf32>
    %404 = vector.broadcast %403 : vector<48x1xf32> to vector<48x32xf32>
    %405 = arith.mulf %400, %404 : vector<48x32xf32>
    %406 = vector.broadcast %385 : vector<1x32xf32> to vector<48x32xf32>
    %407 = arith.mulf %405, %406 : vector<48x32xf32>
    %408 = vector.broadcast %387 : vector<1x32xf32> to vector<48x32xf32>
    %409 = arith.addf %407, %408 : vector<48x32xf32>
    %410 = arith.truncf %409 : vector<48x32xf32> to vector<48x32xbf16>
    %c1_150 = arith.constant 1 : index
    %c0_151 = arith.constant 0 : index
    %c0_152 = arith.constant 0 : index
    %411 = vector.load %arg13[%c1_150, %c0_151, %c0_152] : memref<2x32x128xbf16, #tpu.memory_space<vmem>>, vector<1x32x128xbf16>
    %412 = vector.shape_cast %411 : vector<1x32x128xbf16> to vector<32x128xbf16>
    %cst_153 = arith.constant dense<0.000000e+00> : vector<48x128xf32>
    %413 = tpu.matmul %410, %412, %cst_153 {dimension_numbers = #tpu.dot_dimension_numbers<[1], [0], [0], [1], [0, 0, 1, 1], [], []>} : vector<48x32xbf16>, vector<32x128xbf16>, vector<48x128xf32> -> vector<48x128xf32>
    %c1_154 = arith.constant 1 : index
    %c0_155 = arith.constant 0 : index
    %c0_156 = arith.constant 0 : index
    %414 = vector.load %arg14[%c1_154, %c0_155, %c0_156] : memref<2x1x128xf32, #tpu.memory_space<vmem>>, vector<1x1x128xf32>
    %415 = vector.shape_cast %414 : vector<1x1x128xf32> to vector<1x128xf32>
    %416 = vector.broadcast %415 : vector<1x128xf32> to vector<48x128xf32>
    %417 = arith.addf %413, %416 : vector<48x128xf32>
    %418 = arith.mulf %417, %417 : vector<48x128xf32>
    %419 = arith.mulf %417, %418 : vector<48x128xf32>
    %cst_157 = arith.constant 4.471500e-02 : f32
    %420 = vector.broadcast %cst_157 : f32 to vector<48x128xf32>
    %421 = arith.mulf %420, %419 : vector<48x128xf32>
    %422 = arith.addf %417, %421 : vector<48x128xf32>
    %cst_158 = arith.constant 0.797884583 : f32
    %423 = vector.broadcast %cst_158 : f32 to vector<48x128xf32>
    %424 = arith.mulf %423, %422 : vector<48x128xf32>
    %425 = math.tanh %424 : vector<48x128xf32>
    %cst_159 = arith.constant 1.000000e+00 : f32
    %426 = vector.broadcast %cst_159 : f32 to vector<48x128xf32>
    %427 = arith.addf %426, %425 : vector<48x128xf32>
    %cst_160 = arith.constant 5.000000e-01 : f32
    %428 = vector.broadcast %cst_160 : f32 to vector<48x128xf32>
    %429 = arith.mulf %428, %427 : vector<48x128xf32>
    %430 = arith.mulf %417, %429 : vector<48x128xf32>
    %431 = arith.truncf %430 : vector<48x128xf32> to vector<48x128xbf16>
    %c1_161 = arith.constant 1 : index
    %c0_162 = arith.constant 0 : index
    %c0_163 = arith.constant 0 : index
    %432 = vector.load %arg15[%c1_161, %c0_162, %c0_163] : memref<2x128x32xbf16, #tpu.memory_space<vmem>>, vector<1x128x32xbf16>
    %433 = vector.shape_cast %432 : vector<1x128x32xbf16> to vector<128x32xbf16>
    %cst_164 = arith.constant dense<0.000000e+00> : vector<48x32xf32>
    %434 = tpu.matmul %431, %433, %cst_164 {dimension_numbers = #tpu.dot_dimension_numbers<[1], [0], [0], [1], [0, 0, 1, 1], [], []>} : vector<48x128xbf16>, vector<128x32xbf16>, vector<48x32xf32> -> vector<48x32xf32>
    %c1_165 = arith.constant 1 : index
    %c0_166 = arith.constant 0 : index
    %c0_167 = arith.constant 0 : index
    %435 = vector.load %arg16[%c1_165, %c0_166, %c0_167] : memref<2x1x32xf32, #tpu.memory_space<vmem>>, vector<1x1x32xf32>
    %436 = vector.shape_cast %435 : vector<1x1x32xf32> to vector<1x32xf32>
    %437 = vector.broadcast %436 : vector<1x32xf32> to vector<48x32xf32>
    %438 = arith.addf %434, %437 : vector<48x32xf32>
    %439 = arith.addf %383, %438 : vector<48x32xf32>
    %440 = vector.shape_cast %439 : vector<48x32xf32> to vector<2x24x32xf32>
    %c0_168 = arith.constant 0 : index
    %c0_169 = arith.constant 0 : index
    %c0_170 = arith.constant 0 : index
    %441 = vector.load %arg17[%c0_168, %c0_169, %c0_170] : memref<2x24x32xf32, #tpu.memory_space<vmem>>, vector<2x24x32xf32>
    tpu.vector_store %arg17[%c0_168, %c0_169, %c0_170], %440 {strides = array<i32>} : memref<2x24x32xf32, #tpu.memory_space<vmem>>, vector<2x24x32xf32>,
    return
  }
  func.func @transform_0(%arg0: i32) -> (i32, i32, i32) {
    %c0_i32 = arith.constant 0 : i32
    %c0_i32_0 = arith.constant 0 : i32
    %c0_i32_1 = arith.constant 0 : i32
    return %arg0, %c0_i32, %c0_i32_0 : i32, i32, i32
  }
  func.func @transform_1(%arg0: i32) -> (i32, i32, i32) {
    %c0_i32 = arith.constant 0 : i32
    %c0_i32_0 = arith.constant 0 : i32
    %c0_i32_1 = arith.constant 0 : i32
    return %arg0, %c0_i32, %c0_i32_0 : i32, i32, i32
  }
  func.func @transform_2(%arg0: i32) -> (i32, i32) {
    %c0_i32 = arith.constant 0 : i32
    %c0_i32_0 = arith.constant 0 : i32
    %c0_i32_1 = arith.constant 0 : i32
    return %c0_i32, %c0_i32_0 : i32, i32
  }
  func.func @transform_3(%arg0: i32) -> (i32, i32) {
    %c0_i32 = arith.constant 0 : i32
    %c0_i32_0 = arith.constant 0 : i32
    %c0_i32_1 = arith.constant 0 : i32
    return %c0_i32, %c0_i32_0 : i32, i32
  }
  func.func @transform_4(%arg0: i32) -> (i32, i32, i32) {
    %c0_i32 = arith.constant 0 : i32
    %c0_i32_0 = arith.constant 0 : i32
    %c0_i32_1 = arith.constant 0 : i32
    %c0_i32_2 = arith.constant 0 : i32
    return %c0_i32, %c0_i32_0, %c0_i32_1 : i32, i32, i32
  }
  func.func @transform_5(%arg0: i32) -> (i32, i32, i32) {
    %c0_i32 = arith.constant 0 : i32
    %c0_i32_0 = arith.constant 0 : i32
    %c0_i32_1 = arith.constant 0 : i32
    %c0_i32_2 = arith.constant 0 : i32
    return %c0_i32, %c0_i32_0, %c0_i32_1 : i32, i32, i32
  }
  func.func @transform_6(%arg0: i32) -> (i32, i32, i32) {
    %c0_i32 = arith.constant 0 : i32
    %c0_i32_0 = arith.constant 0 : i32
    %c0_i32_1 = arith.constant 0 : i32
    %c0_i32_2 = arith.constant 0 : i32
    return %c0_i32, %c0_i32_0, %c0_i32_1 : i32, i32, i32
  }
  func.func @transform_7(%arg0: i32) -> (i32, i32, i32) {
    %c0_i32 = arith.constant 0 : i32
    %c0_i32_0 = arith.constant 0 : i32
    %c0_i32_1 = arith.constant 0 : i32
    %c0_i32_2 = arith.constant 0 : i32
    return %c0_i32, %c0_i32_0, %c0_i32_1 : i32, i32, i32
  }
  func.func @transform_8(%arg0: i32) -> (i32, i32, i32) {
    %c0_i32 = arith.constant 0 : i32
    %c0_i32_0 = arith.constant 0 : i32
    %c0_i32_1 = arith.constant 0 : i32
    %c0_i32_2 = arith.constant 0 : i32
    return %c0_i32, %c0_i32_0, %c0_i32_1 : i32, i32, i32
  }
  func.func @transform_9(%arg0: i32) -> (i32, i32, i32) {
    %c0_i32 = arith.constant 0 : i32
    %c0_i32_0 = arith.constant 0 : i32
    %c0_i32_1 = arith.constant 0 : i32
    %c0_i32_2 = arith.constant 0 : i32
    return %c0_i32, %c0_i32_0, %c0_i32_1 : i32, i32, i32
  }
  func.func @transform_10(%arg0: i32) -> (i32, i32, i32) {
    %c0_i32 = arith.constant 0 : i32
    %c0_i32_0 = arith.constant 0 : i32
    %c0_i32_1 = arith.constant 0 : i32
    %c0_i32_2 = arith.constant 0 : i32
    return %c0_i32, %c0_i32_0, %c0_i32_1 : i32, i32, i32
  }
  func.func @transform_11(%arg0: i32) -> (i32, i32, i32) {
    %c0_i32 = arith.constant 0 : i32
    %c0_i32_0 = arith.constant 0 : i32
    %c0_i32_1 = arith.constant 0 : i32
    %c0_i32_2 = arith.constant 0 : i32
    return %c0_i32, %c0_i32_0, %c0_i32_1 : i32, i32, i32
  }
  func.func @transform_12(%arg0: i32) -> (i32, i32, i32) {
    %c0_i32 = arith.constant 0 : i32
    %c0_i32_0 = arith.constant 0 : i32
    %c0_i32_1 = arith.constant 0 : i32
    %c0_i32_2 = arith.constant 0 : i32
    return %c0_i32, %c0_i32_0, %c0_i32_1 : i32, i32, i32
  }
  func.func @transform_13(%arg0: i32) -> (i32, i32, i32) {
    %c0_i32 = arith.constant 0 : i32
    %c0_i32_0 = arith.constant 0 : i32
    %c0_i32_1 = arith.constant 0 : i32
    %c0_i32_2 = arith.constant 0 : i32
    return %c0_i32, %c0_i32_0, %c0_i32_1 : i32, i32, i32
  }
  func.func @transform_14(%arg0: i32) -> (i32, i32, i32) {
    %c0_i32 = arith.constant 0 : i32
    %c0_i32_0 = arith.constant 0 : i32
    %c0_i32_1 = arith.constant 0 : i32
    %c0_i32_2 = arith.constant 0 : i32
    return %c0_i32, %c0_i32_0, %c0_i32_1 : i32, i32, i32
  }
  func.func @transform_15(%arg0: i32) -> (i32, i32, i32) {
    %c0_i32 = arith.constant 0 : i32
    %c0_i32_0 = arith.constant 0 : i32
    %c0_i32_1 = arith.constant 0 : i32
    %c0_i32_2 = arith.constant 0 : i32
    return %c0_i32, %c0_i32_0, %c0_i32_1 : i32, i32, i32
  }
  func.func @transform_16(%arg0: i32) -> (i32, i32, i32) {
    %c0_i32 = arith.constant 0 : i32
    %c0_i32_0 = arith.constant 0 : i32
    %c0_i32_1 = arith.constant 0 : i32
    return %arg0, %c0_i32, %c0_i32_0 : i32, i32, i32
  }
}

</mosaic_0001>

<llo_original>
// kernel: _lambda_.1
$region0: #{_lambda_.1}
  #allocation0 [shape = 'u32[]', space=smem, size = 0x4, offset = 0x4, fixed_abs, tag = 'smem constant byte address 0x4 - core index']
  #allocation1 [shape = 'u32[144,128]{1,0:T(1,128)}', space=vmem, size = 0x12000, scoped, tag = 'internal scratch']
  %s0 = inlined_call_operand.vmem [shape: f32[2,24,32], index: 0, kind: input, shape index: {}, may-alias: {0,16}]
  %s1 = inlined_call_operand.vmem [shape: f32[2,1,24], index: 1, kind: input, shape index: {}]
  %s2 = inlined_call_operand.vmem [shape: f32[1,32], index: 2, kind: input, shape index: {}]
  %s3 = inlined_call_operand.vmem [shape: f32[1,32], index: 3, kind: input, shape index: {}]
  %s4 = inlined_call_operand.vmem [shape: f32[2,1,32], index: 4, kind: input, shape index: {}]
  %s5 = inlined_call_operand.vmem [shape: f32[2,1,32], index: 5, kind: input, shape index: {}]
  %s6 = inlined_call_operand.vmem [shape: bf16[2,32,96], index: 6, kind: input, shape index: {}]
  %s7 = inlined_call_operand.vmem [shape: f32[2,1,96], index: 7, kind: input, shape index: {}]
  %s8 = inlined_call_operand.vmem [shape: bf16[2,32,32], index: 8, kind: input, shape index: {}]
  %s9 = inlined_call_operand.vmem [shape: f32[2,1,32], index: 9, kind: input, shape index: {}]
  %s10 = inlined_call_operand.vmem [shape: f32[2,1,32], index: 10, kind: input, shape index: {}]
  %s11 = inlined_call_operand.vmem [shape: f32[2,1,32], index: 11, kind: input, shape index: {}]
  %s12 = inlined_call_operand.vmem [shape: bf16[2,32,128], index: 12, kind: input, shape index: {}]
  %s13 = inlined_call_operand.vmem [shape: f32[2,1,128], index: 13, kind: input, shape index: {}]
  %s14 = inlined_call_operand.vmem [shape: bf16[2,128,32], index: 14, kind: input, shape index: {}]
  %s15 = inlined_call_operand.vmem [shape: f32[2,1,32], index: 15, kind: input, shape index: {}]
  %s16 = inlined_call_operand.vmem [shape: f32[2,24,32], index: 16, kind: output, shape index: {}, may-alias: {0,16}]
  %s17 = sld [smem:[#allocation0]]
  $region74: #{_lambda_.1} parent=0
    _
  %s19 = ssub.s32 1, %s17
  %s20 = scalar_select 0, %s19, %s17
  // Predicated region
  $region2: #{_lambda_.1} parent=0 // pred_check
    _
  $region3: #{_lambda_.1} parent=0 // pred_check_branch
    %22 = sbr.rel (0) target = $region5
  $region4: #{_lambda_.1} parent=0 // pred_region
    _
  $region5: #{_lambda_.1} parent=0 // pred_fallthru
    _
  // Predicated region
  $region6: #{_lambda_.1} parent=0 // pred_check
    _
  $region7: #{_lambda_.1} parent=0 // pred_check_branch
    %24 = sbr.rel (0) target = $region9
  $region8: #{_lambda_.1} parent=0 // pred_region
    _
  $region9: #{_lambda_.1} parent=0 // pred_fallthru
    _
  // Predicated region
  $region10: #{_lambda_.1} parent=0 // pred_check
    _
  $region11: #{_lambda_.1} parent=0 // pred_check_branch
    %26 = sbr.rel (0) target = $region13
  $region12: #{_lambda_.1} parent=0 // pred_region
    _
  $region13: #{_lambda_.1} parent=0 // pred_fallthru
    _
  // Predicated region
  $region14: #{_lambda_.1} parent=0 // pred_check
    _
  $region15: #{_lambda_.1} parent=0 // pred_check_branch
    %28 = sbr.rel (0) target = $region17
  $region16: #{_lambda_.1} parent=0 // pred_region
    _
  $region17: #{_lambda_.1} parent=0 // pred_fallthru
    _
  // Predicated region
  $region18: #{_lambda_.1} parent=0 // pred_check
    _
  $region19: #{_lambda_.1} parent=0 // pred_check_branch
    %30 = sbr.rel (0) target = $region21
  $region20: #{_lambda_.1} parent=0 // pred_region
    _
  $region21: #{_lambda_.1} parent=0 // pred_fallthru
    _
  // Predicated region
  $region22: #{_lambda_.1} parent=0 // pred_check
    _
  $region23: #{_lambda_.1} parent=0 // pred_check_branch
    %32 = sbr.rel (0) target = $region25
  $region24: #{_lambda_.1} parent=0 // pred_region
    _
  $region25: #{_lambda_.1} parent=0 // pred_fallthru
    _
  // Predicated region
  $region26: #{_lambda_.1} parent=0 // pred_check
    _
  $region27: #{_lambda_.1} parent=0 // pred_check_branch
    %34 = sbr.rel (0) target = $region29
  $region28: #{_lambda_.1} parent=0 // pred_region
    _
  $region29: #{_lambda_.1} parent=0 // pred_fallthru
    _
  // Predicated region
  $region30: #{_lambda_.1} parent=0 // pred_check
    _
  $region31: #{_lambda_.1} parent=0 // pred_check_branch
    %36 = sbr.rel (0) target = $region33
  $region32: #{_lambda_.1} parent=0 // pred_region
    _
  $region33: #{_lambda_.1} parent=0 // pred_fallthru
    _
  // Predicated region
  $region34: #{_lambda_.1} parent=0 // pred_check
    _
  $region35: #{_lambda_.1} parent=0 // pred_check_branch
    %38 = sbr.rel (0) target = $region37
  $region36: #{_lambda_.1} parent=0 // pred_region
    _
  $region37: #{_lambda_.1} parent=0 // pred_fallthru
    _
  // Predicated region
  $region38: #{_lambda_.1} parent=0 // pred_check
    _
  $region39: #{_lambda_.1} parent=0 // pred_check_branch
    %40 = sbr.rel (0) target = $region41
  $region40: #{_lambda_.1} parent=0 // pred_region
    _
  $region41: #{_lambda_.1} parent=0 // pred_fallthru
    _
  // Predicated region
  $region42: #{_lambda_.1} parent=0 // pred_check
    _
  $region43: #{_lambda_.1} parent=0 // pred_check_branch
    %42 = sbr.rel (0) target = $region45
  $region44: #{_lambda_.1} parent=0 // pred_region
    _
  $region45: #{_lambda_.1} parent=0 // pred_fallthru
    _
  // Predicated region
  $region46: #{_lambda_.1} parent=0 // pred_check
    _
  $region47: #{_lambda_.1} parent=0 // pred_check_branch
    %44 = sbr.rel (0) target = $region49
  $region48: #{_lambda_.1} parent=0 // pred_region
    _
  $region49: #{_lambda_.1} parent=0 // pred_fallthru
    _
  // Predicated region
  $region50: #{_lambda_.1} parent=0 // pred_check
    _
  $region51: #{_lambda_.1} parent=0 // pred_check_branch
    %46 = sbr.rel (0) target = $region53
  $region52: #{_lambda_.1} parent=0 // pred_region
    _
  $region53: #{_lambda_.1} parent=0 // pred_fallthru
    _
  // Predicated region
  $region54: #{_lambda_.1} parent=0 // pred_check
    _
  $region55: #{_lambda_.1} parent=0 // pred_check_branch
    %48 = sbr.rel (0) target = $region57
  $region56: #{_lambda_.1} parent=0 // pred_region
    _
  $region57: #{_lambda_.1} parent=0 // pred_fallthru
    _
  // Predicated region
  $region58: #{_lambda_.1} parent=0 // pred_check
    _
  $region59: #{_lambda_.1} parent=0 // pred_check_branch
    %50 = sbr.rel (0) target = $region61
  $region60: #{_lambda_.1} parent=0 // pred_region
    _
  $region61: #{_lambda_.1} parent=0 // pred_fallthru
    _
  // Predicated region
  $region62: #{_lambda_.1} parent=0 // pred_check
    _
  $region63: #{_lambda_.1} parent=0 // pred_check_branch
    %52 = sbr.rel (0) target = $region65
  $region64: #{_lambda_.1} parent=0 // pred_region
    _
  $region65: #{_lambda_.1} parent=0 // pred_fallthru
    _
  %v54 = vld [vmem:[%s0] sm:$0xff]
  %v55 = vld [vmem:[%s0 + $0x8] sm:$0xff]
  %v56 = vld [vmem:[%s0 + $0x10] sm:$0xff]
  %v57 = vld [vmem:[%s0 + $0x18] sm:$0xff]
  %v58 = vld [vmem:[%s0 + $0x20] sm:$0xff]
  %v59 = vld [vmem:[%s0 + $0x28] sm:$0xff]
  %v60 = vld [vmem:[%s2] sm:$0x1]
  %v61 = vld [vmem:[%s3] sm:$0x1]
  %vm62 = vcmask 261120
  %v63 = vsel %vm62, %v54, 0.0
  %64 = vadd.xlane.f32.xlu0 %v63
  %v65 = vpop.xlane.xlu0 %64
  %v66 = vsel %vm62, %v55, 0.0
  %67 = vadd.xlane.f32.xlu0 %v66
  %v68 = vpop.xlane.xlu0 %67
  %v69 = vsel %vm62, %v56, 0.0
  %70 = vadd.xlane.f32.xlu0 %v69
  %v71 = vpop.xlane.xlu0 %70
  %v72 = vsel %vm62, %v57, 0.0
  %73 = vadd.xlane.f32.xlu0 %v72
  %v74 = vpop.xlane.xlu0 %73
  %v75 = vsel %vm62, %v58, 0.0
  %76 = vadd.xlane.f32.xlu0 %v75
  %v77 = vpop.xlane.xlu0 %76
  %v78 = vsel %vm62, %v59, 0.0
  %79 = vadd.xlane.f32.xlu0 %v78
  %v80 = vpop.xlane.xlu0 %79
  %v81 = vrcp.pop 32.0
  %v82 = vmul.f32 %v65, %v81
  %v83 = vmul.f32 %v68, %v81
  %v84 = vmul.f32 %v71, %v81
  %v85 = vmul.f32 %v74, %v81
  %v86 = vmul.f32 %v77, %v81
  %v87 = vmul.f32 %v80, %v81
  %v88 = vsub.f32 %v54, %v82
  %v89 = vsub.f32 %v55, %v83
  %v90 = vsub.f32 %v56, %v84
  %v91 = vsub.f32 %v57, %v85
  %v92 = vsub.f32 %v58, %v86
  %v93 = vsub.f32 %v59, %v87
  %v94 = vmul.f32 %v88, %v88
  %v95 = vmul.f32 %v89, %v89
  %v96 = vmul.f32 %v90, %v90
  %v97 = vmul.f32 %v91, %v91
  %v98 = vmul.f32 %v92, %v92
  %v99 = vmul.f32 %v93, %v93
  %v100 = vsel %vm62, %v94, 0.0
  %101 = vadd.xlane.f32.xlu0 %v100
  %v102 = vpop.xlane.xlu0 %101
  %v103 = vsel %vm62, %v95, 0.0
  %104 = vadd.xlane.f32.xlu0 %v103
  %v105 = vpop.xlane.xlu0 %104
  %v106 = vsel %vm62, %v96, 0.0
  %107 = vadd.xlane.f32.xlu0 %v106
  %v108 = vpop.xlane.xlu0 %107
  %v109 = vsel %vm62, %v97, 0.0
  %110 = vadd.xlane.f32.xlu0 %v109
  %v111 = vpop.xlane.xlu0 %110
  %v112 = vsel %vm62, %v98, 0.0
  %113 = vadd.xlane.f32.xlu0 %v112
  %v114 = vpop.xlane.xlu0 %113
  %v115 = vsel %vm62, %v99, 0.0
  %116 = vadd.xlane.f32.xlu0 %v115
  %v117 = vpop.xlane.xlu0 %116
  %v118 = vmul.f32 %v102, %v81
  %v119 = vmul.f32 %v105, %v81
  %v120 = vmul.f32 %v108, %v81
  %v121 = vmul.f32 %v111, %v81
  %v122 = vmul.f32 %v114, %v81
  %v123 = vmul.f32 %v117, %v81
  %v124 = vadd.f32 %v118, 1e-05
  %v125 = vadd.f32 %v119, 1e-05
  %v126 = vadd.f32 %v120, 1e-05
  %v127 = vadd.f32 %v121, 1e-05
  %v128 = vadd.f32 %v122, 1e-05
  %v129 = vadd.f32 %v123, 1e-05
  %v130 = vrsqrt.pop %v124
  %v131 = vrsqrt.pop %v125
  %v132 = vrsqrt.pop %v126
  %v133 = vrsqrt.pop %v127
  %v134 = vrsqrt.pop %v128
  %v135 = vrsqrt.pop %v129
  %v136 = vmul.f32 %v88, %v130
  %v137 = vmul.f32 %v89, %v131
  %v138 = vmul.f32 %v90, %v132
  %v139 = vmul.f32 %v91, %v133
  %v140 = vmul.f32 %v92, %v134
  %v141 = vmul.f32 %v93, %v135
  %v143 = vlaneseq
  %v144 = vshrl.u32 %v143, 7
  %v145 = vsub.s32 0, %v144
  %v146 = vrot.slane %v60, %v145
  %v148 = vmul.f32 %v136, %v146
  %v149 = vmul.f32 %v137, %v146
  %v150 = vmul.f32 %v138, %v146
  %v151 = vmul.f32 %v139, %v146
  %v152 = vmul.f32 %v140, %v146
  %v153 = vmul.f32 %v141, %v146
  %v155 = vlaneseq
  %v156 = vshrl.u32 %v155, 7
  %v157 = vsub.s32 0, %v156
  %v158 = vrot.slane %v61, %v157
  %v160 = vadd.f32 %v148, %v158
  %v161 = vadd.f32 %v149, %v158
  %v162 = vadd.f32 %v150, %v158
  %v163 = vadd.f32 %v151, %v158
  %v164 = vadd.f32 %v152, %v158
  %v165 = vadd.f32 %v153, %v158
  %v166 = vld [vmem:[%s1] sm:$0x1]
  %v167 = vld [vmem:[%s1 + $0x1] sm:$0x1]
  %v168 = vlaneseq
  %v169 = vshrl.u32 %v168, 7
  %v170 = vadd.s32 %v169, 8
  %v171 = vadd.s32 %v169, 16
  %v172 = vlaneseq
  %v173 = vand.u32 %v172, 127
  %vm174 = vcmp.le.s32.totalorder %v173, %v169
  %vm175 = vcmp.le.s32.totalorder %v173, %v170
  %vm176 = vcmp.le.s32.totalorder %v173, %v171
  %v177 = vld [vmem:[%s4] sm:$0x1]
  %v178 = vld [vmem:[%s5] sm:$0x1]
  %v179 = vsel %vm62, %v160, 0.0
  %180 = vadd.xlane.f32.xlu0 %v179
  %v181 = vpop.xlane.xlu0 %180
  %v182 = vsel %vm62, %v161, 0.0
  %183 = vadd.xlane.f32.xlu0 %v182
  %v184 = vpop.xlane.xlu0 %183
  %v185 = vsel %vm62, %v162, 0.0
  %186 = vadd.xlane.f32.xlu0 %v185
  %v187 = vpop.xlane.xlu0 %186
  %v188 = vsel %vm62, %v163, 0.0
  %189 = vadd.xlane.f32.xlu0 %v188
  %v190 = vpop.xlane.xlu0 %189
  %v191 = vsel %vm62, %v164, 0.0
  %192 = vadd.xlane.f32.xlu0 %v191
  %v193 = vpop.xlane.xlu0 %192
  %v194 = vsel %vm62, %v165, 0.0
  %195 = vadd.xlane.f32.xlu0 %v194
  %v196 = vpop.xlane.xlu0 %195
  %v197 = vmul.f32 %v181, %v81
  %v198 = vmul.f32 %v184, %v81
  %v199 = vmul.f32 %v187, %v81
  %v200 = vmul.f32 %v190, %v81
  %v201 = vmul.f32 %v193, %v81
  %v202 = vmul.f32 %v196, %v81
  %v203 = vsub.f32 %v160, %v197
  %v204 = vsub.f32 %v161, %v198
  %v205 = vsub.f32 %v162, %v199
  %v206 = vsub.f32 %v163, %v200
  %v207 = vsub.f32 %v164, %v201
  %v208 = vsub.f32 %v165, %v202
  %v209 = vmul.f32 %v203, %v203
  %v210 = vmul.f32 %v204, %v204
  %v211 = vmul.f32 %v205, %v205
  %v212 = vmul.f32 %v206, %v206
  %v213 = vmul.f32 %v207, %v207
  %v214 = vmul.f32 %v208, %v208
  %v215 = vsel %vm62, %v209, 0.0
  %216 = vadd.xlane.f32.xlu0 %v215
  %v217 = vpop.xlane.xlu0 %216
  %v218 = vsel %vm62, %v210, 0.0
  %219 = vadd.xlane.f32.xlu0 %v218
  %v220 = vpop.xlane.xlu0 %219
  %v221 = vsel %vm62, %v211, 0.0
  %222 = vadd.xlane.f32.xlu0 %v221
  %v223 = vpop.xlane.xlu0 %222
  %v224 = vsel %vm62, %v212, 0.0
  %225 = vadd.xlane.f32.xlu0 %v224
  %v226 = vpop.xlane.xlu0 %225
  %v227 = vsel %vm62, %v213, 0.0
  %228 = vadd.xlane.f32.xlu0 %v227
  %v229 = vpop.xlane.xlu0 %228
  %v230 = vsel %vm62, %v214, 0.0
  %231 = vadd.xlane.f32.xlu0 %v230
  %v232 = vpop.xlane.xlu0 %231
  %v233 = vmul.f32 %v217, %v81
  %v234 = vmul.f32 %v220, %v81
  %v235 = vmul.f32 %v223, %v81
  %v236 = vmul.f32 %v226, %v81
  %v237 = vmul.f32 %v229, %v81
  %v238 = vmul.f32 %v232, %v81
  %v239 = vadd.f32 %v233, 1e-05
  %v240 = vadd.f32 %v234, 1e-05
  %v241 = vadd.f32 %v235, 1e-05
  %v242 = vadd.f32 %v236, 1e-05
  %v243 = vadd.f32 %v237, 1e-05
  %v244 = vadd.f32 %v238, 1e-05
  %v245 = vrsqrt.pop %v239
  %v246 = vrsqrt.pop %v240
  %v247 = vrsqrt.pop %v241
  %v248 = vrsqrt.pop %v242
  %v249 = vrsqrt.pop %v243
  %v250 = vrsqrt.pop %v244
  %v251 = vmul.f32 %v203, %v245
  %v252 = vmul.f32 %v204, %v246
  %v253 = vmul.f32 %v205, %v247
  %v254 = vmul.f32 %v206, %v248
  %v255 = vmul.f32 %v207, %v249
  %v256 = vmul.f32 %v208, %v250
  %v258 = vlaneseq
  %v259 = vshrl.u32 %v258, 7
  %v260 = vsub.s32 0, %v259
  %v261 = vrot.slane %v177, %v260
  %v263 = vmul.f32 %v251, %v261
  %v264 = vmul.f32 %v252, %v261
  %v265 = vmul.f32 %v253, %v261
  %v266 = vmul.f32 %v254, %v261
  %v267 = vmul.f32 %v255, %v261
  %v268 = vmul.f32 %v256, %v261
  %v270 = vlaneseq
  %v271 = vshrl.u32 %v270, 7
  %v272 = vsub.s32 0, %v271
  %v273 = vrot.slane %v178, %v272
  %v275 = vadd.f32 %v263, %v273
  %v276 = vadd.f32 %v264, %v273
  %v277 = vadd.f32 %v265, %v273
  %v278 = vadd.f32 %v266, %v273
  %v279 = vadd.f32 %v267, %v273
  %v280 = vadd.f32 %v268, %v273
  %v281 = vpack.c.bf16 %v276, %v275
  %v282 = vpack.c.bf16 %v278, %v277
  %v283 = vpack.c.bf16 %v280, %v279
  %v284 = vld [vmem:[%s6] sm:$0xf]
  %v285 = vld [vmem:[%s6 + $0x4] sm:$0xf]
  %v286 = vld [vmem:[%s6 + $0x8] sm:$0xf]
  %v287 = vld [vmem:[%s6 + $0xc] sm:$0xf]
  %v288 = vld [vmem:[%s7] sm:$0x1]
  %v290 = vlaneseq
  %v291 = vshrl.u32 %v290, 7
  %v292 = vsub.s32 0, %v291
  %v293 = vrot.slane %v288, %v292
  %v299 = vunpack.c.l.b16 %v284
  %v300 = vunpack.c.l.b16 %v285
  %v301 = vunpack.c.l.b16 %v286
  %v302 = vunpack.c.l.b16 %v287
  %v303 = vpack.c.b16 %v300, %v299
  %v304 = vpack.c.b16 %v302, %v301
  %v308 = vsel %vm62, %v281, 0
  %v311 = vsel %vm62, %v282, 0
  %v314 = vsel %vm62, %v283, 0
  %316 = vmatprep.subr.bf16.mxu0 0
  %317 = vmatpush1.bf16.msra.mxu0 %v303
  %318 = vmatprep.subr.bf16.mxu0 0
  %319 = vmatpush1.bf16.msra.mxu0 %v304
  %320 = vmatprep.subr.bf16.mxu0 0
  %321 = vmatpush1.bf16.msra.mxu0 0
  %322 = vmatprep.subr.bf16.mxu0 0
  %323 = vmatpush1.bf16.msra.mxu0 0
  %324 = vmatprep.subr.bf16.mxu0 0
  %325 = vmatpush1.bf16.msra.mxu0 0
  %326 = vmatprep.subr.bf16.mxu0 0
  %327 = vmatpush1.bf16.msra.mxu0 0
  %328 = vmatprep.subr.bf16.mxu0 0
  %329 = vmatpush1.bf16.msra.mxu0 0
  %330 = vmatprep.subr.bf16.mxu0 0
  %331 = vmatpush1.bf16.msra.mxu0 0
  %332 = vmatprep.subr.bf16.mxu0 0
  %333 = vmatpush1.bf16.msra.mxu0 0
  %334 = vmatprep.subr.bf16.mxu0 0
  %335 = vmatpush1.bf16.msra.mxu0 0
  %336 = vmatprep.subr.bf16.mxu0 0
  %337 = vmatpush1.bf16.msra.mxu0 0
  %338 = vmatprep.subr.bf16.mxu0 0
  %339 = vmatpush1.bf16.msra.mxu0 0
  %340 = vmatprep.subr.bf16.mxu0 0
  %341 = vmatpush1.bf16.msra.mxu0 0
  %342 = vmatprep.subr.bf16.mxu0 0
  %343 = vmatpush1.bf16.msra.mxu0 0
  %344 = vmatprep.subr.bf16.mxu0 0
  %345 = vmatpush1.bf16.msra.mxu0 0
  %346 = vmatprep.subr.bf16.mxu0 0
  %347 = vmatpush1.bf16.msra.mxu0 0
  %348 = vmatprep.mubr.bf16.mxu0 0
  %349 = vmatmul.mubr.bf16.gmra.mrb[0].mxu0 %v308
  %v350 = vpop.f32.mrb[0].mxu0
  %v351 = vadd.f32 %v293, %v350
  %v352 = vpop.f32.mrb[0].mxu0
  %v353 = vpop.f32.mrb[0].mxu0
  %v354 = vadd.f32 %v293, %v353
  %v355 = vpop.f32.mrb[0].mxu0
  %356 = vmatprep.mubr.bf16.mxu0 0
  %357 = vmatmul.mubr.bf16.gmra.mrb[0].mxu0 %v311
  %v358 = vpop.f32.mrb[0].mxu0
  %v359 = vadd.f32 %v293, %v358
  %v360 = vpop.f32.mrb[0].mxu0
  %v361 = vpop.f32.mrb[0].mxu0
  %v362 = vadd.f32 %v293, %v361
  %v363 = vpop.f32.mrb[0].mxu0
  %364 = vmatprep.mubr.bf16.mxu0 0
  %365 = vmatmul.mubr.bf16.gmra.mrb[0].mxu0 %v314
  %v366 = vpop.f32.mrb[0].mxu0
  %v367 = vadd.f32 %v293, %v366
  %v368 = vpop.f32.mrb[0].mxu0
  %v369 = vpop.f32.mrb[0].mxu0
  %v370 = vadd.f32 %v293, %v369
  %v371 = vpop.f32.mrb[0].mxu0
  %372 = vdwg.mxu0
  %v373 = vpack.c.bf16 %v354, %v351
  %v374 = vpack.c.bf16 %v359, %v359
  %377 = vrot.lane.b32.xlu0 %v373, 96
  %v378 = vpop.permute.xlu0 %377
  %379 = vrot.lane.b32.xlu0 %v374, 96
  %v380 = vpop.permute.xlu0 %379
  %vm381 = vcmask 130048
  %v383 = vsel %vm381, %v373, 0
  %v386 = vsel %vm381, %v374, 0
  %v389 = vsel %vm381, %v378, 0
  %v392 = vsel %vm381, %v380, 0
  %394 = vmatprep.subr.bf16.mxu0 0
  %395 = vmatpush1.bf16.xpose.msra.mxu0 %v389
  %396 = vmatprep.subr.bf16.mxu0 0
  %397 = vmatpush1.bf16.xpose.msra.mxu0 %v392
  %398 = vmatprep.subr.bf16.mxu0 0
  %399 = vmatpush1.bf16.xpose.msra.mxu0 0
  %400 = vmatprep.subr.bf16.mxu0 0
  %401 = vmatpush1.bf16.xpose.msra.mxu0 0
  %402 = vmatprep.subr.bf16.mxu0 0
  %403 = vmatpush1.bf16.xpose.msra.mxu0 0
  %404 = vmatprep.subr.bf16.mxu0 0
  %405 = vmatpush1.bf16.xpose.msra.mxu0 0
  %406 = vmatprep.subr.bf16.mxu0 0
  %407 = vmatpush1.bf16.xpose.msra.mxu0 0
  %408 = vmatprep.subr.bf16.mxu0 0
  %409 = vmatpush1.bf16.xpose.msra.mxu0 0
  %410 = vmatprep.subr.bf16.mxu0 0
  %411 = vmatpush1.bf16.xpose.msra.mxu0 0
  %412 = vmatprep.subr.bf16.mxu0 0
  %413 = vmatpush1.bf16.xpose.msra.mxu0 0
  %414 = vmatprep.subr.bf16.mxu0 0
  %415 = vmatpush1.bf16.xpose.msra.mxu0 0
  %416 = vmatprep.subr.bf16.mxu0 0
  %417 = vmatpush1.bf16.xpose.msra.mxu0 0
  %418 = vmatprep.subr.bf16.mxu0 0
  %419 = vmatpush1.bf16.xpose.msra.mxu0 0
  %420 = vmatprep.subr.bf16.mxu0 0
  %421 = vmatpush1.bf16.xpose.msra.mxu0 0
  %422 = vmatprep.subr.bf16.mxu0 0
  %423 = vmatpush1.bf16.xpose.msra.mxu0 0
  %424 = vmatprep.subr.bf16.mxu0 0
  %425 = vmatpush1.bf16.xpose.msra.mxu0 0
  %426 = vmatprep.mubr.bf16.mxu0 0
  %427 = vmatmul.mubr.bf16.gmra.mrb[0].mxu0 %v383
  %v428 = vpop.f32.mrb[0].mxu0
  %v429 = vadd.f32 0.0, %v428
  %v430 = vpop.f32.mrb[0].mxu0
  %v431 = vpop.f32.mrb[0].mxu0
  %v432 = vadd.f32 0.0, %v431
  %v433 = vpop.f32.mrb[0].mxu0
  %434 = vmatprep.mubr.bf16.mxu0 0
  %435 = vmatmul.mubr.bf16.gmra.mrb[0].mxu0 %v386
  %v436 = vpop.f32.mrb[0].mxu0
  %v437 = vadd.f32 0.0, %v436
  %v438 = vpop.f32.mrb[0].mxu0
  %v439 = vpop.f32.mrb[0].mxu0
  %v440 = vpop.f32.mrb[0].mxu0
  %441 = vdwg.mxu0
  %v442 = vmul.f32 %v429, 0.25
  %v443 = vmul.f32 %v432, 0.25
  %v444 = vmul.f32 %v437, 0.25
  %v445 = vsel %vm174, %v442, -10000.0
  %v446 = vsel %vm175, %v443, -10000.0
  %v447 = vsel %vm176, %v444, -10000.0
  %v449 = vlaneseq
  %v450 = vshrl.u32 %v449, 7
  %v451 = vsub.s32 0, %v450
  %v452 = vrot.slane %v166, %v451
  %v454 = vadd.f32 %v445, %v452
  %v455 = vadd.f32 %v446, %v452
  %v456 = vadd.f32 %v447, %v452
  %vm457 = vcmask 195584
  %v458 = vsel %vm457, %v454, -inf
  %459 = vmax.xlane.f32.xlu0 %v458
  %v460 = vpop.xlane.xlu0 %459
  %v461 = vsel %vm457, %v455, -inf
  %462 = vmax.xlane.f32.xlu0 %v461
  %v463 = vpop.xlane.xlu0 %462
  %v464 = vsel %vm457, %v456, -inf
  %465 = vmax.xlane.f32.xlu0 %v464
  %v466 = vpop.xlane.xlu0 %465
  %v467 = vsub.f32 %v454, %v460
  %v468 = vsub.f32 %v455, %v463
  %v469 = vsub.f32 %v456, %v466
  %v470 = vmul.f32 %v467, 1.442695
  %v471 = vpow.pop %v470
  %v472 = vmul.f32 %v468, 1.442695
  %v473 = vpow.pop %v472
  %v474 = vmul.f32 %v469, 1.442695
  %v475 = vpow.pop %v474
  %v476 = vsel %vm457, %v471, 0.0
  %477 = vadd.xlane.f32.xlu0 %v476
  %v478 = vpop.xlane.xlu0 %477
  %v479 = vsel %vm457, %v473, 0.0
  %480 = vadd.xlane.f32.xlu0 %v479
  %v481 = vpop.xlane.xlu0 %480
  %v482 = vsel %vm457, %v475, 0.0
  %483 = vadd.xlane.f32.xlu0 %v482
  %v484 = vpop.xlane.xlu0 %483
  %v485 = vrcp.pop %v478
  %v486 = vrcp.pop %v481
  %v487 = vrcp.pop %v484
  %v488 = vmul.f32 %v471, %v485
  %v489 = vmul.f32 %v473, %v486
  %v490 = vmul.f32 %v475, %v487
  %v491 = vpack.c.bf16 %v489, %v488
  %v492 = vpack.c.bf16 %v490, %v490
  %493 = vrot.lane.b32.xlu0 %v373, 64
  %v494 = vpop.permute.xlu0 %493
  %495 = vrot.lane.b32.xlu0 %v374, 64
  %v496 = vpop.permute.xlu0 %495
  %v499 = vsel %vm457, %v491, 0
  %v502 = vsel %vm457, %v492, 0
  %vm504 = vcmask 1043456
  %v506 = vsel %vm504, %v496, 0
  %508 = vmatprep.subr.bf16.mxu0 0
  %509 = vmatpush1.bf16.msra.mxu0 %v494
  %510 = vmatprep.subr.bf16.mxu0 0
  %511 = vmatpush1.bf16.msra.mxu0 %v506
  %512 = vmatprep.subr.bf16.mxu0 0
  %513 = vmatpush1.bf16.msra.mxu0 0
  %514 = vmatprep.subr.bf16.mxu0 0
  %515 = vmatpush1.bf16.msra.mxu0 0
  %516 = vmatprep.subr.bf16.mxu0 0
  %517 = vmatpush1.bf16.msra.mxu0 0
  %518 = vmatprep.subr.bf16.mxu0 0
  %519 = vmatpush1.bf16.msra.mxu0 0
  %520 = vmatprep.subr.bf16.mxu0 0
  %521 = vmatpush1.bf16.msra.mxu0 0
  %522 = vmatprep.subr.bf16.mxu0 0
  %523 = vmatpush1.bf16.msra.mxu0 0
  %524 = vmatprep.subr.bf16.mxu0 0
  %525 = vmatpush1.bf16.msra.mxu0 0
  %526 = vmatprep.subr.bf16.mxu0 0
  %527 = vmatpush1.bf16.msra.mxu0 0
  %528 = vmatprep.subr.bf16.mxu0 0
  %529 = vmatpush1.bf16.msra.mxu0 0
  %530 = vmatprep.subr.bf16.mxu0 0
  %531 = vmatpush1.bf16.msra.mxu0 0
  %532 = vmatprep.subr.bf16.mxu0 0
  %533 = vmatpush1.bf16.msra.mxu0 0
  %534 = vmatprep.subr.bf16.mxu0 0
  %535 = vmatpush1.bf16.msra.mxu0 0
  %536 = vmatprep.subr.bf16.mxu0 0
  %537 = vmatpush1.bf16.msra.mxu0 0
  %538 = vmatprep.subr.bf16.mxu0 0
  %539 = vmatpush1.bf16.msra.mxu0 0
  %540 = vmatprep.mubr.bf16.mxu0 0
  %541 = vmatmul.mubr.bf16.gmra.mrb[0].mxu0 %v499
  %v542 = vpop.f32.mrb[0].mxu0
  %v543 = vadd.f32 0.0, %v542
  %v544 = vpop.f32.mrb[0].mxu0
  %v545 = vpop.f32.mrb[0].mxu0
  %v546 = vadd.f32 0.0, %v545
  %v547 = vpop.f32.mrb[0].mxu0
  %548 = vmatprep.mubr.bf16.mxu0 0
  %549 = vmatmul.mubr.bf16.gmra.mrb[0].mxu0 %v502
  %v550 = vpop.f32.mrb[0].mxu0
  %v551 = vadd.f32 0.0, %v550
  %v552 = vpop.f32.mrb[0].mxu0
  %v553 = vpop.f32.mrb[0].mxu0
  %v554 = vpop.f32.mrb[0].mxu0
  %555 = vdwg.mxu0
  %556 = vrot.lane.b32.xlu0 %v373, 112
  %v557 = vpop.permute.xlu0 %556
  %558 = vrot.lane.b32.xlu0 %v374, 112
  %v559 = vpop.permute.xlu0 %558
  %560 = vrot.lane.b32.xlu0 %v373, 80
  %v561 = vpop.permute.xlu0 %560
  %562 = vrot.lane.b32.xlu0 %v374, 80
  %v563 = vpop.permute.xlu0 %562
  %v565 = vsel %vm381, %v557, 0
  %v568 = vsel %vm381, %v559, 0
  %v571 = vsel %vm381, %v561, 0
  %v574 = vsel %vm381, %v563, 0
  %576 = vmatprep.subr.bf16.mxu0 0
  %577 = vmatpush1.bf16.xpose.msra.mxu0 %v571
  %578 = vmatprep.subr.bf16.mxu0 0
  %579 = vmatpush1.bf16.xpose.msra.mxu0 %v574
  %580 = vmatprep.subr.bf16.mxu0 0
  %581 = vmatpush1.bf16.xpose.msra.mxu0 0
  %582 = vmatprep.subr.bf16.mxu0 0
  %583 = vmatpush1.bf16.xpose.msra.mxu0 0
  %584 = vmatprep.subr.bf16.mxu0 0
  %585 = vmatpush1.bf16.xpose.msra.mxu0 0
  %586 = vmatprep.subr.bf16.mxu0 0
  %587 = vmatpush1.bf16.xpose.msra.mxu0 0
  %588 = vmatprep.subr.bf16.mxu0 0
  %589 = vmatpush1.bf16.xpose.msra.mxu0 0
  %590 = vmatprep.subr.bf16.mxu0 0
  %591 = vmatpush1.bf16.xpose.msra.mxu0 0
  %592 = vmatprep.subr.bf16.mxu0 0
  %593 = vmatpush1.bf16.xpose.msra.mxu0 0
  %594 = vmatprep.subr.bf16.mxu0 0
  %595 = vmatpush1.bf16.xpose.msra.mxu0 0
  %596 = vmatprep.subr.bf16.mxu0 0
  %597 = vmatpush1.bf16.xpose.msra.mxu0 0
  %598 = vmatprep.subr.bf16.mxu0 0
  %599 = vmatpush1.bf16.xpose.msra.mxu0 0
  %600 = vmatprep.subr.bf16.mxu0 0
  %601 = vmatpush1.bf16.xpose.msra.mxu0 0
  %602 = vmatprep.subr.bf16.mxu0 0
  %603 = vmatpush1.bf16.xpose.msra.mxu0 0
  %604 = vmatprep.subr.bf16.mxu0 0
  %605 = vmatpush1.bf16.xpose.msra.mxu0 0
  %606 = vmatprep.subr.bf16.mxu0 0
  %607 = vmatpush1.bf16.xpose.msra.mxu0 0
  %608 = vmatprep.mubr.bf16.mxu0 0
  %609 = vmatmul.mubr.bf16.gmra.mrb[0].mxu0 %v565
  %v610 = vpop.f32.mrb[0].mxu0
  %v611 = vadd.f32 0.0, %v610
  %v612 = vpop.f32.mrb[0].mxu0
  %v613 = vpop.f32.mrb[0].mxu0
  %v614 = vadd.f32 0.0, %v613
  %v615 = vpop.f32.mrb[0].mxu0
  %616 = vmatprep.mubr.bf16.mxu0 0
  %617 = vmatmul.mubr.bf16.gmra.mrb[0].mxu0 %v568
  %v618 = vpop.f32.mrb[0].mxu0
  %v619 = vadd.f32 0.0, %v618
  %v620 = vpop.f32.mrb[0].mxu0
  %v621 = vpop.f32.mrb[0].mxu0
  %v622 = vpop.f32.mrb[0].mxu0
  %623 = vdwg.mxu0
  %v624 = vmul.f32 %v611, 0.25
  %v625 = vmul.f32 %v614, 0.25
  %v626 = vmul.f32 %v619, 0.25
  %v627 = vsel %vm174, %v624, -10000.0
  %v628 = vsel %vm175, %v625, -10000.0
  %v629 = vsel %vm176, %v626, -10000.0
  %v630 = vadd.f32 %v627, %v452
  %v631 = vadd.f32 %v628, %v452
  %v632 = vadd.f32 %v629, %v452
  %v633 = vsel %vm457, %v630, -inf
  %634 = vmax.xlane.f32.xlu0 %v633
  %v635 = vpop.xlane.xlu0 %634
  %v636 = vsel %vm457, %v631, -inf
  %637 = vmax.xlane.f32.xlu0 %v636
  %v638 = vpop.xlane.xlu0 %637
  %v639 = vsel %vm457, %v632, -inf
  %640 = vmax.xlane.f32.xlu0 %v639
  %v641 = vpop.xlane.xlu0 %640
  %v642 = vsub.f32 %v630, %v635
  %v643 = vsub.f32 %v631, %v638
  %v644 = vsub.f32 %v632, %v641
  %v645 = vmul.f32 %v642, 1.442695
  %v646 = vpow.pop %v645
  %v647 = vmul.f32 %v643, 1.442695
  %v648 = vpow.pop %v647
  %v649 = vmul.f32 %v644, 1.442695
  %v650 = vpow.pop %v649
  %v651 = vsel %vm457, %v646, 0.0
  %652 = vadd.xlane.f32.xlu0 %v651
  %v653 = vpop.xlane.xlu0 %652
  %v654 = vsel %vm457, %v648, 0.0
  %655 = vadd.xlane.f32.xlu0 %v654
  %v656 = vpop.xlane.xlu0 %655
  %v657 = vsel %vm457, %v650, 0.0
  %658 = vadd.xlane.f32.xlu0 %v657
  %v659 = vpop.xlane.xlu0 %658
  %v660 = vrcp.pop %v653
  %v661 = vrcp.pop %v656
  %v662 = vrcp.pop %v659
  %v663 = vmul.f32 %v646, %v660
  %v664 = vmul.f32 %v648, %v661
  %v665 = vmul.f32 %v650, %v662
  %v666 = vpack.c.bf16 %v664, %v663
  %v667 = vpack.c.bf16 %v665, %v665
  %668 = vrot.lane.b32.xlu0 %v373, 48
  %v669 = vpop.permute.xlu0 %668
  %670 = vrot.lane.b32.xlu0 %v374, 48
  %v671 = vpop.permute.xlu0 %670
  %v674 = vsel %vm457, %v666, 0
  %v677 = vsel %vm457, %v667, 0
  %v680 = vsel %vm504, %v671, 0
  %682 = vmatprep.subr.bf16.mxu0 0
  %683 = vmatpush1.bf16.msra.mxu0 %v669
  %684 = vmatprep.subr.bf16.mxu0 0
  %685 = vmatpush1.bf16.msra.mxu0 %v680
  %686 = vmatprep.subr.bf16.mxu0 0
  %687 = vmatpush1.bf16.msra.mxu0 0
  %688 = vmatprep.subr.bf16.mxu0 0
  %689 = vmatpush1.bf16.msra.mxu0 0
  %690 = vmatprep.subr.bf16.mxu0 0
  %691 = vmatpush1.bf16.msra.mxu0 0
  %692 = vmatprep.subr.bf16.mxu0 0
  %693 = vmatpush1.bf16.msra.mxu0 0
  %694 = vmatprep.subr.bf16.mxu0 0
  %695 = vmatpush1.bf16.msra.mxu0 0
  %696 = vmatprep.subr.bf16.mxu0 0
  %697 = vmatpush1.bf16.msra.mxu0 0
  %698 = vmatprep.subr.bf16.mxu0 0
  %699 = vmatpush1.bf16.msra.mxu0 0
  %700 = vmatprep.subr.bf16.mxu0 0
  %701 = vmatpush1.bf16.msra.mxu0 0
  %702 = vmatprep.subr.bf16.mxu0 0
  %703 = vmatpush1.bf16.msra.mxu0 0
  %704 = vmatprep.subr.bf16.mxu0 0
  %705 = vmatpush1.bf16.msra.mxu0 0
  %706 = vmatprep.subr.bf16.mxu0 0
  %707 = vmatpush1.bf16.msra.mxu0 0
  %708 = vmatprep.subr.bf16.mxu0 0
  %709 = vmatpush1.bf16.msra.mxu0 0
  %710 = vmatprep.subr.bf16.mxu0 0
  %711 = vmatpush1.bf16.msra.mxu0 0
  %712 = vmatprep.subr.bf16.mxu0 0
  %713 = vmatpush1.bf16.msra.mxu0 0
  %714 = vmatprep.mubr.bf16.mxu0 0
  %715 = vmatmul.mubr.bf16.gmra.mrb[0].mxu0 %v674
  %v716 = vpop.f32.mrb[0].mxu0
  %v717 = vadd.f32 0.0, %v716
  %v718 = vpop.f32.mrb[0].mxu0
  %v719 = vpop.f32.mrb[0].mxu0
  %v720 = vadd.f32 0.0, %v719
  %v721 = vpop.f32.mrb[0].mxu0
  %722 = vmatprep.mubr.bf16.mxu0 0
  %723 = vmatmul.mubr.bf16.gmra.mrb[0].mxu0 %v677
  %v724 = vpop.f32.mrb[0].mxu0
  %v725 = vadd.f32 0.0, %v724
  %v726 = vpop.f32.mrb[0].mxu0
  %v727 = vpop.f32.mrb[0].mxu0
  %v728 = vpop.f32.mrb[0].mxu0
  %729 = vdwg.mxu0
  %733 = vrot.lane.b32.xlu0 %v717, 16
  %v734 = vpop.permute.xlu0 %733
  %735 = vrot.lane.b32.xlu0 %v720, 16
  %v736 = vpop.permute.xlu0 %735
  %737 = vrot.lane.b32.xlu0 %v725, 16
  %v738 = vpop.permute.xlu0 %737
  %v742 = vsel %vm381, %v543, %v734
  %v743 = vsel %vm381, %v546, %v736
  %v744 = vsel %vm381, %v551, %v738
  %v745 = vpack.c.bf16 %v367, %v362
  %v746 = vpack.c.bf16 %v370, %v370
  %749 = vrot.lane.b32.xlu0 %v745, 96
  %v750 = vpop.permute.xlu0 %749
  %751 = vrot.lane.b32.xlu0 %v746, 96
  %v752 = vpop.permute.xlu0 %751
  %v754 = vsel %vm381, %v745, 0
  %v757 = vsel %vm381, %v746, 0
  %v760 = vsel %vm381, %v750, 0
  %v763 = vsel %vm381, %v752, 0
  %765 = vmatprep.subr.bf16.mxu0 0
  %766 = vmatpush1.bf16.xpose.msra.mxu0 %v760
  %767 = vmatprep.subr.bf16.mxu0 0
  %768 = vmatpush1.bf16.xpose.msra.mxu0 %v763
  %769 = vmatprep.subr.bf16.mxu0 0
  %770 = vmatpush1.bf16.xpose.msra.mxu0 0
  %771 = vmatprep.subr.bf16.mxu0 0
  %772 = vmatpush1.bf16.xpose.msra.mxu0 0
  %773 = vmatprep.subr.bf16.mxu0 0
  %774 = vmatpush1.bf16.xpose.msra.mxu0 0
  %775 = vmatprep.subr.bf16.mxu0 0
  %776 = vmatpush1.bf16.xpose.msra.mxu0 0
  %777 = vmatprep.subr.bf16.mxu0 0
  %778 = vmatpush1.bf16.xpose.msra.mxu0 0
  %779 = vmatprep.subr.bf16.mxu0 0
  %780 = vmatpush1.bf16.xpose.msra.mxu0 0
  %781 = vmatprep.subr.bf16.mxu0 0
  %782 = vmatpush1.bf16.xpose.msra.mxu0 0
  %783 = vmatprep.subr.bf16.mxu0 0
  %784 = vmatpush1.bf16.xpose.msra.mxu0 0
  %785 = vmatprep.subr.bf16.mxu0 0
  %786 = vmatpush1.bf16.xpose.msra.mxu0 0
  %787 = vmatprep.subr.bf16.mxu0 0
  %788 = vmatpush1.bf16.xpose.msra.mxu0 0
  %789 = vmatprep.subr.bf16.mxu0 0
  %790 = vmatpush1.bf16.xpose.msra.mxu0 0
  %791 = vmatprep.subr.bf16.mxu0 0
  %792 = vmatpush1.bf16.xpose.msra.mxu0 0
  %793 = vmatprep.subr.bf16.mxu0 0
  %794 = vmatpush1.bf16.xpose.msra.mxu0 0
  %795 = vmatprep.subr.bf16.mxu0 0
  %796 = vmatpush1.bf16.xpose.msra.mxu0 0
  %797 = vmatprep.mubr.bf16.mxu0 0
  %798 = vmatmul.mubr.bf16.gmra.mrb[0].mxu0 %v754
  %v799 = vpop.f32.mrb[0].mxu0
  %v800 = vadd.f32 0.0, %v799
  %v801 = vpop.f32.mrb[0].mxu0
  %v802 = vpop.f32.mrb[0].mxu0
  %v803 = vadd.f32 0.0, %v802
  %v804 = vpop.f32.mrb[0].mxu0
  %805 = vmatprep.mubr.bf16.mxu0 0
  %806 = vmatmul.mubr.bf16.gmra.mrb[0].mxu0 %v757
  %v807 = vpop.f32.mrb[0].mxu0
  %v808 = vadd.f32 0.0, %v807
  %v809 = vpop.f32.mrb[0].mxu0
  %v810 = vpop.f32.mrb[0].mxu0
  %v811 = vpop.f32.mrb[0].mxu0
  %812 = vdwg.mxu0
  %v813 = vmul.f32 %v800, 0.25
  %v814 = vmul.f32 %v803, 0.25
  %v815 = vmul.f32 %v808, 0.25
  %v816 = vsel %vm174, %v813, -10000.0
  %v817 = vsel %vm175, %v814, -10000.0
  %v818 = vsel %vm176, %v815, -10000.0
  %v820 = vlaneseq
  %v821 = vshrl.u32 %v820, 7
  %v822 = vsub.s32 0, %v821
  %v823 = vrot.slane %v167, %v822
  %v825 = vadd.f32 %v816, %v823
  %v826 = vadd.f32 %v817, %v823
  %v827 = vadd.f32 %v818, %v823
  %v828 = vsel %vm457, %v825, -inf
  %829 = vmax.xlane.f32.xlu0 %v828
  %v830 = vpop.xlane.xlu0 %829
  %v831 = vsel %vm457, %v826, -inf
  %832 = vmax.xlane.f32.xlu0 %v831
  %v833 = vpop.xlane.xlu0 %832
  %v834 = vsel %vm457, %v827, -inf
  %835 = vmax.xlane.f32.xlu0 %v834
  %v836 = vpop.xlane.xlu0 %835
  %v837 = vsub.f32 %v825, %v830
  %v838 = vsub.f32 %v826, %v833
  %v839 = vsub.f32 %v827, %v836
  %v840 = vmul.f32 %v837, 1.442695
  %v841 = vpow.pop %v840
  %v842 = vmul.f32 %v838, 1.442695
  %v843 = vpow.pop %v842
  %v844 = vmul.f32 %v839, 1.442695
  %v845 = vpow.pop %v844
  %v846 = vsel %vm457, %v841, 0.0
  %847 = vadd.xlane.f32.xlu0 %v846
  %v848 = vpop.xlane.xlu0 %847
  %v849 = vsel %vm457, %v843, 0.0
  %850 = vadd.xlane.f32.xlu0 %v849
  %v851 = vpop.xlane.xlu0 %850
  %v852 = vsel %vm457, %v845, 0.0
  %853 = vadd.xlane.f32.xlu0 %v852
  %v854 = vpop.xlane.xlu0 %853
  %v855 = vrcp.pop %v848
  %v856 = vrcp.pop %v851
  %v857 = vrcp.pop %v854
  %v858 = vmul.f32 %v841, %v855
  %v859 = vmul.f32 %v843, %v856
  %v860 = vmul.f32 %v845, %v857
  %v861 = vpack.c.bf16 %v859, %v858
  %v862 = vpack.c.bf16 %v860, %v860
  %863 = vrot.lane.b32.xlu0 %v745, 64
  %v864 = vpop.permute.xlu0 %863
  %865 = vrot.lane.b32.xlu0 %v746, 64
  %v866 = vpop.permute.xlu0 %865
  %v869 = vsel %vm457, %v861, 0
  %v872 = vsel %vm457, %v862, 0
  %v875 = vsel %vm504, %v866, 0
  %877 = vmatprep.subr.bf16.mxu0 0
  %878 = vmatpush1.bf16.msra.mxu0 %v864
  %879 = vmatprep.subr.bf16.mxu0 0
  %880 = vmatpush1.bf16.msra.mxu0 %v875
  %881 = vmatprep.subr.bf16.mxu0 0
  %882 = vmatpush1.bf16.msra.mxu0 0
  %883 = vmatprep.subr.bf16.mxu0 0
  %884 = vmatpush1.bf16.msra.mxu0 0
  %885 = vmatprep.subr.bf16.mxu0 0
  %886 = vmatpush1.bf16.msra.mxu0 0
  %887 = vmatprep.subr.bf16.mxu0 0
  %888 = vmatpush1.bf16.msra.mxu0 0
  %889 = vmatprep.subr.bf16.mxu0 0
  %890 = vmatpush1.bf16.msra.mxu0 0
  %891 = vmatprep.subr.bf16.mxu0 0
  %892 = vmatpush1.bf16.msra.mxu0 0
  %893 = vmatprep.subr.bf16.mxu0 0
  %894 = vmatpush1.bf16.msra.mxu0 0
  %895 = vmatprep.subr.bf16.mxu0 0
  %896 = vmatpush1.bf16.msra.mxu0 0
  %897 = vmatprep.subr.bf16.mxu0 0
  %898 = vmatpush1.bf16.msra.mxu0 0
  %899 = vmatprep.subr.bf16.mxu0 0
  %900 = vmatpush1.bf16.msra.mxu0 0
  %901 = vmatprep.subr.bf16.mxu0 0
  %902 = vmatpush1.bf16.msra.mxu0 0
  %903 = vmatprep.subr.bf16.mxu0 0
  %904 = vmatpush1.bf16.msra.mxu0 0
  %905 = vmatprep.subr.bf16.mxu0 0
  %906 = vmatpush1.bf16.msra.mxu0 0
  %907 = vmatprep.subr.bf16.mxu0 0
  %908 = vmatpush1.bf16.msra.mxu0 0
  %909 = vmatprep.mubr.bf16.mxu0 0
  %910 = vmatmul.mubr.bf16.gmra.mrb[0].mxu0 %v869
  %v911 = vpop.f32.mrb[0].mxu0
  %v912 = vadd.f32 0.0, %v911
  %v913 = vpop.f32.mrb[0].mxu0
  %v914 = vpop.f32.mrb[0].mxu0
  %v915 = vadd.f32 0.0, %v914
  %v916 = vpop.f32.mrb[0].mxu0
  %917 = vmatprep.mubr.bf16.mxu0 0
  %918 = vmatmul.mubr.bf16.gmra.mrb[0].mxu0 %v872
  %v919 = vpop.f32.mrb[0].mxu0
  %v920 = vadd.f32 0.0, %v919
  %v921 = vpop.f32.mrb[0].mxu0
  %v922 = vpop.f32.mrb[0].mxu0
  %v923 = vpop.f32.mrb[0].mxu0
  %924 = vdwg.mxu0
  %925 = vrot.lane.b32.xlu0 %v745, 112
  %v926 = vpop.permute.xlu0 %925
  %927 = vrot.lane.b32.xlu0 %v746, 112
  %v928 = vpop.permute.xlu0 %927
  %929 = vrot.lane.b32.xlu0 %v745, 80
  %v930 = vpop.permute.xlu0 %929
  %931 = vrot.lane.b32.xlu0 %v746, 80
  %v932 = vpop.permute.xlu0 %931
  %v934 = vsel %vm381, %v926, 0
  %v937 = vsel %vm381, %v928, 0
  %v940 = vsel %vm381, %v930, 0
  %v943 = vsel %vm381, %v932, 0
  %945 = vmatprep.subr.bf16.mxu0 0
  %946 = vmatpush1.bf16.xpose.msra.mxu0 %v940
  %947 = vmatprep.subr.bf16.mxu0 0
  %948 = vmatpush1.bf16.xpose.msra.mxu0 %v943
  %949 = vmatprep.subr.bf16.mxu0 0
  %950 = vmatpush1.bf16.xpose.msra.mxu0 0
  %951 = vmatprep.subr.bf16.mxu0 0
  %952 = vmatpush1.bf16.xpose.msra.mxu0 0
  %953 = vmatprep.subr.bf16.mxu0 0
  %954 = vmatpush1.bf16.xpose.msra.mxu0 0
  %955 = vmatprep.subr.bf16.mxu0 0
  %956 = vmatpush1.bf16.xpose.msra.mxu0 0
  %957 = vmatprep.subr.bf16.mxu0 0
  %958 = vmatpush1.bf16.xpose.msra.mxu0 0
  %959 = vmatprep.subr.bf16.mxu0 0
  %960 = vmatpush1.bf16.xpose.msra.mxu0 0
  %961 = vmatprep.subr.bf16.mxu0 0
  %962 = vmatpush1.bf16.xpose.msra.mxu0 0
  %963 = vmatprep.subr.bf16.mxu0 0
  %964 = vmatpush1.bf16.xpose.msra.mxu0 0
  %965 = vmatprep.subr.bf16.mxu0 0
  %966 = vmatpush1.bf16.xpose.msra.mxu0 0
  %967 = vmatprep.subr.bf16.mxu0 0
  %968 = vmatpush1.bf16.xpose.msra.mxu0 0
  %969 = vmatprep.subr.bf16.mxu0 0
  %970 = vmatpush1.bf16.xpose.msra.mxu0 0
  %971 = vmatprep.subr.bf16.mxu0 0
  %972 = vmatpush1.bf16.xpose.msra.mxu0 0
  %973 = vmatprep.subr.bf16.mxu0 0
  %974 = vmatpush1.bf16.xpose.msra.mxu0 0
  %975 = vmatprep.subr.bf16.mxu0 0
  %976 = vmatpush1.bf16.xpose.msra.mxu0 0
  %977 = vmatprep.mubr.bf16.mxu0 0
  %978 = vmatmul.mubr.bf16.gmra.mrb[0].mxu0 %v934
  %v979 = vpop.f32.mrb[0].mxu0
  %v980 = vadd.f32 0.0, %v979
  %v981 = vpop.f32.mrb[0].mxu0
  %v982 = vpop.f32.mrb[0].mxu0
  %v983 = vadd.f32 0.0, %v982
  %v984 = vpop.f32.mrb[0].mxu0
  %985 = vmatprep.mubr.bf16.mxu0 0
  %986 = vmatmul.mubr.bf16.gmra.mrb[0].mxu0 %v937
  %v987 = vpop.f32.mrb[0].mxu0
  %v988 = vadd.f32 0.0, %v987
  %v989 = vpop.f32.mrb[0].mxu0
  %v990 = vpop.f32.mrb[0].mxu0
  %v991 = vpop.f32.mrb[0].mxu0
  %992 = vdwg.mxu0
  %v993 = vmul.f32 %v980, 0.25
  %v994 = vmul.f32 %v983, 0.25
  %v995 = vmul.f32 %v988, 0.25
  %v996 = vsel %vm174, %v993, -10000.0
  %v997 = vsel %vm175, %v994, -10000.0
  %v998 = vsel %vm176, %v995, -10000.0
  %v999 = vadd.f32 %v996, %v823
  %v1000 = vadd.f32 %v997, %v823
  %v1001 = vadd.f32 %v998, %v823
  %v1002 = vsel %vm457, %v999, -inf
  %1003 = vmax.xlane.f32.xlu0 %v1002
  %v1004 = vpop.xlane.xlu0 %1003
  %v1005 = vsel %vm457, %v1000, -inf
  %1006 = vmax.xlane.f32.xlu0 %v1005
  %v1007 = vpop.xlane.xlu0 %1006
  %v1008 = vsel %vm457, %v1001, -inf
  %1009 = vmax.xlane.f32.xlu0 %v1008
  %v1010 = vpop.xlane.xlu0 %1009
  %v1011 = vsub.f32 %v999, %v1004
  %v1012 = vsub.f32 %v1000, %v1007
  %v1013 = vsub.f32 %v1001, %v1010
  %v1014 = vmul.f32 %v1011, 1.442695
  %v1015 = vpow.pop %v1014
  %v1016 = vmul.f32 %v1012, 1.442695
  %v1017 = vpow.pop %v1016
  %v1018 = vmul.f32 %v1013, 1.442695
  %v1019 = vpow.pop %v1018
  %v1020 = vsel %vm457, %v1015, 0.0
  %1021 = vadd.xlane.f32.xlu0 %v1020
  %v1022 = vpop.xlane.xlu0 %1021
  %v1023 = vsel %vm457, %v1017, 0.0
  %1024 = vadd.xlane.f32.xlu0 %v1023
  %v1025 = vpop.xlane.xlu0 %1024
  %v1026 = vsel %vm457, %v1019, 0.0
  %1027 = vadd.xlane.f32.xlu0 %v1026
  %v1028 = vpop.xlane.xlu0 %1027
  %v1029 = vrcp.pop %v1022
  %v1030 = vrcp.pop %v1025
  %v1031 = vrcp.pop %v1028
  %v1032 = vmul.f32 %v1015, %v1029
  %v1033 = vmul.f32 %v1017, %v1030
  %v1034 = vmul.f32 %v1019, %v1031
  %v1035 = vpack.c.bf16 %v1033, %v1032
  %v1036 = vpack.c.bf16 %v1034, %v1034
  %1037 = vrot.lane.b32.xlu0 %v745, 48
  %v1038 = vpop.permute.xlu0 %1037
  %1039 = vrot.lane.b32.xlu0 %v746, 48
  %v1040 = vpop.permute.xlu0 %1039
  %v1043 = vsel %vm457, %v1035, 0
  %v1046 = vsel %vm457, %v1036, 0
  %v1049 = vsel %vm504, %v1040, 0
  %1051 = vmatprep.subr.bf16.mxu0 0
  %1052 = vmatpush1.bf16.msra.mxu0 %v1038
  %1053 = vmatprep.subr.bf16.mxu0 0
  %1054 = vmatpush1.bf16.msra.mxu0 %v1049
  %1055 = vmatprep.subr.bf16.mxu0 0
  %1056 = vmatpush1.bf16.msra.mxu0 0
  %1057 = vmatprep.subr.bf16.mxu0 0
  %1058 = vmatpush1.bf16.msra.mxu0 0
  %1059 = vmatprep.subr.bf16.mxu0 0
  %1060 = vmatpush1.bf16.msra.mxu0 0
  %1061 = vmatprep.subr.bf16.mxu0 0
  %1062 = vmatpush1.bf16.msra.mxu0 0
  %1063 = vmatprep.subr.bf16.mxu0 0
  %1064 = vmatpush1.bf16.msra.mxu0 0
  %1065 = vmatprep.subr.bf16.mxu0 0
  %1066 = vmatpush1.bf16.msra.mxu0 0
  %1067 = vmatprep.subr.bf16.mxu0 0
  %1068 = vmatpush1.bf16.msra.mxu0 0
  %1069 = vmatprep.subr.bf16.mxu0 0
  %1070 = vmatpush1.bf16.msra.mxu0 0
  %1071 = vmatprep.subr.bf16.mxu0 0
  %1072 = vmatpush1.bf16.msra.mxu0 0
  %1073 = vmatprep.subr.bf16.mxu0 0
  %1074 = vmatpush1.bf16.msra.mxu0 0
  %1075 = vmatprep.subr.bf16.mxu0 0
  %1076 = vmatpush1.bf16.msra.mxu0 0
  %1077 = vmatprep.subr.bf16.mxu0 0
  %1078 = vmatpush1.bf16.msra.mxu0 0
  %1079 = vmatprep.subr.bf16.mxu0 0
  %1080 = vmatpush1.bf16.msra.mxu0 0
  %1081 = vmatprep.subr.bf16.mxu0 0
  %1082 = vmatpush1.bf16.msra.mxu0 0
  %1083 = vmatprep.mubr.bf16.mxu0 0
  %1084 = vmatmul.mubr.bf16.gmra.mrb[0].mxu0 %v1043
  %v1085 = vpop.f32.mrb[0].mxu0
  %v1086 = vadd.f32 0.0, %v1085
  %v1087 = vpop.f32.mrb[0].mxu0
  %v1088 = vpop.f32.mrb[0].mxu0
  %v1089 = vadd.f32 0.0, %v1088
  %v1090 = vpop.f32.mrb[0].mxu0
  %1091 = vmatprep.mubr.bf16.mxu0 0
  %1092 = vmatmul.mubr.bf16.gmra.mrb[0].mxu0 %v1046
  %v1093 = vpop.f32.mrb[0].mxu0
  %v1094 = vadd.f32 0.0, %v1093
  %v1095 = vpop.f32.mrb[0].mxu0
  %v1096 = vpop.f32.mrb[0].mxu0
  %v1097 = vpop.f32.mrb[0].mxu0
  %1098 = vdwg.mxu0
  %1102 = vrot.lane.b32.xlu0 %v1086, 16
  %v1103 = vpop.permute.xlu0 %1102
  %1104 = vrot.lane.b32.xlu0 %v1089, 16
  %v1105 = vpop.permute.xlu0 %1104
  %1106 = vrot.lane.b32.xlu0 %v1094, 16
  %v1107 = vpop.permute.xlu0 %1106
  %v1111 = vsel %vm381, %v912, %v1103
  %v1112 = vsel %vm381, %v915, %v1105
  %v1113 = vsel %vm381, %v920, %v1107
  %v1114 = vpack.c.bf16 %v743, %v742
  %v1115 = vpack.c.bf16 %v1111, %v744
  %v1116 = vpack.c.bf16 %v1113, %v1112
  %v1117 = vld [vmem:[%s8] sm:$0xf]
  %v1118 = vld [vmem:[%s8 + $0x4] sm:$0xf]
  %v1119 = vld [vmem:[%s8 + $0x8] sm:$0xf]
  %v1120 = vld [vmem:[%s8 + $0xc] sm:$0xf]
  %v1121 = vld [vmem:[%s9] sm:$0x1]
  %v1123 = vlaneseq
  %v1124 = vshrl.u32 %v1123, 7
  %v1125 = vsub.s32 0, %v1124
  %v1126 = vrot.slane %v1121, %v1125
  %v1132 = vunpack.c.l.b16 %v1117
  %v1133 = vunpack.c.l.b16 %v1118
  %v1134 = vunpack.c.l.b16 %v1119
  %v1135 = vunpack.c.l.b16 %v1120
  %v1136 = vpack.c.b16 %v1133, %v1132
  %v1137 = vpack.c.b16 %v1135, %v1134
  %v1141 = vsel %vm62, %v1114, 0
  %v1144 = vsel %vm62, %v1115, 0
  %v1147 = vsel %vm62, %v1116, 0
  %1149 = vmatprep.subr.bf16.mxu0 0
  %1150 = vmatpush1.bf16.msra.mxu0 %v1136
  %1151 = vmatprep.subr.bf16.mxu0 0
  %1152 = vmatpush1.bf16.msra.mxu0 %v1137
  %1153 = vmatprep.subr.bf16.mxu0 0
  %1154 = vmatpush1.bf16.msra.mxu0 0
  %1155 = vmatprep.subr.bf16.mxu0 0
  %1156 = vmatpush1.bf16.msra.mxu0 0
  %1157 = vmatprep.subr.bf16.mxu0 0
  %1158 = vmatpush1.bf16.msra.mxu0 0
  %1159 = vmatprep.subr.bf16.mxu0 0
  %1160 = vmatpush1.bf16.msra.mxu0 0
  %1161 = vmatprep.subr.bf16.mxu0 0
  %1162 = vmatpush1.bf16.msra.mxu0 0
  %1163 = vmatprep.subr.bf16.mxu0 0
  %1164 = vmatpush1.bf16.msra.mxu0 0
  %1165 = vmatprep.subr.bf16.mxu0 0
  %1166 = vmatpush1.bf16.msra.mxu0 0
  %1167 = vmatprep.subr.bf16.mxu0 0
  %1168 = vmatpush1.bf16.msra.mxu0 0
  %1169 = vmatprep.subr.bf16.mxu0 0
  %1170 = vmatpush1.bf16.msra.mxu0 0
  %1171 = vmatprep.subr.bf16.mxu0 0
  %1172 = vmatpush1.bf16.msra.mxu0 0
  %1173 = vmatprep.subr.bf16.mxu0 0
  %1174 = vmatpush1.bf16.msra.mxu0 0
  %1175 = vmatprep.subr.bf16.mxu0 0
  %1176 = vmatpush1.bf16.msra.mxu0 0
  %1177 = vmatprep.subr.bf16.mxu0 0
  %1178 = vmatpush1.bf16.msra.mxu0 0
  %1179 = vmatprep.subr.bf16.mxu0 0
  %1180 = vmatpush1.bf16.msra.mxu0 0
  %1181 = vmatprep.mubr.bf16.mxu0 0
  %1182 = vmatmul.mubr.bf16.gmra.mrb[0].mxu0 %v1141
  %v1183 = vpop.f32.mrb[0].mxu0
  %v1184 = vadd.f32 %v1126, %v1183
  %v1185 = vpop.f32.mrb[0].mxu0
  %v1186 = vpop.f32.mrb[0].mxu0
  %v1187 = vadd.f32 %v1126, %v1186
  %v1188 = vpop.f32.mrb[0].mxu0
  %1189 = vmatprep.mubr.bf16.mxu0 0
  %1190 = vmatmul.mubr.bf16.gmra.mrb[0].mxu0 %v1144
  %v1191 = vpop.f32.mrb[0].mxu0
  %v1192 = vadd.f32 %v1126, %v1191
  %v1193 = vpop.f32.mrb[0].mxu0
  %v1194 = vpop.f32.mrb[0].mxu0
  %v1195 = vadd.f32 %v1126, %v1194
  %v1196 = vpop.f32.mrb[0].mxu0
  %1197 = vmatprep.mubr.bf16.mxu0 0
  %1198 = vmatmul.mubr.bf16.gmra.mrb[0].mxu0 %v1147
  %v1199 = vpop.f32.mrb[0].mxu0
  %v1200 = vadd.f32 %v1126, %v1199
  %v1201 = vpop.f32.mrb[0].mxu0
  %v1202 = vpop.f32.mrb[0].mxu0
  %v1203 = vadd.f32 %v1126, %v1202
  %v1204 = vpop.f32.mrb[0].mxu0
  %1205 = vdwg.mxu0
  %v1206 = vadd.f32 %v160, %v1184
  %v1207 = vadd.f32 %v161, %v1187
  %v1208 = vadd.f32 %v162, %v1192
  %v1209 = vadd.f32 %v163, %v1195
  %v1210 = vadd.f32 %v164, %v1200
  %v1211 = vadd.f32 %v165, %v1203
  %v1212 = vld [vmem:[%s10] sm:$0x1]
  %v1213 = vld [vmem:[%s11] sm:$0x1]
  %v1214 = vsel %vm62, %v1206, 0.0
  %1215 = vadd.xlane.f32.xlu0 %v1214
  %v1216 = vpop.xlane.xlu0 %1215
  %v1217 = vsel %vm62, %v1207, 0.0
  %1218 = vadd.xlane.f32.xlu0 %v1217
  %v1219 = vpop.xlane.xlu0 %1218
  %v1220 = vsel %vm62, %v1208, 0.0
  %1221 = vadd.xlane.f32.xlu0 %v1220
  %v1222 = vpop.xlane.xlu0 %1221
  %v1223 = vsel %vm62, %v1209, 0.0
  %1224 = vadd.xlane.f32.xlu0 %v1223
  %v1225 = vpop.xlane.xlu0 %1224
  %v1226 = vsel %vm62, %v1210, 0.0
  %1227 = vadd.xlane.f32.xlu0 %v1226
  %v1228 = vpop.xlane.xlu0 %1227
  %v1229 = vsel %vm62, %v1211, 0.0
  %1230 = vadd.xlane.f32.xlu0 %v1229
  %v1231 = vpop.xlane.xlu0 %1230
  %v1232 = vmul.f32 %v1216, %v81
  %v1233 = vmul.f32 %v1219, %v81
  %v1234 = vmul.f32 %v1222, %v81
  %v1235 = vmul.f32 %v1225, %v81
  %v1236 = vmul.f32 %v1228, %v81
  %v1237 = vmul.f32 %v1231, %v81
  %v1238 = vsub.f32 %v1206, %v1232
  %v1239 = vsub.f32 %v1207, %v1233
  %v1240 = vsub.f32 %v1208, %v1234
  %v1241 = vsub.f32 %v1209, %v1235
  %v1242 = vsub.f32 %v1210, %v1236
  %v1243 = vsub.f32 %v1211, %v1237
  %v1244 = vmul.f32 %v1238, %v1238
  %v1245 = vmul.f32 %v1239, %v1239
  %v1246 = vmul.f32 %v1240, %v1240
  %v1247 = vmul.f32 %v1241, %v1241
  %v1248 = vmul.f32 %v1242, %v1242
  %v1249 = vmul.f32 %v1243, %v1243
  %v1250 = vsel %vm62, %v1244, 0.0
  %1251 = vadd.xlane.f32.xlu0 %v1250
  %v1252 = vpop.xlane.xlu0 %1251
  %v1253 = vsel %vm62, %v1245, 0.0
  %1254 = vadd.xlane.f32.xlu0 %v1253
  %v1255 = vpop.xlane.xlu0 %1254
  %v1256 = vsel %vm62, %v1246, 0.0
  %1257 = vadd.xlane.f32.xlu0 %v1256
  %v1258 = vpop.xlane.xlu0 %1257
  %v1259 = vsel %vm62, %v1247, 0.0
  %1260 = vadd.xlane.f32.xlu0 %v1259
  %v1261 = vpop.xlane.xlu0 %1260
  %v1262 = vsel %vm62, %v1248, 0.0
  %1263 = vadd.xlane.f32.xlu0 %v1262
  %v1264 = vpop.xlane.xlu0 %1263
  %v1265 = vsel %vm62, %v1249, 0.0
  %1266 = vadd.xlane.f32.xlu0 %v1265
  %v1267 = vpop.xlane.xlu0 %1266
  %v1268 = vmul.f32 %v1252, %v81
  %v1269 = vmul.f32 %v1255, %v81
  %v1270 = vmul.f32 %v1258, %v81
  %v1271 = vmul.f32 %v1261, %v81
  %v1272 = vmul.f32 %v1264, %v81
  %v1273 = vmul.f32 %v1267, %v81
  %v1274 = vadd.f32 %v1268, 1e-05
  %v1275 = vadd.f32 %v1269, 1e-05
  %v1276 = vadd.f32 %v1270, 1e-05
  %v1277 = vadd.f32 %v1271, 1e-05
  %v1278 = vadd.f32 %v1272, 1e-05
  %v1279 = vadd.f32 %v1273, 1e-05
  %v1280 = vrsqrt.pop %v1274
  %v1281 = vrsqrt.pop %v1275
  %v1282 = vrsqrt.pop %v1276
  %v1283 = vrsqrt.pop %v1277
  %v1284 = vrsqrt.pop %v1278
  %v1285 = vrsqrt.pop %v1279
  %v1286 = vmul.f32 %v1238, %v1280
  %v1287 = vmul.f32 %v1239, %v1281
  %v1288 = vmul.f32 %v1240, %v1282
  %v1289 = vmul.f32 %v1241, %v1283
  %v1290 = vmul.f32 %v1242, %v1284
  %v1291 = vmul.f32 %v1243, %v1285
  %v1293 = vlaneseq
  %v1294 = vshrl.u32 %v1293, 7
  %v1295 = vsub.s32 0, %v1294
  %v1296 = vrot.slane %v1212, %v1295
  %v1298 = vmul.f32 %v1286, %v1296
  %v1299 = vmul.f32 %v1287, %v1296
  %v1300 = vmul.f32 %v1288, %v1296
  %v1301 = vmul.f32 %v1289, %v1296
  %v1302 = vmul.f32 %v1290, %v1296
  %v1303 = vmul.f32 %v1291, %v1296
  %v1305 = vlaneseq
  %v1306 = vshrl.u32 %v1305, 7
  %v1307 = vsub.s32 0, %v1306
  %v1308 = vrot.slane %v1213, %v1307
  %v1310 = vadd.f32 %v1298, %v1308
  %v1311 = vadd.f32 %v1299, %v1308
  %v1312 = vadd.f32 %v1300, %v1308
  %v1313 = vadd.f32 %v1301, %v1308
  %v1314 = vadd.f32 %v1302, %v1308
  %v1315 = vadd.f32 %v1303, %v1308
  %v1316 = vpack.c.bf16 %v1311, %v1310
  %v1317 = vpack.c.bf16 %v1313, %v1312
  %v1318 = vpack.c.bf16 %v1315, %v1314
  %v1319 = vld [vmem:[%s12] sm:$0xf]
  %v1320 = vld [vmem:[%s12 + $0x4] sm:$0xf]
  %v1321 = vld [vmem:[%s12 + $0x8] sm:$0xf]
  %v1322 = vld [vmem:[%s12 + $0xc] sm:$0xf]
  %v1323 = vld [vmem:[%s13] sm:$0x1]
  %v1325 = vlaneseq
  %v1326 = vshrl.u32 %v1325, 7
  %v1327 = vsub.s32 0, %v1326
  %v1328 = vrot.slane %v1323, %v1327
  %v1334 = vunpack.c.l.b16 %v1319
  %v1335 = vunpack.c.l.b16 %v1320
  %v1336 = vunpack.c.l.b16 %v1321
  %v1337 = vunpack.c.l.b16 %v1322
  %v1338 = vpack.c.b16 %v1335, %v1334
  %v1339 = vpack.c.b16 %v1337, %v1336
  %v1343 = vsel %vm62, %v1316, 0
  %v1346 = vsel %vm62, %v1317, 0
  %v1349 = vsel %vm62, %v1318, 0
  %1351 = vmatprep.subr.bf16.mxu0 0
  %1352 = vmatpush1.bf16.msra.mxu0 %v1338
  %1353 = vmatprep.subr.bf16.mxu0 0
  %1354 = vmatpush1.bf16.msra.mxu0 %v1339
  %1355 = vmatprep.subr.bf16.mxu0 0
  %1356 = vmatpush1.bf16.msra.mxu0 0
  %1357 = vmatprep.subr.bf16.mxu0 0
  %1358 = vmatpush1.bf16.msra.mxu0 0
  %1359 = vmatprep.subr.bf16.mxu0 0
  %1360 = vmatpush1.bf16.msra.mxu0 0
  %1361 = vmatprep.subr.bf16.mxu0 0
  %1362 = vmatpush1.bf16.msra.mxu0 0
  %1363 = vmatprep.subr.bf16.mxu0 0
  %1364 = vmatpush1.bf16.msra.mxu0 0
  %1365 = vmatprep.subr.bf16.mxu0 0
  %1366 = vmatpush1.bf16.msra.mxu0 0
  %1367 = vmatprep.subr.bf16.mxu0 0
  %1368 = vmatpush1.bf16.msra.mxu0 0
  %1369 = vmatprep.subr.bf16.mxu0 0
  %1370 = vmatpush1.bf16.msra.mxu0 0
  %1371 = vmatprep.subr.bf16.mxu0 0
  %1372 = vmatpush1.bf16.msra.mxu0 0
  %1373 = vmatprep.subr.bf16.mxu0 0
  %1374 = vmatpush1.bf16.msra.mxu0 0
  %1375 = vmatprep.subr.bf16.mxu0 0
  %1376 = vmatpush1.bf16.msra.mxu0 0
  %1377 = vmatprep.subr.bf16.mxu0 0
  %1378 = vmatpush1.bf16.msra.mxu0 0
  %1379 = vmatprep.subr.bf16.mxu0 0
  %1380 = vmatpush1.bf16.msra.mxu0 0
  %1381 = vmatprep.subr.bf16.mxu0 0
  %1382 = vmatpush1.bf16.msra.mxu0 0
  %1383 = vmatprep.mubr.bf16.mxu0 0
  %1384 = vmatmul.mubr.bf16.gmra.mrb[0].mxu0 %v1343
  %v1385 = vpop.f32.mrb[0].mxu0
  %v1386 = vadd.f32 %v1328, %v1385
  %v1387 = vpop.f32.mrb[0].mxu0
  %v1388 = vpop.f32.mrb[0].mxu0
  %v1389 = vadd.f32 %v1328, %v1388
  %v1390 = vpop.f32.mrb[0].mxu0
  %1391 = vmatprep.mubr.bf16.mxu0 0
  %1392 = vmatmul.mubr.bf16.gmra.mrb[0].mxu0 %v1346
  %v1393 = vpop.f32.mrb[0].mxu0
  %v1394 = vadd.f32 %v1328, %v1393
  %v1395 = vpop.f32.mrb[0].mxu0
  %v1396 = vpop.f32.mrb[0].mxu0
  %v1397 = vadd.f32 %v1328, %v1396
  %v1398 = vpop.f32.mrb[0].mxu0
  %1399 = vmatprep.mubr.bf16.mxu0 0
  %1400 = vmatmul.mubr.bf16.gmra.mrb[0].mxu0 %v1349
  %v1401 = vpop.f32.mrb[0].mxu0
  %v1402 = vadd.f32 %v1328, %v1401
  %v1403 = vpop.f32.mrb[0].mxu0
  %v1404 = vpop.f32.mrb[0].mxu0
  %v1405 = vadd.f32 %v1328, %v1404
  %v1406 = vpop.f32.mrb[0].mxu0
  %1407 = vdwg.mxu0
  %v1408 = vmul.f32 %v1386, %v1386
  %v1409 = vmul.f32 %v1389, %v1389
  %v1410 = vmul.f32 %v1394, %v1394
  %v1411 = vmul.f32 %v1397, %v1397
  %v1412 = vmul.f32 %v1402, %v1402
  %v1413 = vmul.f32 %v1405, %v1405
  %v1414 = vmul.f32 %v1386, %v1408
  %v1415 = vmul.f32 %v1389, %v1409
  %v1416 = vmul.f32 %v1394, %v1410
  %v1417 = vmul.f32 %v1397, %v1411
  %v1418 = vmul.f32 %v1402, %v1412
  %v1419 = vmul.f32 %v1405, %v1413
  %v1420 = vmul.f32 %v1414, 0.044715
  %v1421 = vmul.f32 %v1415, 0.044715
  %v1422 = vmul.f32 %v1416, 0.044715
  %v1423 = vmul.f32 %v1417, 0.044715
  %v1424 = vmul.f32 %v1418, 0.044715
  %v1425 = vmul.f32 %v1419, 0.044715
  %v1426 = vadd.f32 %v1386, %v1420
  %v1427 = vadd.f32 %v1389, %v1421
  %v1428 = vadd.f32 %v1394, %v1422
  %v1429 = vadd.f32 %v1397, %v1423
  %v1430 = vadd.f32 %v1402, %v1424
  %v1431 = vadd.f32 %v1405, %v1425
  %v1432 = vmul.f32 %v1426, 0.7978846
  %v1433 = vmul.f32 %v1427, 0.7978846
  %v1434 = vmul.f32 %v1428, 0.7978846
  %v1435 = vmul.f32 %v1429, 0.7978846
  %v1436 = vmul.f32 %v1430, 0.7978846
  %v1437 = vmul.f32 %v1431, 0.7978846
  %v1438 = vtanh.pop %v1432
  %v1439 = vtanh.pop %v1433
  %v1440 = vtanh.pop %v1434
  %v1441 = vtanh.pop %v1435
  %v1442 = vtanh.pop %v1436
  %v1443 = vtanh.pop %v1437
  %v1444 = vadd.f32 %v1438, 1.0
  %v1445 = vadd.f32 %v1439, 1.0
  %v1446 = vadd.f32 %v1440, 1.0
  %v1447 = vadd.f32 %v1441, 1.0
  %v1448 = vadd.f32 %v1442, 1.0
  %v1449 = vadd.f32 %v1443, 1.0
  %v1450 = vmul.f32 %v1444, 0.5
  %v1451 = vmul.f32 %v1445, 0.5
  %v1452 = vmul.f32 %v1446, 0.5
  %v1453 = vmul.f32 %v1447, 0.5
  %v1454 = vmul.f32 %v1448, 0.5
  %v1455 = vmul.f32 %v1449, 0.5
  %v1456 = vmul.f32 %v1386, %v1450
  %v1457 = vmul.f32 %v1389, %v1451
  %v1458 = vmul.f32 %v1394, %v1452
  %v1459 = vmul.f32 %v1397, %v1453
  %v1460 = vmul.f32 %v1402, %v1454
  %v1461 = vmul.f32 %v1405, %v1455
  %v1462 = vpack.c.bf16 %v1457, %v1456
  %v1463 = vpack.c.bf16 %v1459, %v1458
  %v1464 = vpack.c.bf16 %v1461, %v1460
  %v1465 = vld [vmem:[%s14] sm:$0xf]
  %v1466 = vld [vmem:[%s14 + $0x4] sm:$0xf]
  %v1467 = vld [vmem:[%s14 + $0x8] sm:$0xf]
  %v1468 = vld [vmem:[%s14 + $0xc] sm:$0xf]
  %v1469 = vld [vmem:[%s14 + $0x10] sm:$0xf]
  %v1470 = vld [vmem:[%s14 + $0x14] sm:$0xf]
  %v1471 = vld [vmem:[%s14 + $0x18] sm:$0xf]
  %v1472 = vld [vmem:[%s14 + $0x1c] sm:$0xf]
  %v1473 = vld [vmem:[%s14 + $0x20] sm:$0xf]
  %v1474 = vld [vmem:[%s14 + $0x24] sm:$0xf]
  %v1475 = vld [vmem:[%s14 + $0x28] sm:$0xf]
  %v1476 = vld [vmem:[%s14 + $0x2c] sm:$0xf]
  %v1477 = vld [vmem:[%s14 + $0x30] sm:$0xf]
  %v1478 = vld [vmem:[%s14 + $0x34] sm:$0xf]
  %v1479 = vld [vmem:[%s14 + $0x38] sm:$0xf]
  %v1480 = vld [vmem:[%s14 + $0x3c] sm:$0xf]
  %v1481 = vld [vmem:[%s15] sm:$0x1]
  %v1483 = vlaneseq
  %v1484 = vshrl.u32 %v1483, 7
  %v1485 = vsub.s32 0, %v1484
  %v1486 = vrot.slane %v1481, %v1485
  %v1504 = vunpack.c.l.b16 %v1465
  %v1505 = vunpack.c.l.b16 %v1466
  %v1506 = vunpack.c.l.b16 %v1467
  %v1507 = vunpack.c.l.b16 %v1468
  %v1508 = vunpack.c.l.b16 %v1469
  %v1509 = vunpack.c.l.b16 %v1470
  %v1510 = vunpack.c.l.b16 %v1471
  %v1511 = vunpack.c.l.b16 %v1472
  %v1512 = vunpack.c.l.b16 %v1473
  %v1513 = vunpack.c.l.b16 %v1474
  %v1514 = vunpack.c.l.b16 %v1475
  %v1515 = vunpack.c.l.b16 %v1476
  %v1516 = vunpack.c.l.b16 %v1477
  %v1517 = vunpack.c.l.b16 %v1478
  %v1518 = vunpack.c.l.b16 %v1479
  %v1519 = vunpack.c.l.b16 %v1480
  %v1520 = vpack.c.b16 %v1505, %v1504
  %v1521 = vpack.c.b16 %v1507, %v1506
  %v1522 = vpack.c.b16 %v1509, %v1508
  %v1523 = vpack.c.b16 %v1511, %v1510
  %v1524 = vpack.c.b16 %v1513, %v1512
  %v1525 = vpack.c.b16 %v1515, %v1514
  %v1526 = vpack.c.b16 %v1517, %v1516
  %v1527 = vpack.c.b16 %v1519, %v1518
  %1536 = vmatprep.subr.bf16.mxu0 0
  %1537 = vmatpush1.bf16.msra.mxu0 %v1520
  %1538 = vmatprep.subr.bf16.mxu0 0
  %1539 = vmatpush1.bf16.msra.mxu0 %v1521
  %1540 = vmatprep.subr.bf16.mxu0 0
  %1541 = vmatpush1.bf16.msra.mxu0 %v1522
  %1542 = vmatprep.subr.bf16.mxu0 0
  %1543 = vmatpush1.bf16.msra.mxu0 %v1523
  %1544 = vmatprep.subr.bf16.mxu0 0
  %1545 = vmatpush1.bf16.msra.mxu0 %v1524
  %1546 = vmatprep.subr.bf16.mxu0 0
  %1547 = vmatpush1.bf16.msra.mxu0 %v1525
  %1548 = vmatprep.subr.bf16.mxu0 0
  %1549 = vmatpush1.bf16.msra.mxu0 %v1526
  %1550 = vmatprep.subr.bf16.mxu0 0
  %1551 = vmatpush1.bf16.msra.mxu0 %v1527
  %1552 = vmatprep.subr.bf16.mxu0 0
  %1553 = vmatpush1.bf16.msra.mxu0 0
  %1554 = vmatprep.subr.bf16.mxu0 0
  %1555 = vmatpush1.bf16.msra.mxu0 0
  %1556 = vmatprep.subr.bf16.mxu0 0
  %1557 = vmatpush1.bf16.msra.mxu0 0
  %1558 = vmatprep.subr.bf16.mxu0 0
  %1559 = vmatpush1.bf16.msra.mxu0 0
  %1560 = vmatprep.subr.bf16.mxu0 0
  %1561 = vmatpush1.bf16.msra.mxu0 0
  %1562 = vmatprep.subr.bf16.mxu0 0
  %1563 = vmatpush1.bf16.msra.mxu0 0
  %1564 = vmatprep.subr.bf16.mxu0 0
  %1565 = vmatpush1.bf16.msra.mxu0 0
  %1566 = vmatprep.subr.bf16.mxu0 0
  %1567 = vmatpush1.bf16.msra.mxu0 0
  %1568 = vmatprep.mubr.bf16.mxu0 0
  %1569 = vmatmul.mubr.bf16.gmra.mrb[0].mxu0 %v1462
  %v1570 = vpop.f32.mrb[0].mxu0
  %v1571 = vadd.f32 %v1486, %v1570
  %v1572 = vpop.f32.mrb[0].mxu0
  %v1573 = vpop.f32.mrb[0].mxu0
  %v1574 = vadd.f32 %v1486, %v1573
  %v1575 = vpop.f32.mrb[0].mxu0
  %1576 = vmatprep.mubr.bf16.mxu0 0
  %1577 = vmatmul.mubr.bf16.gmra.mrb[0].mxu0 %v1463
  %v1578 = vpop.f32.mrb[0].mxu0
  %v1579 = vadd.f32 %v1486, %v1578
  %v1580 = vpop.f32.mrb[0].mxu0
  %v1581 = vpop.f32.mrb[0].mxu0
  %v1582 = vadd.f32 %v1486, %v1581
  %v1583 = vpop.f32.mrb[0].mxu0
  %1584 = vmatprep.mubr.bf16.mxu0 0
  %1585 = vmatmul.mubr.bf16.gmra.mrb[0].mxu0 %v1464
  %v1586 = vpop.f32.mrb[0].mxu0
  %v1587 = vadd.f32 %v1486, %v1586
  %v1588 = vpop.f32.mrb[0].mxu0
  %v1589 = vpop.f32.mrb[0].mxu0
  %v1590 = vadd.f32 %v1486, %v1589
  %v1591 = vpop.f32.mrb[0].mxu0
  %1592 = vdwg.mxu0
  %v1593 = vadd.f32 %v1206, %v1571
  %v1594 = vadd.f32 %v1207, %v1574
  %v1595 = vadd.f32 %v1208, %v1579
  %v1596 = vadd.f32 %v1209, %v1582
  %v1597 = vadd.f32 %v1210, %v1587
  %v1598 = vadd.f32 %v1211, %v1590
  %s1599 = scalar_lea.vmem %s4, 1
  %v1600 = vld [vmem:[%s1599] sm:$0x1]
  %s1601 = scalar_lea.vmem %s5, 1
  %v1602 = vld [vmem:[%s1601] sm:$0x1]
  %v1603 = vsel %vm62, %v1593, 0.0
  %1604 = vadd.xlane.f32.xlu0 %v1603
  %v1605 = vpop.xlane.xlu0 %1604
  %v1606 = vsel %vm62, %v1594, 0.0
  %1607 = vadd.xlane.f32.xlu0 %v1606
  %v1608 = vpop.xlane.xlu0 %1607
  %v1609 = vsel %vm62, %v1595, 0.0
  %1610 = vadd.xlane.f32.xlu0 %v1609
  %v1611 = vpop.xlane.xlu0 %1610
  %v1612 = vsel %vm62, %v1596, 0.0
  %1613 = vadd.xlane.f32.xlu0 %v1612
  %v1614 = vpop.xlane.xlu0 %1613
  %v1615 = vsel %vm62, %v1597, 0.0
  %1616 = vadd.xlane.f32.xlu0 %v1615
  %v1617 = vpop.xlane.xlu0 %1616
  %v1618 = vsel %vm62, %v1598, 0.0
  %1619 = vadd.xlane.f32.xlu0 %v1618
  %v1620 = vpop.xlane.xlu0 %1619
  %v1621 = vmul.f32 %v1605, %v81
  %v1622 = vmul.f32 %v1608, %v81
  %v1623 = vmul.f32 %v1611, %v81
  %v1624 = vmul.f32 %v1614, %v81
  %v1625 = vmul.f32 %v1617, %v81
  %v1626 = vmul.f32 %v1620, %v81
  %v1627 = vsub.f32 %v1593, %v1621
  %v1628 = vsub.f32 %v1594, %v1622
  %v1629 = vsub.f32 %v1595, %v1623
  %v1630 = vsub.f32 %v1596, %v1624
  %v1631 = vsub.f32 %v1597, %v1625
  %v1632 = vsub.f32 %v1598, %v1626
  %v1633 = vmul.f32 %v1627, %v1627
  %v1634 = vmul.f32 %v1628, %v1628
  %v1635 = vmul.f32 %v1629, %v1629
  %v1636 = vmul.f32 %v1630, %v1630
  %v1637 = vmul.f32 %v1631, %v1631
  %v1638 = vmul.f32 %v1632, %v1632
  %v1639 = vsel %vm62, %v1633, 0.0
  %1640 = vadd.xlane.f32.xlu0 %v1639
  %v1641 = vpop.xlane.xlu0 %1640
  %v1642 = vsel %vm62, %v1634, 0.0
  %1643 = vadd.xlane.f32.xlu0 %v1642
  %v1644 = vpop.xlane.xlu0 %1643
  %v1645 = vsel %vm62, %v1635, 0.0
  %1646 = vadd.xlane.f32.xlu0 %v1645
  %v1647 = vpop.xlane.xlu0 %1646
  %v1648 = vsel %vm62, %v1636, 0.0
  %1649 = vadd.xlane.f32.xlu0 %v1648
  %v1650 = vpop.xlane.xlu0 %1649
  %v1651 = vsel %vm62, %v1637, 0.0
  %1652 = vadd.xlane.f32.xlu0 %v1651
  %v1653 = vpop.xlane.xlu0 %1652
  %v1654 = vsel %vm62, %v1638, 0.0
  %1655 = vadd.xlane.f32.xlu0 %v1654
  %v1656 = vpop.xlane.xlu0 %1655
  %v1657 = vmul.f32 %v1641, %v81
  %v1658 = vmul.f32 %v1644, %v81
  %v1659 = vmul.f32 %v1647, %v81
  %v1660 = vmul.f32 %v1650, %v81
  %v1661 = vmul.f32 %v1653, %v81
  %v1662 = vmul.f32 %v1656, %v81
  %v1663 = vadd.f32 %v1657, 1e-05
  %v1664 = vadd.f32 %v1658, 1e-05
  %v1665 = vadd.f32 %v1659, 1e-05
  %v1666 = vadd.f32 %v1660, 1e-05
  %v1667 = vadd.f32 %v1661, 1e-05
  %v1668 = vadd.f32 %v1662, 1e-05
  %v1669 = vrsqrt.pop %v1663
  %v1670 = vrsqrt.pop %v1664
  %v1671 = vrsqrt.pop %v1665
  %v1672 = vrsqrt.pop %v1666
  %v1673 = vrsqrt.pop %v1667
  %v1674 = vrsqrt.pop %v1668
  %v1675 = vmul.f32 %v1627, %v1669
  %v1676 = vmul.f32 %v1628, %v1670
  %v1677 = vmul.f32 %v1629, %v1671
  %v1678 = vmul.f32 %v1630, %v1672
  %v1679 = vmul.f32 %v1631, %v1673
  %v1680 = vmul.f32 %v1632, %v1674
  %v1682 = vlaneseq
  %v1683 = vshrl.u32 %v1682, 7
  %v1684 = vsub.s32 0, %v1683
  %v1685 = vrot.slane %v1600, %v1684
  %v1687 = vmul.f32 %v1675, %v1685
  %v1688 = vmul.f32 %v1676, %v1685
  %v1689 = vmul.f32 %v1677, %v1685
  %v1690 = vmul.f32 %v1678, %v1685
  %v1691 = vmul.f32 %v1679, %v1685
  %v1692 = vmul.f32 %v1680, %v1685
  %v1694 = vlaneseq
  %v1695 = vshrl.u32 %v1694, 7
  %v1696 = vsub.s32 0, %v1695
  %v1697 = vrot.slane %v1602, %v1696
  %v1699 = vadd.f32 %v1687, %v1697
  %v1700 = vadd.f32 %v1688, %v1697
  %v1701 = vadd.f32 %v1689, %v1697
  %v1702 = vadd.f32 %v1690, %v1697
  %v1703 = vadd.f32 %v1691, %v1697
  %v1704 = vadd.f32 %v1692, %v1697
  %v1705 = vpack.c.bf16 %v1700, %v1699
  %v1706 = vpack.c.bf16 %v1702, %v1701
  %v1707 = vpack.c.bf16 %v1704, %v1703
  %s1708 = scalar_lea.vmem %s6, 16
  %v1709 = vld [vmem:[%s1708] sm:$0xf]
  %v1710 = vld [vmem:[%s1708 + $0x4] sm:$0xf]
  %v1711 = vld [vmem:[%s1708 + $0x8] sm:$0xf]
  %v1712 = vld [vmem:[%s1708 + $0xc] sm:$0xf]
  %s1713 = scalar_lea.vmem %s7, 1
  %v1714 = vld [vmem:[%s1713] sm:$0x1]
  %v1716 = vlaneseq
  %v1717 = vshrl.u32 %v1716, 7
  %v1718 = vsub.s32 0, %v1717
  %v1719 = vrot.slane %v1714, %v1718
  %v1725 = vunpack.c.l.b16 %v1709
  %v1726 = vunpack.c.l.b16 %v1710
  %v1727 = vunpack.c.l.b16 %v1711
  %v1728 = vunpack.c.l.b16 %v1712
  %v1729 = vpack.c.b16 %v1726, %v1725
  %v1730 = vpack.c.b16 %v1728, %v1727
  %v1734 = vsel %vm62, %v1705, 0
  %v1737 = vsel %vm62, %v1706, 0
  %v1740 = vsel %vm62, %v1707, 0
  %1742 = vmatprep.subr.bf16.mxu0 0
  %1743 = vmatpush1.bf16.msra.mxu0 %v1729
  %1744 = vmatprep.subr.bf16.mxu0 0
  %1745 = vmatpush1.bf16.msra.mxu0 %v1730
  %1746 = vmatprep.subr.bf16.mxu0 0
  %1747 = vmatpush1.bf16.msra.mxu0 0
  %1748 = vmatprep.subr.bf16.mxu0 0
  %1749 = vmatpush1.bf16.msra.mxu0 0
  %1750 = vmatprep.subr.bf16.mxu0 0
  %1751 = vmatpush1.bf16.msra.mxu0 0
  %1752 = vmatprep.subr.bf16.mxu0 0
  %1753 = vmatpush1.bf16.msra.mxu0 0
  %1754 = vmatprep.subr.bf16.mxu0 0
  %1755 = vmatpush1.bf16.msra.mxu0 0
  %1756 = vmatprep.subr.bf16.mxu0 0
  %1757 = vmatpush1.bf16.msra.mxu0 0
  %1758 = vmatprep.subr.bf16.mxu0 0
  %1759 = vmatpush1.bf16.msra.mxu0 0
  %1760 = vmatprep.subr.bf16.mxu0 0
  %1761 = vmatpush1.bf16.msra.mxu0 0
  %1762 = vmatprep.subr.bf16.mxu0 0
  %1763 = vmatpush1.bf16.msra.mxu0 0
  %1764 = vmatprep.subr.bf16.mxu0 0
  %1765 = vmatpush1.bf16.msra.mxu0 0
  %1766 = vmatprep.subr.bf16.mxu0 0
  %1767 = vmatpush1.bf16.msra.mxu0 0
  %1768 = vmatprep.subr.bf16.mxu0 0
  %1769 = vmatpush1.bf16.msra.mxu0 0
  %1770 = vmatprep.subr.bf16.mxu0 0
  %1771 = vmatpush1.bf16.msra.mxu0 0
  %1772 = vmatprep.subr.bf16.mxu0 0
  %1773 = vmatpush1.bf16.msra.mxu0 0
  %1774 = vmatprep.mubr.bf16.mxu0 0
  %1775 = vmatmul.mubr.bf16.gmra.mrb[0].mxu0 %v1734
  %v1776 = vpop.f32.mrb[0].mxu0
  %v1777 = vadd.f32 %v1719, %v1776
  %v1778 = vpop.f32.mrb[0].mxu0
  %v1779 = vpop.f32.mrb[0].mxu0
  %v1780 = vadd.f32 %v1719, %v1779
  %v1781 = vpop.f32.mrb[0].mxu0
  %1782 = vmatprep.mubr.bf16.mxu0 0
  %1783 = vmatmul.mubr.bf16.gmra.mrb[0].mxu0 %v1737
  %v1784 = vpop.f32.mrb[0].mxu0
  %v1785 = vadd.f32 %v1719, %v1784
  %v1786 = vpop.f32.mrb[0].mxu0
  %v1787 = vpop.f32.mrb[0].mxu0
  %v1788 = vadd.f32 %v1719, %v1787
  %v1789 = vpop.f32.mrb[0].mxu0
  %1790 = vmatprep.mubr.bf16.mxu0 0
  %1791 = vmatmul.mubr.bf16.gmra.mrb[0].mxu0 %v1740
  %v1792 = vpop.f32.mrb[0].mxu0
  %v1793 = vadd.f32 %v1719, %v1792
  %v1794 = vpop.f32.mrb[0].mxu0
  %v1795 = vpop.f32.mrb[0].mxu0
  %v1796 = vadd.f32 %v1719, %v1795
  %v1797 = vpop.f32.mrb[0].mxu0
  %1798 = vdwg.mxu0
  %v1799 = vpack.c.bf16 %v1780, %v1777
  %v1800 = vpack.c.bf16 %v1785, %v1785
  %1803 = vrot.lane.b32.xlu0 %v1799, 96
  %v1804 = vpop.permute.xlu0 %1803
  %1805 = vrot.lane.b32.xlu0 %v1800, 96
  %v1806 = vpop.permute.xlu0 %1805
  %v1808 = vsel %vm381, %v1799, 0
  %v1811 = vsel %vm381, %v1800, 0
  %v1814 = vsel %vm381, %v1804, 0
  %v1817 = vsel %vm381, %v1806, 0
  %1819 = vmatprep.subr.bf16.mxu0 0
  %1820 = vmatpush1.bf16.xpose.msra.mxu0 %v1814
  %1821 = vmatprep.subr.bf16.mxu0 0
  %1822 = vmatpush1.bf16.xpose.msra.mxu0 %v1817
  %1823 = vmatprep.subr.bf16.mxu0 0
  %1824 = vmatpush1.bf16.xpose.msra.mxu0 0
  %1825 = vmatprep.subr.bf16.mxu0 0
  %1826 = vmatpush1.bf16.xpose.msra.mxu0 0
  %1827 = vmatprep.subr.bf16.mxu0 0
  %1828 = vmatpush1.bf16.xpose.msra.mxu0 0
  %1829 = vmatprep.subr.bf16.mxu0 0
  %1830 = vmatpush1.bf16.xpose.msra.mxu0 0
  %1831 = vmatprep.subr.bf16.mxu0 0
  %1832 = vmatpush1.bf16.xpose.msra.mxu0 0
  %1833 = vmatprep.subr.bf16.mxu0 0
  %1834 = vmatpush1.bf16.xpose.msra.mxu0 0
  %1835 = vmatprep.subr.bf16.mxu0 0
  %1836 = vmatpush1.bf16.xpose.msra.mxu0 0
  %1837 = vmatprep.subr.bf16.mxu0 0
  %1838 = vmatpush1.bf16.xpose.msra.mxu0 0
  %1839 = vmatprep.subr.bf16.mxu0 0
  %1840 = vmatpush1.bf16.xpose.msra.mxu0 0
  %1841 = vmatprep.subr.bf16.mxu0 0
  %1842 = vmatpush1.bf16.xpose.msra.mxu0 0
  %1843 = vmatprep.subr.bf16.mxu0 0
  %1844 = vmatpush1.bf16.xpose.msra.mxu0 0
  %1845 = vmatprep.subr.bf16.mxu0 0
  %1846 = vmatpush1.bf16.xpose.msra.mxu0 0
  %1847 = vmatprep.subr.bf16.mxu0 0
  %1848 = vmatpush1.bf16.xpose.msra.mxu0 0
  %1849 = vmatprep.subr.bf16.mxu0 0
  %1850 = vmatpush1.bf16.xpose.msra.mxu0 0
  %1851 = vmatprep.mubr.bf16.mxu0 0
  %1852 = vmatmul.mubr.bf16.gmra.mrb[0].mxu0 %v1808
  %v1853 = vpop.f32.mrb[0].mxu0
  %v1854 = vadd.f32 0.0, %v1853
  %v1855 = vpop.f32.mrb[0].mxu0
  %v1856 = vpop.f32.mrb[0].mxu0
  %v1857 = vadd.f32 0.0, %v1856
  %v1858 = vpop.f32.mrb[0].mxu0
  %1859 = vmatprep.mubr.bf16.mxu0 0
  %1860 = vmatmul.mubr.bf16.gmra.mrb[0].mxu0 %v1811
  %v1861 = vpop.f32.mrb[0].mxu0
  %v1862 = vadd.f32 0.0, %v1861
  %v1863 = vpop.f32.mrb[0].mxu0
  %v1864 = vpop.f32.mrb[0].mxu0
  %v1865 = vpop.f32.mrb[0].mxu0
  %1866 = vdwg.mxu0
  %v1867 = vmul.f32 %v1854, 0.25
  %v1868 = vmul.f32 %v1857, 0.25
  %v1869 = vmul.f32 %v1862, 0.25
  %v1870 = vsel %vm174, %v1867, -10000.0
  %v1871 = vsel %vm175, %v1868, -10000.0
  %v1872 = vsel %vm176, %v1869, -10000.0
  %v1873 = vadd.f32 %v1870, %v452
  %v1874 = vadd.f32 %v1871, %v452
  %v1875 = vadd.f32 %v1872, %v452
  %v1876 = vsel %vm457, %v1873, -inf
  %1877 = vmax.xlane.f32.xlu0 %v1876
  %v1878 = vpop.xlane.xlu0 %1877
  %v1879 = vsel %vm457, %v1874, -inf
  %1880 = vmax.xlane.f32.xlu0 %v1879
  %v1881 = vpop.xlane.xlu0 %1880
  %v1882 = vsel %vm457, %v1875, -inf
  %1883 = vmax.xlane.f32.xlu0 %v1882
  %v1884 = vpop.xlane.xlu0 %1883
  %v1885 = vsub.f32 %v1873, %v1878
  %v1886 = vsub.f32 %v1874, %v1881
  %v1887 = vsub.f32 %v1875, %v1884
  %v1888 = vmul.f32 %v1885, 1.442695
  %v1889 = vpow.pop %v1888
  %v1890 = vmul.f32 %v1886, 1.442695
  %v1891 = vpow.pop %v1890
  %v1892 = vmul.f32 %v1887, 1.442695
  %v1893 = vpow.pop %v1892
  %v1894 = vsel %vm457, %v1889, 0.0
  %1895 = vadd.xlane.f32.xlu0 %v1894
  %v1896 = vpop.xlane.xlu0 %1895
  %v1897 = vsel %vm457, %v1891, 0.0
  %1898 = vadd.xlane.f32.xlu0 %v1897
  %v1899 = vpop.xlane.xlu0 %1898
  %v1900 = vsel %vm457, %v1893, 0.0
  %1901 = vadd.xlane.f32.xlu0 %v1900
  %v1902 = vpop.xlane.xlu0 %1901
  %v1903 = vrcp.pop %v1896
  %v1904 = vrcp.pop %v1899
  %v1905 = vrcp.pop %v1902
  %v1906 = vmul.f32 %v1889, %v1903
  %v1907 = vmul.f32 %v1891, %v1904
  %v1908 = vmul.f32 %v1893, %v1905
  %v1909 = vpack.c.bf16 %v1907, %v1906
  %v1910 = vpack.c.bf16 %v1908, %v1908
  %1911 = vrot.lane.b32.xlu0 %v1799, 64
  %v1912 = vpop.permute.xlu0 %1911
  %1913 = vrot.lane.b32.xlu0 %v1800, 64
  %v1914 = vpop.permute.xlu0 %1913
  %v1917 = vsel %vm457, %v1909, 0
  %v1920 = vsel %vm457, %v1910, 0
  %v1923 = vsel %vm504, %v1914, 0
  %1925 = vmatprep.subr.bf16.mxu0 0
  %1926 = vmatpush1.bf16.msra.mxu0 %v1912
  %1927 = vmatprep.subr.bf16.mxu0 0
  %1928 = vmatpush1.bf16.msra.mxu0 %v1923
  %1929 = vmatprep.subr.bf16.mxu0 0
  %1930 = vmatpush1.bf16.msra.mxu0 0
  %1931 = vmatprep.subr.bf16.mxu0 0
  %1932 = vmatpush1.bf16.msra.mxu0 0
  %1933 = vmatprep.subr.bf16.mxu0 0
  %1934 = vmatpush1.bf16.msra.mxu0 0
  %1935 = vmatprep.subr.bf16.mxu0 0
  %1936 = vmatpush1.bf16.msra.mxu0 0
  %1937 = vmatprep.subr.bf16.mxu0 0
  %1938 = vmatpush1.bf16.msra.mxu0 0
  %1939 = vmatprep.subr.bf16.mxu0 0
  %1940 = vmatpush1.bf16.msra.mxu0 0
  %1941 = vmatprep.subr.bf16.mxu0 0
  %1942 = vmatpush1.bf16.msra.mxu0 0
  %1943 = vmatprep.subr.bf16.mxu0 0
  %1944 = vmatpush1.bf16.msra.mxu0 0
  %1945 = vmatprep.subr.bf16.mxu0 0
  %1946 = vmatpush1.bf16.msra.mxu0 0
  %1947 = vmatprep.subr.bf16.mxu0 0
  %1948 = vmatpush1.bf16.msra.mxu0 0
  %1949 = vmatprep.subr.bf16.mxu0 0
  %1950 = vmatpush1.bf16.msra.mxu0 0
  %1951 = vmatprep.subr.bf16.mxu0 0
  %1952 = vmatpush1.bf16.msra.mxu0 0
  %1953 = vmatprep.subr.bf16.mxu0 0
  %1954 = vmatpush1.bf16.msra.mxu0 0
  %1955 = vmatprep.subr.bf16.mxu0 0
  %1956 = vmatpush1.bf16.msra.mxu0 0
  %1957 = vmatprep.mubr.bf16.mxu0 0
  %1958 = vmatmul.mubr.bf16.gmra.mrb[0].mxu0 %v1917
  %v1959 = vpop.f32.mrb[0].mxu0
  %v1960 = vadd.f32 0.0, %v1959
  %v1961 = vpop.f32.mrb[0].mxu0
  %v1962 = vpop.f32.mrb[0].mxu0
  %v1963 = vadd.f32 0.0, %v1962
  %v1964 = vpop.f32.mrb[0].mxu0
  %1965 = vmatprep.mubr.bf16.mxu0 0
  %1966 = vmatmul.mubr.bf16.gmra.mrb[0].mxu0 %v1920
  %v1967 = vpop.f32.mrb[0].mxu0
  %v1968 = vadd.f32 0.0, %v1967
  %v1969 = vpop.f32.mrb[0].mxu0
  %v1970 = vpop.f32.mrb[0].mxu0
  %v1971 = vpop.f32.mrb[0].mxu0
  %1972 = vdwg.mxu0
  %1973 = vrot.lane.b32.xlu0 %v1799, 112
  %v1974 = vpop.permute.xlu0 %1973
  %1975 = vrot.lane.b32.xlu0 %v1800, 112
  %v1976 = vpop.permute.xlu0 %1975
  %1977 = vrot.lane.b32.xlu0 %v1799, 80
  %v1978 = vpop.permute.xlu0 %1977
  %1979 = vrot.lane.b32.xlu0 %v1800, 80
  %v1980 = vpop.permute.xlu0 %1979
  %v1982 = vsel %vm381, %v1974, 0
  %v1985 = vsel %vm381, %v1976, 0
  %v1988 = vsel %vm381, %v1978, 0
  %v1991 = vsel %vm381, %v1980, 0
  %1993 = vmatprep.subr.bf16.mxu0 0
  %1994 = vmatpush1.bf16.xpose.msra.mxu0 %v1988
  %1995 = vmatprep.subr.bf16.mxu0 0
  %1996 = vmatpush1.bf16.xpose.msra.mxu0 %v1991
  %1997 = vmatprep.subr.bf16.mxu0 0
  %1998 = vmatpush1.bf16.xpose.msra.mxu0 0
  %1999 = vmatprep.subr.bf16.mxu0 0
  %2000 = vmatpush1.bf16.xpose.msra.mxu0 0
  %2001 = vmatprep.subr.bf16.mxu0 0
  %2002 = vmatpush1.bf16.xpose.msra.mxu0 0
  %2003 = vmatprep.subr.bf16.mxu0 0
  %2004 = vmatpush1.bf16.xpose.msra.mxu0 0
  %2005 = vmatprep.subr.bf16.mxu0 0
  %2006 = vmatpush1.bf16.xpose.msra.mxu0 0
  %2007 = vmatprep.subr.bf16.mxu0 0
  %2008 = vmatpush1.bf16.xpose.msra.mxu0 0
  %2009 = vmatprep.subr.bf16.mxu0 0
  %2010 = vmatpush1.bf16.xpose.msra.mxu0 0
  %2011 = vmatprep.subr.bf16.mxu0 0
  %2012 = vmatpush1.bf16.xpose.msra.mxu0 0
  %2013 = vmatprep.subr.bf16.mxu0 0
  %2014 = vmatpush1.bf16.xpose.msra.mxu0 0
  %2015 = vmatprep.subr.bf16.mxu0 0
  %2016 = vmatpush1.bf16.xpose.msra.mxu0 0
  %2017 = vmatprep.subr.bf16.mxu0 0
  %2018 = vmatpush1.bf16.xpose.msra.mxu0 0
  %2019 = vmatprep.subr.bf16.mxu0 0
  %2020 = vmatpush1.bf16.xpose.msra.mxu0 0
  %2021 = vmatprep.subr.bf16.mxu0 0
  %2022 = vmatpush1.bf16.xpose.msra.mxu0 0
  %2023 = vmatprep.subr.bf16.mxu0 0
  %2024 = vmatpush1.bf16.xpose.msra.mxu0 0
  %2025 = vmatprep.mubr.bf16.mxu0 0
  %2026 = vmatmul.mubr.bf16.gmra.mrb[0].mxu0 %v1982
  %v2027 = vpop.f32.mrb[0].mxu0
  %v2028 = vadd.f32 0.0, %v2027
  %v2029 = vpop.f32.mrb[0].mxu0
  %v2030 = vpop.f32.mrb[0].mxu0
  %v2031 = vadd.f32 0.0, %v2030
  %v2032 = vpop.f32.mrb[0].mxu0
  %2033 = vmatprep.mubr.bf16.mxu0 0
  %2034 = vmatmul.mubr.bf16.gmra.mrb[0].mxu0 %v1985
  %v2035 = vpop.f32.mrb[0].mxu0
  %v2036 = vadd.f32 0.0, %v2035
  %v2037 = vpop.f32.mrb[0].mxu0
  %v2038 = vpop.f32.mrb[0].mxu0
  %v2039 = vpop.f32.mrb[0].mxu0
  %2040 = vdwg.mxu0
  %v2041 = vmul.f32 %v2028, 0.25
  %v2042 = vmul.f32 %v2031, 0.25
  %v2043 = vmul.f32 %v2036, 0.25
  %v2044 = vsel %vm174, %v2041, -10000.0
  %v2045 = vsel %vm175, %v2042, -10000.0
  %v2046 = vsel %vm176, %v2043, -10000.0
  %v2047 = vadd.f32 %v2044, %v452
  %v2048 = vadd.f32 %v2045, %v452
  %v2049 = vadd.f32 %v2046, %v452
  %v2050 = vsel %vm457, %v2047, -inf
  %2051 = vmax.xlane.f32.xlu0 %v2050
  %v2052 = vpop.xlane.xlu0 %2051
  %v2053 = vsel %vm457, %v2048, -inf
  %2054 = vmax.xlane.f32.xlu0 %v2053
  %v2055 = vpop.xlane.xlu0 %2054
  %v2056 = vsel %vm457, %v2049, -inf
  %2057 = vmax.xlane.f32.xlu0 %v2056
  %v2058 = vpop.xlane.xlu0 %2057
  %v2059 = vsub.f32 %v2047, %v2052
  %v2060 = vsub.f32 %v2048, %v2055
  %v2061 = vsub.f32 %v2049, %v2058
  %v2062 = vmul.f32 %v2059, 1.442695
  %v2063 = vpow.pop %v2062
  %v2064 = vmul.f32 %v2060, 1.442695
  %v2065 = vpow.pop %v2064
  %v2066 = vmul.f32 %v2061, 1.442695
  %v2067 = vpow.pop %v2066
  %v2068 = vsel %vm457, %v2063, 0.0
  %2069 = vadd.xlane.f32.xlu0 %v2068
  %v2070 = vpop.xlane.xlu0 %2069
  %v2071 = vsel %vm457, %v2065, 0.0
  %2072 = vadd.xlane.f32.xlu0 %v2071
  %v2073 = vpop.xlane.xlu0 %2072
  %v2074 = vsel %vm457, %v2067, 0.0
  %2075 = vadd.xlane.f32.xlu0 %v2074
  %v2076 = vpop.xlane.xlu0 %2075
  %v2077 = vrcp.pop %v2070
  %v2078 = vrcp.pop %v2073
  %v2079 = vrcp.pop %v2076
  %v2080 = vmul.f32 %v2063, %v2077
  %v2081 = vmul.f32 %v2065, %v2078
  %v2082 = vmul.f32 %v2067, %v2079
  %v2083 = vpack.c.bf16 %v2081, %v2080
  %v2084 = vpack.c.bf16 %v2082, %v2082
  %2085 = vrot.lane.b32.xlu0 %v1799, 48
  %v2086 = vpop.permute.xlu0 %2085
  %2087 = vrot.lane.b32.xlu0 %v1800, 48
  %v2088 = vpop.permute.xlu0 %2087
  %v2091 = vsel %vm457, %v2083, 0
  %v2094 = vsel %vm457, %v2084, 0
  %v2097 = vsel %vm504, %v2088, 0
  %2099 = vmatprep.subr.bf16.mxu0 0
  %2100 = vmatpush1.bf16.msra.mxu0 %v2086
  %2101 = vmatprep.subr.bf16.mxu0 0
  %2102 = vmatpush1.bf16.msra.mxu0 %v2097
  %2103 = vmatprep.subr.bf16.mxu0 0
  %2104 = vmatpush1.bf16.msra.mxu0 0
  %2105 = vmatprep.subr.bf16.mxu0 0
  %2106 = vmatpush1.bf16.msra.mxu0 0
  %2107 = vmatprep.subr.bf16.mxu0 0
  %2108 = vmatpush1.bf16.msra.mxu0 0
  %2109 = vmatprep.subr.bf16.mxu0 0
  %2110 = vmatpush1.bf16.msra.mxu0 0
  %2111 = vmatprep.subr.bf16.mxu0 0
  %2112 = vmatpush1.bf16.msra.mxu0 0
  %2113 = vmatprep.subr.bf16.mxu0 0
  %2114 = vmatpush1.bf16.msra.mxu0 0
  %2115 = vmatprep.subr.bf16.mxu0 0
  %2116 = vmatpush1.bf16.msra.mxu0 0
  %2117 = vmatprep.subr.bf16.mxu0 0
  %2118 = vmatpush1.bf16.msra.mxu0 0
  %2119 = vmatprep.subr.bf16.mxu0 0
  %2120 = vmatpush1.bf16.msra.mxu0 0
  %2121 = vmatprep.subr.bf16.mxu0 0
  %2122 = vmatpush1.bf16.msra.mxu0 0
  %2123 = vmatprep.subr.bf16.mxu0 0
  %2124 = vmatpush1.bf16.msra.mxu0 0
  %2125 = vmatprep.subr.bf16.mxu0 0
  %2126 = vmatpush1.bf16.msra.mxu0 0
  %2127 = vmatprep.subr.bf16.mxu0 0
  %2128 = vmatpush1.bf16.msra.mxu0 0
  %2129 = vmatprep.subr.bf16.mxu0 0
  %2130 = vmatpush1.bf16.msra.mxu0 0
  %2131 = vmatprep.mubr.bf16.mxu0 0
  %2132 = vmatmul.mubr.bf16.gmra.mrb[0].mxu0 %v2091
  %v2133 = vpop.f32.mrb[0].mxu0
  %v2134 = vadd.f32 0.0, %v2133
  %v2135 = vpop.f32.mrb[0].mxu0
  %v2136 = vpop.f32.mrb[0].mxu0
  %v2137 = vadd.f32 0.0, %v2136
  %v2138 = vpop.f32.mrb[0].mxu0
  %2139 = vmatprep.mubr.bf16.mxu0 0
  %2140 = vmatmul.mubr.bf16.gmra.mrb[0].mxu0 %v2094
  %v2141 = vpop.f32.mrb[0].mxu0
  %v2142 = vadd.f32 0.0, %v2141
  %v2143 = vpop.f32.mrb[0].mxu0
  %v2144 = vpop.f32.mrb[0].mxu0
  %v2145 = vpop.f32.mrb[0].mxu0
  %2146 = vdwg.mxu0
  %2150 = vrot.lane.b32.xlu0 %v2134, 16
  %v2151 = vpop.permute.xlu0 %2150
  %2152 = vrot.lane.b32.xlu0 %v2137, 16
  %v2153 = vpop.permute.xlu0 %2152
  %2154 = vrot.lane.b32.xlu0 %v2142, 16
  %v2155 = vpop.permute.xlu0 %2154
  %v2159 = vsel %vm381, %v1960, %v2151
  %v2160 = vsel %vm381, %v1963, %v2153
  %v2161 = vsel %vm381, %v1968, %v2155
  %v2162 = vpack.c.bf16 %v1793, %v1788
  %v2163 = vpack.c.bf16 %v1796, %v1796
  %2166 = vrot.lane.b32.xlu0 %v2162, 96
  %v2167 = vpop.permute.xlu0 %2166
  %2168 = vrot.lane.b32.xlu0 %v2163, 96
  %v2169 = vpop.permute.xlu0 %2168
  %v2171 = vsel %vm381, %v2162, 0
  %v2174 = vsel %vm381, %v2163, 0
  %v2177 = vsel %vm381, %v2167, 0
  %v2180 = vsel %vm381, %v2169, 0
  %2182 = vmatprep.subr.bf16.mxu0 0
  %2183 = vmatpush1.bf16.xpose.msra.mxu0 %v2177
  %2184 = vmatprep.subr.bf16.mxu0 0
  %2185 = vmatpush1.bf16.xpose.msra.mxu0 %v2180
  %2186 = vmatprep.subr.bf16.mxu0 0
  %2187 = vmatpush1.bf16.xpose.msra.mxu0 0
  %2188 = vmatprep.subr.bf16.mxu0 0
  %2189 = vmatpush1.bf16.xpose.msra.mxu0 0
  %2190 = vmatprep.subr.bf16.mxu0 0
  %2191 = vmatpush1.bf16.xpose.msra.mxu0 0
  %2192 = vmatprep.subr.bf16.mxu0 0
  %2193 = vmatpush1.bf16.xpose.msra.mxu0 0
  %2194 = vmatprep.subr.bf16.mxu0 0
  %2195 = vmatpush1.bf16.xpose.msra.mxu0 0
  %2196 = vmatprep.subr.bf16.mxu0 0
  %2197 = vmatpush1.bf16.xpose.msra.mxu0 0
  %2198 = vmatprep.subr.bf16.mxu0 0
  %2199 = vmatpush1.bf16.xpose.msra.mxu0 0
  %2200 = vmatprep.subr.bf16.mxu0 0
  %2201 = vmatpush1.bf16.xpose.msra.mxu0 0
  %2202 = vmatprep.subr.bf16.mxu0 0
  %2203 = vmatpush1.bf16.xpose.msra.mxu0 0
  %2204 = vmatprep.subr.bf16.mxu0 0
  %2205 = vmatpush1.bf16.xpose.msra.mxu0 0
  %2206 = vmatprep.subr.bf16.mxu0 0
  %2207 = vmatpush1.bf16.xpose.msra.mxu0 0
  %2208 = vmatprep.subr.bf16.mxu0 0
  %2209 = vmatpush1.bf16.xpose.msra.mxu0 0
  %2210 = vmatprep.subr.bf16.mxu0 0
  %2211 = vmatpush1.bf16.xpose.msra.mxu0 0
  %2212 = vmatprep.subr.bf16.mxu0 0
  %2213 = vmatpush1.bf16.xpose.msra.mxu0 0
  %2214 = vmatprep.mubr.bf16.mxu0 0
  %2215 = vmatmul.mubr.bf16.gmra.mrb[0].mxu0 %v2171
  %v2216 = vpop.f32.mrb[0].mxu0
  %v2217 = vadd.f32 0.0, %v2216
  %v2218 = vpop.f32.mrb[0].mxu0
  %v2219 = vpop.f32.mrb[0].mxu0
  %v2220 = vadd.f32 0.0, %v2219
  %v2221 = vpop.f32.mrb[0].mxu0
  %2222 = vmatprep.mubr.bf16.mxu0 0
  %2223 = vmatmul.mubr.bf16.gmra.mrb[0].mxu0 %v2174
  %v2224 = vpop.f32.mrb[0].mxu0
  %v2225 = vadd.f32 0.0, %v2224
  %v2226 = vpop.f32.mrb[0].mxu0
  %v2227 = vpop.f32.mrb[0].mxu0
  %v2228 = vpop.f32.mrb[0].mxu0
  %2229 = vdwg.mxu0
  %v2230 = vmul.f32 %v2217, 0.25
  %v2231 = vmul.f32 %v2220, 0.25
  %v2232 = vmul.f32 %v2225, 0.25
  %v2233 = vsel %vm174, %v2230, -10000.0
  %v2234 = vsel %vm175, %v2231, -10000.0
  %v2235 = vsel %vm176, %v2232, -10000.0
  %v2236 = vadd.f32 %v2233, %v823
  %v2237 = vadd.f32 %v2234, %v823
  %v2238 = vadd.f32 %v2235, %v823
  %v2239 = vsel %vm457, %v2236, -inf
  %2240 = vmax.xlane.f32.xlu0 %v2239
  %v2241 = vpop.xlane.xlu0 %2240
  %v2242 = vsel %vm457, %v2237, -inf
  %2243 = vmax.xlane.f32.xlu0 %v2242
  %v2244 = vpop.xlane.xlu0 %2243
  %v2245 = vsel %vm457, %v2238, -inf
  %2246 = vmax.xlane.f32.xlu0 %v2245
  %v2247 = vpop.xlane.xlu0 %2246
  %v2248 = vsub.f32 %v2236, %v2241
  %v2249 = vsub.f32 %v2237, %v2244
  %v2250 = vsub.f32 %v2238, %v2247
  %v2251 = vmul.f32 %v2248, 1.442695
  %v2252 = vpow.pop %v2251
  %v2253 = vmul.f32 %v2249, 1.442695
  %v2254 = vpow.pop %v2253
  %v2255 = vmul.f32 %v2250, 1.442695
  %v2256 = vpow.pop %v2255
  %v2257 = vsel %vm457, %v2252, 0.0
  %2258 = vadd.xlane.f32.xlu0 %v2257
  %v2259 = vpop.xlane.xlu0 %2258
  %v2260 = vsel %vm457, %v2254, 0.0
  %2261 = vadd.xlane.f32.xlu0 %v2260
  %v2262 = vpop.xlane.xlu0 %2261
  %v2263 = vsel %vm457, %v2256, 0.0
  %2264 = vadd.xlane.f32.xlu0 %v2263
  %v2265 = vpop.xlane.xlu0 %2264
  %v2266 = vrcp.pop %v2259
  %v2267 = vrcp.pop %v2262
  %v2268 = vrcp.pop %v2265
  %v2269 = vmul.f32 %v2252, %v2266
  %v2270 = vmul.f32 %v2254, %v2267
  %v2271 = vmul.f32 %v2256, %v2268
  %v2272 = vpack.c.bf16 %v2270, %v2269
  %v2273 = vpack.c.bf16 %v2271, %v2271
  %2274 = vrot.lane.b32.xlu0 %v2162, 64
  %v2275 = vpop.permute.xlu0 %2274
  %2276 = vrot.lane.b32.xlu0 %v2163, 64
  %v2277 = vpop.permute.xlu0 %2276
  %v2280 = vsel %vm457, %v2272, 0
  %v2283 = vsel %vm457, %v2273, 0
  %v2286 = vsel %vm504, %v2277, 0
  %2288 = vmatprep.subr.bf16.mxu0 0
  %2289 = vmatpush1.bf16.msra.mxu0 %v2275
  %2290 = vmatprep.subr.bf16.mxu0 0
  %2291 = vmatpush1.bf16.msra.mxu0 %v2286
  %2292 = vmatprep.subr.bf16.mxu0 0
  %2293 = vmatpush1.bf16.msra.mxu0 0
  %2294 = vmatprep.subr.bf16.mxu0 0
  %2295 = vmatpush1.bf16.msra.mxu0 0
  %2296 = vmatprep.subr.bf16.mxu0 0
  %2297 = vmatpush1.bf16.msra.mxu0 0
  %2298 = vmatprep.subr.bf16.mxu0 0
  %2299 = vmatpush1.bf16.msra.mxu0 0
  %2300 = vmatprep.subr.bf16.mxu0 0
  %2301 = vmatpush1.bf16.msra.mxu0 0
  %2302 = vmatprep.subr.bf16.mxu0 0
  %2303 = vmatpush1.bf16.msra.mxu0 0
  %2304 = vmatprep.subr.bf16.mxu0 0
  %2305 = vmatpush1.bf16.msra.mxu0 0
  %2306 = vmatprep.subr.bf16.mxu0 0
  %2307 = vmatpush1.bf16.msra.mxu0 0
  %2308 = vmatprep.subr.bf16.mxu0 0
  %2309 = vmatpush1.bf16.msra.mxu0 0
  %2310 = vmatprep.subr.bf16.mxu0 0
  %2311 = vmatpush1.bf16.msra.mxu0 0
  %2312 = vmatprep.subr.bf16.mxu0 0
  %2313 = vmatpush1.bf16.msra.mxu0 0
  %2314 = vmatprep.subr.bf16.mxu0 0
  %2315 = vmatpush1.bf16.msra.mxu0 0
  %2316 = vmatprep.subr.bf16.mxu0 0
  %2317 = vmatpush1.bf16.msra.mxu0 0
  %2318 = vmatprep.subr.bf16.mxu0 0
  %2319 = vmatpush1.bf16.msra.mxu0 0
  %2320 = vmatprep.mubr.bf16.mxu0 0
  %2321 = vmatmul.mubr.bf16.gmra.mrb[0].mxu0 %v2280
  %v2322 = vpop.f32.mrb[0].mxu0
  %v2323 = vadd.f32 0.0, %v2322
  %v2324 = vpop.f32.mrb[0].mxu0
  %v2325 = vpop.f32.mrb[0].mxu0
  %v2326 = vadd.f32 0.0, %v2325
  %v2327 = vpop.f32.mrb[0].mxu0
  %2328 = vmatprep.mubr.bf16.mxu0 0
  %2329 = vmatmul.mubr.bf16.gmra.mrb[0].mxu0 %v2283
  %v2330 = vpop.f32.mrb[0].mxu0
  %v2331 = vadd.f32 0.0, %v2330
  %v2332 = vpop.f32.mrb[0].mxu0
  %v2333 = vpop.f32.mrb[0].mxu0
  %v2334 = vpop.f32.mrb[0].mxu0
  %2335 = vdwg.mxu0
  %2336 = vrot.lane.b32.xlu0 %v2162, 112
  %v2337 = vpop.permute.xlu0 %2336
  %2338 = vrot.lane.b32.xlu0 %v2163, 112
  %v2339 = vpop.permute.xlu0 %2338
  %2340 = vrot.lane.b32.xlu0 %v2162, 80
  %v2341 = vpop.permute.xlu0 %2340
  %2342 = vrot.lane.b32.xlu0 %v2163, 80
  %v2343 = vpop.permute.xlu0 %2342
  %v2345 = vsel %vm381, %v2337, 0
  %v2348 = vsel %vm381, %v2339, 0
  %v2351 = vsel %vm381, %v2341, 0
  %v2354 = vsel %vm381, %v2343, 0
  %2356 = vmatprep.subr.bf16.mxu0 0
  %2357 = vmatpush1.bf16.xpose.msra.mxu0 %v2351
  %2358 = vmatprep.subr.bf16.mxu0 0
  %2359 = vmatpush1.bf16.xpose.msra.mxu0 %v2354
  %2360 = vmatprep.subr.bf16.mxu0 0
  %2361 = vmatpush1.bf16.xpose.msra.mxu0 0
  %2362 = vmatprep.subr.bf16.mxu0 0
  %2363 = vmatpush1.bf16.xpose.msra.mxu0 0
  %2364 = vmatprep.subr.bf16.mxu0 0
  %2365 = vmatpush1.bf16.xpose.msra.mxu0 0
  %2366 = vmatprep.subr.bf16.mxu0 0
  %2367 = vmatpush1.bf16.xpose.msra.mxu0 0
  %2368 = vmatprep.subr.bf16.mxu0 0
  %2369 = vmatpush1.bf16.xpose.msra.mxu0 0
  %2370 = vmatprep.subr.bf16.mxu0 0
  %2371 = vmatpush1.bf16.xpose.msra.mxu0 0
  %2372 = vmatprep.subr.bf16.mxu0 0
  %2373 = vmatpush1.bf16.xpose.msra.mxu0 0
  %2374 = vmatprep.subr.bf16.mxu0 0
  %2375 = vmatpush1.bf16.xpose.msra.mxu0 0
  %2376 = vmatprep.subr.bf16.mxu0 0
  %2377 = vmatpush1.bf16.xpose.msra.mxu0 0
  %2378 = vmatprep.subr.bf16.mxu0 0
  %2379 = vmatpush1.bf16.xpose.msra.mxu0 0
  %2380 = vmatprep.subr.bf16.mxu0 0
  %2381 = vmatpush1.bf16.xpose.msra.mxu0 0
  %2382 = vmatprep.subr.bf16.mxu0 0
  %2383 = vmatpush1.bf16.xpose.msra.mxu0 0
  %2384 = vmatprep.subr.bf16.mxu0 0
  %2385 = vmatpush1.bf16.xpose.msra.mxu0 0
  %2386 = vmatprep.subr.bf16.mxu0 0
  %2387 = vmatpush1.bf16.xpose.msra.mxu0 0
  %2388 = vmatprep.mubr.bf16.mxu0 0
  %2389 = vmatmul.mubr.bf16.gmra.mrb[0].mxu0 %v2345
  %v2390 = vpop.f32.mrb[0].mxu0
  %v2391 = vadd.f32 0.0, %v2390
  %v2392 = vpop.f32.mrb[0].mxu0
  %v2393 = vpop.f32.mrb[0].mxu0
  %v2394 = vadd.f32 0.0, %v2393
  %v2395 = vpop.f32.mrb[0].mxu0
  %2396 = vmatprep.mubr.bf16.mxu0 0
  %2397 = vmatmul.mubr.bf16.gmra.mrb[0].mxu0 %v2348
  %v2398 = vpop.f32.mrb[0].mxu0
  %v2399 = vadd.f32 0.0, %v2398
  %v2400 = vpop.f32.mrb[0].mxu0
  %v2401 = vpop.f32.mrb[0].mxu0
  %v2402 = vpop.f32.mrb[0].mxu0
  %2403 = vdwg.mxu0
  %v2404 = vmul.f32 %v2391, 0.25
  %v2405 = vmul.f32 %v2394, 0.25
  %v2406 = vmul.f32 %v2399, 0.25
  %v2407 = vsel %vm174, %v2404, -10000.0
  %v2408 = vsel %vm175, %v2405, -10000.0
  %v2409 = vsel %vm176, %v2406, -10000.0
  %v2410 = vadd.f32 %v2407, %v823
  %v2411 = vadd.f32 %v2408, %v823
  %v2412 = vadd.f32 %v2409, %v823
  %v2413 = vsel %vm457, %v2410, -inf
  %2414 = vmax.xlane.f32.xlu0 %v2413
  %v2415 = vpop.xlane.xlu0 %2414
  %v2416 = vsel %vm457, %v2411, -inf
  %2417 = vmax.xlane.f32.xlu0 %v2416
  %v2418 = vpop.xlane.xlu0 %2417
  %v2419 = vsel %vm457, %v2412, -inf
  %2420 = vmax.xlane.f32.xlu0 %v2419
  %v2421 = vpop.xlane.xlu0 %2420
  %v2422 = vsub.f32 %v2410, %v2415
  %v2423 = vsub.f32 %v2411, %v2418
  %v2424 = vsub.f32 %v2412, %v2421
  %v2425 = vmul.f32 %v2422, 1.442695
  %v2426 = vpow.pop %v2425
  %v2427 = vmul.f32 %v2423, 1.442695
  %v2428 = vpow.pop %v2427
  %v2429 = vmul.f32 %v2424, 1.442695
  %v2430 = vpow.pop %v2429
  %v2431 = vsel %vm457, %v2426, 0.0
  %2432 = vadd.xlane.f32.xlu0 %v2431
  %v2433 = vpop.xlane.xlu0 %2432
  %v2434 = vsel %vm457, %v2428, 0.0
  %2435 = vadd.xlane.f32.xlu0 %v2434
  %v2436 = vpop.xlane.xlu0 %2435
  %v2437 = vsel %vm457, %v2430, 0.0
  %2438 = vadd.xlane.f32.xlu0 %v2437
  %v2439 = vpop.xlane.xlu0 %2438
  %v2440 = vrcp.pop %v2433
  %v2441 = vrcp.pop %v2436
  %v2442 = vrcp.pop %v2439
  %v2443 = vmul.f32 %v2426, %v2440
  %v2444 = vmul.f32 %v2428, %v2441
  %v2445 = vmul.f32 %v2430, %v2442
  %v2446 = vpack.c.bf16 %v2444, %v2443
  %v2447 = vpack.c.bf16 %v2445, %v2445
  %2448 = vrot.lane.b32.xlu0 %v2162, 48
  %v2449 = vpop.permute.xlu0 %2448
  %2450 = vrot.lane.b32.xlu0 %v2163, 48
  %v2451 = vpop.permute.xlu0 %2450
  %v2454 = vsel %vm457, %v2446, 0
  %v2457 = vsel %vm457, %v2447, 0
  %v2460 = vsel %vm504, %v2451, 0
  %2462 = vmatprep.subr.bf16.mxu0 0
  %2463 = vmatpush1.bf16.msra.mxu0 %v2449
  %2464 = vmatprep.subr.bf16.mxu0 0
  %2465 = vmatpush1.bf16.msra.mxu0 %v2460
  %2466 = vmatprep.subr.bf16.mxu0 0
  %2467 = vmatpush1.bf16.msra.mxu0 0
  %2468 = vmatprep.subr.bf16.mxu0 0
  %2469 = vmatpush1.bf16.msra.mxu0 0
  %2470 = vmatprep.subr.bf16.mxu0 0
  %2471 = vmatpush1.bf16.msra.mxu0 0
  %2472 = vmatprep.subr.bf16.mxu0 0
  %2473 = vmatpush1.bf16.msra.mxu0 0
  %2474 = vmatprep.subr.bf16.mxu0 0
  %2475 = vmatpush1.bf16.msra.mxu0 0
  %2476 = vmatprep.subr.bf16.mxu0 0
  %2477 = vmatpush1.bf16.msra.mxu0 0
  %2478 = vmatprep.subr.bf16.mxu0 0
  %2479 = vmatpush1.bf16.msra.mxu0 0
  %2480 = vmatprep.subr.bf16.mxu0 0
  %2481 = vmatpush1.bf16.msra.mxu0 0
  %2482 = vmatprep.subr.bf16.mxu0 0
  %2483 = vmatpush1.bf16.msra.mxu0 0
  %2484 = vmatprep.subr.bf16.mxu0 0
  %2485 = vmatpush1.bf16.msra.mxu0 0
  %2486 = vmatprep.subr.bf16.mxu0 0
  %2487 = vmatpush1.bf16.msra.mxu0 0
  %2488 = vmatprep.subr.bf16.mxu0 0
  %2489 = vmatpush1.bf16.msra.mxu0 0
  %2490 = vmatprep.subr.bf16.mxu0 0
  %2491 = vmatpush1.bf16.msra.mxu0 0
  %2492 = vmatprep.subr.bf16.mxu0 0
  %2493 = vmatpush1.bf16.msra.mxu0 0
  %2494 = vmatprep.mubr.bf16.mxu0 0
  %2495 = vmatmul.mubr.bf16.gmra.mrb[0].mxu0 %v2454
  %v2496 = vpop.f32.mrb[0].mxu0
  %v2497 = vadd.f32 0.0, %v2496
  %v2498 = vpop.f32.mrb[0].mxu0
  %v2499 = vpop.f32.mrb[0].mxu0
  %v2500 = vadd.f32 0.0, %v2499
  %v2501 = vpop.f32.mrb[0].mxu0
  %2502 = vmatprep.mubr.bf16.mxu0 0
  %2503 = vmatmul.mubr.bf16.gmra.mrb[0].mxu0 %v2457
  %v2504 = vpop.f32.mrb[0].mxu0
  %v2505 = vadd.f32 0.0, %v2504
  %v2506 = vpop.f32.mrb[0].mxu0
  %v2507 = vpop.f32.mrb[0].mxu0
  %v2508 = vpop.f32.mrb[0].mxu0
  %2509 = vdwg.mxu0
  %2513 = vrot.lane.b32.xlu0 %v2497, 16
  %v2514 = vpop.permute.xlu0 %2513
  %2515 = vrot.lane.b32.xlu0 %v2500, 16
  %v2516 = vpop.permute.xlu0 %2515
  %2517 = vrot.lane.b32.xlu0 %v2505, 16
  %v2518 = vpop.permute.xlu0 %2517
  %v2522 = vsel %vm381, %v2323, %v2514
  %v2523 = vsel %vm381, %v2326, %v2516
  %v2524 = vsel %vm381, %v2331, %v2518
  %v2525 = vpack.c.bf16 %v2160, %v2159
  %v2526 = vpack.c.bf16 %v2522, %v2161
  %v2527 = vpack.c.bf16 %v2524, %v2523
  %s2528 = scalar_lea.vmem %s8, 16
  %v2529 = vld [vmem:[%s2528] sm:$0xf]
  %v2530 = vld [vmem:[%s2528 + $0x4] sm:$0xf]
  %v2531 = vld [vmem:[%s2528 + $0x8] sm:$0xf]
  %v2532 = vld [vmem:[%s2528 + $0xc] sm:$0xf]
  %s2533 = scalar_lea.vmem %s9, 1
  %v2534 = vld [vmem:[%s2533] sm:$0x1]
  %v2536 = vlaneseq
  %v2537 = vshrl.u32 %v2536, 7
  %v2538 = vsub.s32 0, %v2537
  %v2539 = vrot.slane %v2534, %v2538
  %v2545 = vunpack.c.l.b16 %v2529
  %v2546 = vunpack.c.l.b16 %v2530
  %v2547 = vunpack.c.l.b16 %v2531
  %v2548 = vunpack.c.l.b16 %v2532
  %v2549 = vpack.c.b16 %v2546, %v2545
  %v2550 = vpack.c.b16 %v2548, %v2547
  %v2554 = vsel %vm62, %v2525, 0
  %v2557 = vsel %vm62, %v2526, 0
  %v2560 = vsel %vm62, %v2527, 0
  %2562 = vmatprep.subr.bf16.mxu0 0
  %2563 = vmatpush1.bf16.msra.mxu0 %v2549
  %2564 = vmatprep.subr.bf16.mxu0 0
  %2565 = vmatpush1.bf16.msra.mxu0 %v2550
  %2566 = vmatprep.subr.bf16.mxu0 0
  %2567 = vmatpush1.bf16.msra.mxu0 0
  %2568 = vmatprep.subr.bf16.mxu0 0
  %2569 = vmatpush1.bf16.msra.mxu0 0
  %2570 = vmatprep.subr.bf16.mxu0 0
  %2571 = vmatpush1.bf16.msra.mxu0 0
  %2572 = vmatprep.subr.bf16.mxu0 0
  %2573 = vmatpush1.bf16.msra.mxu0 0
  %2574 = vmatprep.subr.bf16.mxu0 0
  %2575 = vmatpush1.bf16.msra.mxu0 0
  %2576 = vmatprep.subr.bf16.mxu0 0
  %2577 = vmatpush1.bf16.msra.mxu0 0
  %2578 = vmatprep.subr.bf16.mxu0 0
  %2579 = vmatpush1.bf16.msra.mxu0 0
  %2580 = vmatprep.subr.bf16.mxu0 0
  %2581 = vmatpush1.bf16.msra.mxu0 0
  %2582 = vmatprep.subr.bf16.mxu0 0
  %2583 = vmatpush1.bf16.msra.mxu0 0
  %2584 = vmatprep.subr.bf16.mxu0 0
  %2585 = vmatpush1.bf16.msra.mxu0 0
  %2586 = vmatprep.subr.bf16.mxu0 0
  %2587 = vmatpush1.bf16.msra.mxu0 0
  %2588 = vmatprep.subr.bf16.mxu0 0
  %2589 = vmatpush1.bf16.msra.mxu0 0
  %2590 = vmatprep.subr.bf16.mxu0 0
  %2591 = vmatpush1.bf16.msra.mxu0 0
  %2592 = vmatprep.subr.bf16.mxu0 0
  %2593 = vmatpush1.bf16.msra.mxu0 0
  %2594 = vmatprep.mubr.bf16.mxu0 0
  %2595 = vmatmul.mubr.bf16.gmra.mrb[0].mxu0 %v2554
  %v2596 = vpop.f32.mrb[0].mxu0
  %v2597 = vadd.f32 %v2539, %v2596
  %v2598 = vpop.f32.mrb[0].mxu0
  %v2599 = vpop.f32.mrb[0].mxu0
  %v2600 = vadd.f32 %v2539, %v2599
  %v2601 = vpop.f32.mrb[0].mxu0
  %2602 = vmatprep.mubr.bf16.mxu0 0
  %2603 = vmatmul.mubr.bf16.gmra.mrb[0].mxu0 %v2557
  %v2604 = vpop.f32.mrb[0].mxu0
  %v2605 = vadd.f32 %v2539, %v2604
  %v2606 = vpop.f32.mrb[0].mxu0
  %v2607 = vpop.f32.mrb[0].mxu0
  %v2608 = vadd.f32 %v2539, %v2607
  %v2609 = vpop.f32.mrb[0].mxu0
  %2610 = vmatprep.mubr.bf16.mxu0 0
  %2611 = vmatmul.mubr.bf16.gmra.mrb[0].mxu0 %v2560
  %v2612 = vpop.f32.mrb[0].mxu0
  %v2613 = vadd.f32 %v2539, %v2612
  %v2614 = vpop.f32.mrb[0].mxu0
  %v2615 = vpop.f32.mrb[0].mxu0
  %v2616 = vadd.f32 %v2539, %v2615
  %v2617 = vpop.f32.mrb[0].mxu0
  %2618 = vdwg.mxu0
  %v2619 = vadd.f32 %v1593, %v2597
  %v2620 = vadd.f32 %v1594, %v2600
  %v2621 = vadd.f32 %v1595, %v2605
  %v2622 = vadd.f32 %v1596, %v2608
  %v2623 = vadd.f32 %v1597, %v2613
  %v2624 = vadd.f32 %v1598, %v2616
  %s2625 = scalar_lea.vmem %s10, 1
  %v2626 = vld [vmem:[%s2625] sm:$0x1]
  %s2627 = scalar_lea.vmem %s11, 1
  %v2628 = vld [vmem:[%s2627] sm:$0x1]
  %v2629 = vsel %vm62, %v2619, 0.0
  %2630 = vadd.xlane.f32.xlu0 %v2629
  %v2631 = vpop.xlane.xlu0 %2630
  %v2632 = vsel %vm62, %v2620, 0.0
  %2633 = vadd.xlane.f32.xlu0 %v2632
  %v2634 = vpop.xlane.xlu0 %2633
  %v2635 = vsel %vm62, %v2621, 0.0
  %2636 = vadd.xlane.f32.xlu0 %v2635
  %v2637 = vpop.xlane.xlu0 %2636
  %v2638 = vsel %vm62, %v2622, 0.0
  %2639 = vadd.xlane.f32.xlu0 %v2638
  %v2640 = vpop.xlane.xlu0 %2639
  %v2641 = vsel %vm62, %v2623, 0.0
  %2642 = vadd.xlane.f32.xlu0 %v2641
  %v2643 = vpop.xlane.xlu0 %2642
  %v2644 = vsel %vm62, %v2624, 0.0
  %2645 = vadd.xlane.f32.xlu0 %v2644
  %v2646 = vpop.xlane.xlu0 %2645
  %v2647 = vmul.f32 %v2631, %v81
  %v2648 = vmul.f32 %v2634, %v81
  %v2649 = vmul.f32 %v2637, %v81
  %v2650 = vmul.f32 %v2640, %v81
  %v2651 = vmul.f32 %v2643, %v81
  %v2652 = vmul.f32 %v2646, %v81
  %v2653 = vsub.f32 %v2619, %v2647
  %v2654 = vsub.f32 %v2620, %v2648
  %v2655 = vsub.f32 %v2621, %v2649
  %v2656 = vsub.f32 %v2622, %v2650
  %v2657 = vsub.f32 %v2623, %v2651
  %v2658 = vsub.f32 %v2624, %v2652
  %v2659 = vmul.f32 %v2653, %v2653
  %v2660 = vmul.f32 %v2654, %v2654
  %v2661 = vmul.f32 %v2655, %v2655
  %v2662 = vmul.f32 %v2656, %v2656
  %v2663 = vmul.f32 %v2657, %v2657
  %v2664 = vmul.f32 %v2658, %v2658
  %v2665 = vsel %vm62, %v2659, 0.0
  %2666 = vadd.xlane.f32.xlu0 %v2665
  %v2667 = vpop.xlane.xlu0 %2666
  %v2668 = vsel %vm62, %v2660, 0.0
  %2669 = vadd.xlane.f32.xlu0 %v2668
  %v2670 = vpop.xlane.xlu0 %2669
  %v2671 = vsel %vm62, %v2661, 0.0
  %2672 = vadd.xlane.f32.xlu0 %v2671
  %v2673 = vpop.xlane.xlu0 %2672
  %v2674 = vsel %vm62, %v2662, 0.0
  %2675 = vadd.xlane.f32.xlu0 %v2674
  %v2676 = vpop.xlane.xlu0 %2675
  %v2677 = vsel %vm62, %v2663, 0.0
  %2678 = vadd.xlane.f32.xlu0 %v2677
  %v2679 = vpop.xlane.xlu0 %2678
  %v2680 = vsel %vm62, %v2664, 0.0
  %2681 = vadd.xlane.f32.xlu0 %v2680
  %v2682 = vpop.xlane.xlu0 %2681
  %v2683 = vmul.f32 %v2667, %v81
  %v2684 = vmul.f32 %v2670, %v81
  %v2685 = vmul.f32 %v2673, %v81
  %v2686 = vmul.f32 %v2676, %v81
  %v2687 = vmul.f32 %v2679, %v81
  %v2688 = vmul.f32 %v2682, %v81
  %v2689 = vadd.f32 %v2683, 1e-05
  %v2690 = vadd.f32 %v2684, 1e-05
  %v2691 = vadd.f32 %v2685, 1e-05
  %v2692 = vadd.f32 %v2686, 1e-05
  %v2693 = vadd.f32 %v2687, 1e-05
  %v2694 = vadd.f32 %v2688, 1e-05
  %v2695 = vrsqrt.pop %v2689
  %v2696 = vrsqrt.pop %v2690
  %v2697 = vrsqrt.pop %v2691
  %v2698 = vrsqrt.pop %v2692
  %v2699 = vrsqrt.pop %v2693
  %v2700 = vrsqrt.pop %v2694
  %v2701 = vmul.f32 %v2653, %v2695
  %v2702 = vmul.f32 %v2654, %v2696
  %v2703 = vmul.f32 %v2655, %v2697
  %v2704 = vmul.f32 %v2656, %v2698
  %v2705 = vmul.f32 %v2657, %v2699
  %v2706 = vmul.f32 %v2658, %v2700
  %v2708 = vlaneseq
  %v2709 = vshrl.u32 %v2708, 7
  %v2710 = vsub.s32 0, %v2709
  %v2711 = vrot.slane %v2626, %v2710
  %v2713 = vmul.f32 %v2701, %v2711
  %v2714 = vmul.f32 %v2702, %v2711
  %v2715 = vmul.f32 %v2703, %v2711
  %v2716 = vmul.f32 %v2704, %v2711
  %v2717 = vmul.f32 %v2705, %v2711
  %v2718 = vmul.f32 %v2706, %v2711
  %v2720 = vlaneseq
  %v2721 = vshrl.u32 %v2720, 7
  %v2722 = vsub.s32 0, %v2721
  %v2723 = vrot.slane %v2628, %v2722
  %v2725 = vadd.f32 %v2713, %v2723
  %v2726 = vadd.f32 %v2714, %v2723
  %v2727 = vadd.f32 %v2715, %v2723
  %v2728 = vadd.f32 %v2716, %v2723
  %v2729 = vadd.f32 %v2717, %v2723
  %v2730 = vadd.f32 %v2718, %v2723
  %v2731 = vpack.c.bf16 %v2726, %v2725
  %v2732 = vpack.c.bf16 %v2728, %v2727
  %v2733 = vpack.c.bf16 %v2730, %v2729
  %s2734 = scalar_lea.vmem %s12, 16
  %v2735 = vld [vmem:[%s2734] sm:$0xf]
  %v2736 = vld [vmem:[%s2734 + $0x4] sm:$0xf]
  %v2737 = vld [vmem:[%s2734 + $0x8] sm:$0xf]
  %v2738 = vld [vmem:[%s2734 + $0xc] sm:$0xf]
  %s2739 = scalar_lea.vmem %s13, 1
  %v2740 = vld [vmem:[%s2739] sm:$0x1]
  %v2742 = vlaneseq
  %v2743 = vshrl.u32 %v2742, 7
  %v2744 = vsub.s32 0, %v2743
  %v2745 = vrot.slane %v2740, %v2744
  %v2751 = vunpack.c.l.b16 %v2735
  %v2752 = vunpack.c.l.b16 %v2736
  %v2753 = vunpack.c.l.b16 %v2737
  %v2754 = vunpack.c.l.b16 %v2738
  %v2755 = vpack.c.b16 %v2752, %v2751
  %v2756 = vpack.c.b16 %v2754, %v2753
  %v2760 = vsel %vm62, %v2731, 0
  %v2763 = vsel %vm62, %v2732, 0
  %v2766 = vsel %vm62, %v2733, 0
  %2768 = vmatprep.subr.bf16.mxu0 0
  %2769 = vmatpush1.bf16.msra.mxu0 %v2755
  %2770 = vmatprep.subr.bf16.mxu0 0
  %2771 = vmatpush1.bf16.msra.mxu0 %v2756
  %2772 = vmatprep.subr.bf16.mxu0 0
  %2773 = vmatpush1.bf16.msra.mxu0 0
  %2774 = vmatprep.subr.bf16.mxu0 0
  %2775 = vmatpush1.bf16.msra.mxu0 0
  %2776 = vmatprep.subr.bf16.mxu0 0
  %2777 = vmatpush1.bf16.msra.mxu0 0
  %2778 = vmatprep.subr.bf16.mxu0 0
  %2779 = vmatpush1.bf16.msra.mxu0 0
  %2780 = vmatprep.subr.bf16.mxu0 0
  %2781 = vmatpush1.bf16.msra.mxu0 0
  %2782 = vmatprep.subr.bf16.mxu0 0
  %2783 = vmatpush1.bf16.msra.mxu0 0
  %2784 = vmatprep.subr.bf16.mxu0 0
  %2785 = vmatpush1.bf16.msra.mxu0 0
  %2786 = vmatprep.subr.bf16.mxu0 0
  %2787 = vmatpush1.bf16.msra.mxu0 0
  %2788 = vmatprep.subr.bf16.mxu0 0
  %2789 = vmatpush1.bf16.msra.mxu0 0
  %2790 = vmatprep.subr.bf16.mxu0 0
  %2791 = vmatpush1.bf16.msra.mxu0 0
  %2792 = vmatprep.subr.bf16.mxu0 0
  %2793 = vmatpush1.bf16.msra.mxu0 0
  %2794 = vmatprep.subr.bf16.mxu0 0
  %2795 = vmatpush1.bf16.msra.mxu0 0
  %2796 = vmatprep.subr.bf16.mxu0 0
  %2797 = vmatpush1.bf16.msra.mxu0 0
  %2798 = vmatprep.subr.bf16.mxu0 0
  %2799 = vmatpush1.bf16.msra.mxu0 0
  %2800 = vmatprep.mubr.bf16.mxu0 0
  %2801 = vmatmul.mubr.bf16.gmra.mrb[0].mxu0 %v2760
  %v2802 = vpop.f32.mrb[0].mxu0
  %v2803 = vadd.f32 %v2745, %v2802
  %v2804 = vpop.f32.mrb[0].mxu0
  %v2805 = vpop.f32.mrb[0].mxu0
  %v2806 = vadd.f32 %v2745, %v2805
  %v2807 = vpop.f32.mrb[0].mxu0
  %2808 = vmatprep.mubr.bf16.mxu0 0
  %2809 = vmatmul.mubr.bf16.gmra.mrb[0].mxu0 %v2763
  %v2810 = vpop.f32.mrb[0].mxu0
  %v2811 = vadd.f32 %v2745, %v2810
  %v2812 = vpop.f32.mrb[0].mxu0
  %v2813 = vpop.f32.mrb[0].mxu0
  %v2814 = vadd.f32 %v2745, %v2813
  %v2815 = vpop.f32.mrb[0].mxu0
  %2816 = vmatprep.mubr.bf16.mxu0 0
  %2817 = vmatmul.mubr.bf16.gmra.mrb[0].mxu0 %v2766
  %v2818 = vpop.f32.mrb[0].mxu0
  %v2819 = vadd.f32 %v2745, %v2818
  %v2820 = vpop.f32.mrb[0].mxu0
  %v2821 = vpop.f32.mrb[0].mxu0
  %v2822 = vadd.f32 %v2745, %v2821
  %v2823 = vpop.f32.mrb[0].mxu0
  %2824 = vdwg.mxu0
  %v2825 = vmul.f32 %v2803, %v2803
  %v2826 = vmul.f32 %v2806, %v2806
  %v2827 = vmul.f32 %v2811, %v2811
  %v2828 = vmul.f32 %v2814, %v2814
  %v2829 = vmul.f32 %v2819, %v2819
  %v2830 = vmul.f32 %v2822, %v2822
  %v2831 = vmul.f32 %v2803, %v2825
  %v2832 = vmul.f32 %v2806, %v2826
  %v2833 = vmul.f32 %v2811, %v2827
  %v2834 = vmul.f32 %v2814, %v2828
  %v2835 = vmul.f32 %v2819, %v2829
  %v2836 = vmul.f32 %v2822, %v2830
  %v2837 = vmul.f32 %v2831, 0.044715
  %v2838 = vmul.f32 %v2832, 0.044715
  %v2839 = vmul.f32 %v2833, 0.044715
  %v2840 = vmul.f32 %v2834, 0.044715
  %v2841 = vmul.f32 %v2835, 0.044715
  %v2842 = vmul.f32 %v2836, 0.044715
  %v2843 = vadd.f32 %v2803, %v2837
  %v2844 = vadd.f32 %v2806, %v2838
  %v2845 = vadd.f32 %v2811, %v2839
  %v2846 = vadd.f32 %v2814, %v2840
  %v2847 = vadd.f32 %v2819, %v2841
  %v2848 = vadd.f32 %v2822, %v2842
  %v2849 = vmul.f32 %v2843, 0.7978846
  %v2850 = vmul.f32 %v2844, 0.7978846
  %v2851 = vmul.f32 %v2845, 0.7978846
  %v2852 = vmul.f32 %v2846, 0.7978846
  %v2853 = vmul.f32 %v2847, 0.7978846
  %v2854 = vmul.f32 %v2848, 0.7978846
  %v2855 = vtanh.pop %v2849
  %v2856 = vtanh.pop %v2850
  %v2857 = vtanh.pop %v2851
  %v2858 = vtanh.pop %v2852
  %v2859 = vtanh.pop %v2853
  %v2860 = vtanh.pop %v2854
  %v2861 = vadd.f32 %v2855, 1.0
  %v2862 = vadd.f32 %v2856, 1.0
  %v2863 = vadd.f32 %v2857, 1.0
  %v2864 = vadd.f32 %v2858, 1.0
  %v2865 = vadd.f32 %v2859, 1.0
  %v2866 = vadd.f32 %v2860, 1.0
  %v2867 = vmul.f32 %v2861, 0.5
  %v2868 = vmul.f32 %v2862, 0.5
  %v2869 = vmul.f32 %v2863, 0.5
  %v2870 = vmul.f32 %v2864, 0.5
  %v2871 = vmul.f32 %v2865, 0.5
  %v2872 = vmul.f32 %v2866, 0.5
  %v2873 = vmul.f32 %v2803, %v2867
  %v2874 = vmul.f32 %v2806, %v2868
  %v2875 = vmul.f32 %v2811, %v2869
  %v2876 = vmul.f32 %v2814, %v2870
  %v2877 = vmul.f32 %v2819, %v2871
  %v2878 = vmul.f32 %v2822, %v2872
  %v2879 = vpack.c.bf16 %v2874, %v2873
  %v2880 = vpack.c.bf16 %v2876, %v2875
  %v2881 = vpack.c.bf16 %v2878, %v2877
  %s2882 = scalar_lea.vmem %s14, 64
  %v2883 = vld [vmem:[%s2882] sm:$0xf]
  %v2884 = vld [vmem:[%s2882 + $0x4] sm:$0xf]
  %v2885 = vld [vmem:[%s2882 + $0x8] sm:$0xf]
  %v2886 = vld [vmem:[%s2882 + $0xc] sm:$0xf]
  %v2887 = vld [vmem:[%s2882 + $0x10] sm:$0xf]
  %v2888 = vld [vmem:[%s2882 + $0x14] sm:$0xf]
  %v2889 = vld [vmem:[%s2882 + $0x18] sm:$0xf]
  %v2890 = vld [vmem:[%s2882 + $0x1c] sm:$0xf]
  %v2891 = vld [vmem:[%s2882 + $0x20] sm:$0xf]
  %v2892 = vld [vmem:[%s2882 + $0x24] sm:$0xf]
  %v2893 = vld [vmem:[%s2882 + $0x28] sm:$0xf]
  %v2894 = vld [vmem:[%s2882 + $0x2c] sm:$0xf]
  %v2895 = vld [vmem:[%s2882 + $0x30] sm:$0xf]
  %v2896 = vld [vmem:[%s2882 + $0x34] sm:$0xf]
  %v2897 = vld [vmem:[%s2882 + $0x38] sm:$0xf]
  %v2898 = vld [vmem:[%s2882 + $0x3c] sm:$0xf]
  %s2899 = scalar_lea.vmem %s15, 1
  %v2900 = vld [vmem:[%s2899] sm:$0x1]
  %v2902 = vlaneseq
  %v2903 = vshrl.u32 %v2902, 7
  %v2904 = vsub.s32 0, %v2903
  %v2905 = vrot.slane %v2900, %v2904
  %v2923 = vunpack.c.l.b16 %v2883
  %v2924 = vunpack.c.l.b16 %v2884
  %v2925 = vunpack.c.l.b16 %v2885
  %v2926 = vunpack.c.l.b16 %v2886
  %v2927 = vunpack.c.l.b16 %v2887
  %v2928 = vunpack.c.l.b16 %v2888
  %v2929 = vunpack.c.l.b16 %v2889
  %v2930 = vunpack.c.l.b16 %v2890
  %v2931 = vunpack.c.l.b16 %v2891
  %v2932 = vunpack.c.l.b16 %v2892
  %v2933 = vunpack.c.l.b16 %v2893
  %v2934 = vunpack.c.l.b16 %v2894
  %v2935 = vunpack.c.l.b16 %v2895
  %v2936 = vunpack.c.l.b16 %v2896
  %v2937 = vunpack.c.l.b16 %v2897
  %v2938 = vunpack.c.l.b16 %v2898
  %v2939 = vpack.c.b16 %v2924, %v2923
  %v2940 = vpack.c.b16 %v2926, %v2925
  %v2941 = vpack.c.b16 %v2928, %v2927
  %v2942 = vpack.c.b16 %v2930, %v2929
  %v2943 = vpack.c.b16 %v2932, %v2931
  %v2944 = vpack.c.b16 %v2934, %v2933
  %v2945 = vpack.c.b16 %v2936, %v2935
  %v2946 = vpack.c.b16 %v2938, %v2937
  %2955 = vmatprep.subr.bf16.mxu0 0
  %2956 = vmatpush1.bf16.msra.mxu0 %v2939
  %2957 = vmatprep.subr.bf16.mxu0 0
  %2958 = vmatpush1.bf16.msra.mxu0 %v2940
  %2959 = vmatprep.subr.bf16.mxu0 0
  %2960 = vmatpush1.bf16.msra.mxu0 %v2941
  %2961 = vmatprep.subr.bf16.mxu0 0
  %2962 = vmatpush1.bf16.msra.mxu0 %v2942
  %2963 = vmatprep.subr.bf16.mxu0 0
  %2964 = vmatpush1.bf16.msra.mxu0 %v2943
  %2965 = vmatprep.subr.bf16.mxu0 0
  %2966 = vmatpush1.bf16.msra.mxu0 %v2944
  %2967 = vmatprep.subr.bf16.mxu0 0
  %2968 = vmatpush1.bf16.msra.mxu0 %v2945
  %2969 = vmatprep.subr.bf16.mxu0 0
  %2970 = vmatpush1.bf16.msra.mxu0 %v2946
  %2971 = vmatprep.subr.bf16.mxu0 0
  %2972 = vmatpush1.bf16.msra.mxu0 0
  %2973 = vmatprep.subr.bf16.mxu0 0
  %2974 = vmatpush1.bf16.msra.mxu0 0
  %2975 = vmatprep.subr.bf16.mxu0 0
  %2976 = vmatpush1.bf16.msra.mxu0 0
  %2977 = vmatprep.subr.bf16.mxu0 0
  %2978 = vmatpush1.bf16.msra.mxu0 0
  %2979 = vmatprep.subr.bf16.mxu0 0
  %2980 = vmatpush1.bf16.msra.mxu0 0
  %2981 = vmatprep.subr.bf16.mxu0 0
  %2982 = vmatpush1.bf16.msra.mxu0 0
  %2983 = vmatprep.subr.bf16.mxu0 0
  %2984 = vmatpush1.bf16.msra.mxu0 0
  %2985 = vmatprep.subr.bf16.mxu0 0
  %2986 = vmatpush1.bf16.msra.mxu0 0
  %2987 = vmatprep.mubr.bf16.mxu0 0
  %2988 = vmatmul.mubr.bf16.gmra.mrb[0].mxu0 %v2879
  %v2989 = vpop.f32.mrb[0].mxu0
  %v2990 = vadd.f32 %v2905, %v2989
  %v2991 = vpop.f32.mrb[0].mxu0
  %v2992 = vpop.f32.mrb[0].mxu0
  %v2993 = vadd.f32 %v2905, %v2992
  %v2994 = vpop.f32.mrb[0].mxu0
  %2995 = vmatprep.mubr.bf16.mxu0 0
  %2996 = vmatmul.mubr.bf16.gmra.mrb[0].mxu0 %v2880
  %v2997 = vpop.f32.mrb[0].mxu0
  %v2998 = vadd.f32 %v2905, %v2997
  %v2999 = vpop.f32.mrb[0].mxu0
  %v3000 = vpop.f32.mrb[0].mxu0
  %v3001 = vadd.f32 %v2905, %v3000
  %v3002 = vpop.f32.mrb[0].mxu0
  %3003 = vmatprep.mubr.bf16.mxu0 0
  %3004 = vmatmul.mubr.bf16.gmra.mrb[0].mxu0 %v2881
  %v3005 = vpop.f32.mrb[0].mxu0
  %v3006 = vadd.f32 %v2905, %v3005
  %v3007 = vpop.f32.mrb[0].mxu0
  %v3008 = vpop.f32.mrb[0].mxu0
  %v3009 = vadd.f32 %v2905, %v3008
  %v3010 = vpop.f32.mrb[0].mxu0
  %3011 = vdwg.mxu0
  %v3012 = vadd.f32 %v2619, %v2990
  %v3013 = vadd.f32 %v2620, %v2993
  %v3014 = vadd.f32 %v2621, %v2998
  %v3015 = vadd.f32 %v2622, %v3001
  %v3016 = vadd.f32 %v2623, %v3006
  %v3017 = vadd.f32 %v2624, %v3009
  %3018 = vst.msk [vmem:[%s16] sm:$0xff] %vm62, %v3012
  %3019 = vst.msk [vmem:[%s16 + $0x8] sm:$0xff] %vm62, %v3013
  %3020 = vst.msk [vmem:[%s16 + $0x10] sm:$0xff] %vm62, %v3014
  %3021 = vst.msk [vmem:[%s16 + $0x18] sm:$0xff] %vm62, %v3015
  %3022 = vst.msk [vmem:[%s16 + $0x20] sm:$0xff] %vm62, %v3016
  %3023 = vst.msk [vmem:[%s16 + $0x28] sm:$0xff] %vm62, %v3017
  // Predicated region
  $region66: #{_lambda_.1} parent=0 // pred_check
    _
  $region67: #{_lambda_.1} parent=0 // pred_check_branch
    %3025 = sbr.rel (0) target = $region69
  $region68: #{_lambda_.1} parent=0 // pred_region
    _
  $region69: #{_lambda_.1} parent=0 // pred_fallthru
    _
  // Predicated region
  $region70: #{_lambda_.1} parent=0 // pred_check
    _
  $region71: #{_lambda_.1} parent=0 // pred_check_branch
    %3027 = sbr.rel (0) target = $region73
  $region72: #{_lambda_.1} parent=0 // pred_region
    _
  $region73: #{_lambda_.1} parent=0 // pred_fallthru
    _

</llo_original>
